<compile_context>
chip_gen: v5e
topology: v5e:2x2
jax: 0.10.0
libtpu: 0.0.40
codegen_flags: <defaults>
</compile_context>

<pallas_src>
import jax
import jax.numpy as jnp
from jax import lax
from jax.experimental import pallas as pl
from jax.experimental.pallas import tpu as pltpu


# =============================================================================
# Kernel 1: fused bottleneck_IR_SE block, Bblk images per grid step.
#
# Inputs arrive pre-im2col'd (conv1) / pre-strided (shortcut) from the wrapper so the
# kernel body is pure MXU matmuls + cheap VPU/EUP epilogue -- no patch assembly.
# Row ordering of the conv1 patch / conv1 output: [output-pixel parity p=2*ry+rx]
# [image j][m][n] so every conv2 tap reads a contiguous, aligned (BH, D) slab.
# =============================================================================
def _make_bottleneck_kernel(Bblk, HW, D):
    BH = Bblk * HW
    f32 = jnp.float32

    def kernel(p1_ref, xs_ref, smat_ref, w1_ref, alpha_ref, w2_ref, bn2b_ref,
               wsc_ref, bnscb_ref, wfc1_ref, wfc2_ref, o_ref):
        def dot(a, b):
            return jnp.dot(a, b, preferred_element_type=f32)

        # conv1 (3x3, stride 1, pad 1): ONE MXU matmul, M = 4*BH, K = 128 (padded).
        y1 = dot(p1_ref[...], w1_ref[...])                        # (4*BH, D)
        y1 = jnp.where(y1 >= 0.0, y1, y1 * alpha_ref[...])        # PReLU (per-channel)

        # conv2 (3x3, stride 2, pad 1) via output-parity phases of y1.
        # Phase p=2*pr+pc holds conv1 output pixels (2m+pr, 2n+pc).
        ph0 = y1[0 * BH:1 * BH, :]          # (0,0)
        ph1 = y1[1 * BH:2 * BH, :]          # (0,1)
        ph2 = y1[2 * BH:3 * BH, :]          # (1,0)
        ph3 = y1[3 * BH:4 * BH, :]          # (1,1)

        # Taps grouped by required halo shift of the source phase:
        #   no shift          : (dy,dx) in {(1,1),(1,2),(2,1),(2,2)}
        #   col shift (n-1)   : (1,0),(2,0)
        #   row shift (m-1)   : (0,1),(0,2)
        #   both              : (0,0)
        d00 = (dot(ph0, w2_ref[4]) + dot(ph1, w2_ref[5])
               + dot(ph2, w2_ref[7]) + dot(ph3, w2_ref[8]))
        d01 = dot(ph1, w2_ref[3]) + dot(ph3, w2_ref[6])
        d10 = dot(ph2, w2_ref[1]) + dot(ph3, w2_ref[2])
        d11 = dot(ph3, w2_ref[0])

        # Exact 0/1 shift matrices (per-image boundary + zero halo baked in).
        y2 = (d00 + dot(smat_ref[0], d01) + dot(smat_ref[1], d10)
              + dot(smat_ref[2], d11) + bn2b_ref[...])            # (BH, D)

        # Shortcut: 1x1 conv at stride 2 on the raw input (BN_sc scale folded on host).
        short = dot(xs_ref[...], wsc_ref[...]) + bnscb_ref[...]   # (BH, D)

        # SE module (global-avg-pool -> fc -> relu -> fc -> sigmoid -> scale) + residual.
        y2b = y2.reshape(Bblk, HW, D)
        pooled = jnp.mean(y2b, axis=1)                            # (Bblk, D)
        h = jnp.maximum(dot(pooled, wfc1_ref[...]), 0.0)
        s = jax.nn.sigmoid(dot(h, wfc2_ref[...]))                 # (Bblk, D)

        out = y2b * s[:, None, :] + short.reshape(Bblk, HW, D)
        o_ref[...] = out.reshape(BH, D)                           # lane-dense (BH, 128)

    return kernel


def bottleneck_ir_se(patch1, xs, smats, w1, alpha, w2, bn2b, wsc, bnscb,
                     wfc1, wfc2, *, Bblk, HW):
    """patch1: (G, 4*Bblk*HW, 128) conv1 im2col; xs: (G, Bblk*HW, 8) raw stride-2 input.
    Returns (G, Bblk*HW, D) with rows ordered [image][pixel]."""
    G = patch1.shape[0]
    Kp = patch1.shape[-1]
    Csp = xs.shape[-1]
    D = w2.shape[-1]
    Dmid = wfc1.shape[-1]
    BH = Bblk * HW
    kernel = _make_bottleneck_kernel(Bblk, HW, D)

    def const(shape):
        return pl.BlockSpec(shape, lambda g: (0,) * len(shape))

    return pl.pallas_call(
        kernel,
        out_shape=jax.ShapeDtypeStruct((G, BH, D), jnp.float32),
        grid=(G,),
        in_specs=[
            pl.BlockSpec((None, 4 * BH, Kp), lambda g: (g, 0, 0)),  # conv1 patches
            pl.BlockSpec((None, BH, Csp), lambda g: (g, 0, 0)),     # shortcut input
            const((3, BH, BH)),      # halo shift matrices (grid-invariant, resident)
            const((Kp, D)),          # conv1 weights (im2col, K padded to 128)
            const((1, D)),           # PReLU alpha
            const((9, D, D)),        # conv2 weights per tap (BN2 scale folded)
            const((1, D)),           # BN2 shift
            const((Csp, D)),         # shortcut 1x1 conv (BN scale folded)
            const((1, D)),           # shortcut BN shift
            const((D, Dmid)),        # SE fc1
            const((Dmid, D)),        # SE fc2
        ],
        out_specs=pl.BlockSpec((None, BH, D), lambda g: (g, 0, 0)),
        compiler_params=pltpu.CompilerParams(dimension_semantics=("parallel",)),
    )(patch1, xs, smats, w1, alpha, w2, bn2b, wsc, bnscb, wfc1, wfc2)


# =============================================================================
# Kernel 2: fused head — resnet output layer (Flatten+Linear, K-tiled with an f32
# accumulator), DRL MLP, Teacher-mode half-sum (applied BEFORE the last matmul,
# which commutes since the stand-in DRL has no bias) and rsqrt L2-normalize.
# Grid: ("parallel" over output rows) x ("arbitrary" over K tiles of w_out).
# =============================================================================
def _make_head_kernel(P, E):
    f32 = jnp.float32

    def kernel(fp_ref, wo_ref, wa_ref, wb_ref, o_ref, acc_ref):
        k = pl.program_id(1)

        @pl.when(k == 0)
        def _():
            acc_ref[...] = jnp.zeros_like(acc_ref)

        acc_ref[...] += jnp.dot(fp_ref[...], wo_ref[...], preferred_element_type=f32)

        @pl.when(k == pl.num_programs(1) - 1)
        def _():
            h = jnp.maximum(
                jnp.dot(acc_ref[...], wa_ref[...], preferred_element_type=f32), 0.0)
            s = jnp.sum(h, axis=0, keepdims=True)        # Teacher half-sum (P=1: no-op)
            z = jnp.dot(s, wb_ref[...], preferred_element_type=f32)
            nrm2 = jnp.sum(z * z, axis=1, keepdims=True)
            # F.normalize(p=2, eps=1e-12): z / max(||z||, 1e-12), via EUP rsqrt.
            o_ref[...] = z * lax.rsqrt(jnp.maximum(nrm2, 1e-24))

    return kernel


def head_forward(fp, w_out, w_a, w_b, *, tk=2048):
    """fp: (Bout, P, F) with P=2 (teacher pairs) or P=1.  Returns (Bout, E)."""
    Bout, P, F = fp.shape
    E = w_out.shape[-1]
    if F % tk:
        tk = F
    nk = F // tk
    kernel = _make_head_kernel(P, E)

    out = pl.pallas_call(
        kernel,
        out_shape=jax.ShapeDtypeStruct((Bout, 1, E), jnp.float32),
        grid=(Bout, nk),
        in_specs=[
            pl.BlockSpec((None, P, tk), lambda n, k: (n, 0, k)),
            pl.BlockSpec((tk, E), lambda n, k: (k, 0)),            # w_out K-tiles
            pl.BlockSpec((E, E), lambda n, k: (0, 0)),             # DRL w_a (resident)
            pl.BlockSpec((E, E), lambda n, k: (0, 0)),             # DRL w_b (resident)
        ],
        out_specs=pl.BlockSpec((None, 1, E), lambda n, k: (n, 0, 0)),
        scratch_shapes=[pltpu.VMEM((P, E), jnp.float32)],
        compiler_params=pltpu.CompilerParams(
            dimension_semantics=("parallel", "arbitrary")),
    )(fp, w_out, w_a, w_b)
    return out.reshape(Bout, E)


# =============================================================================
# Wrapper / glue (pure data movement + exact host-side weight folding)
# =============================================================================
def _pick_bblk(B):
    # Fill the 256-row MXU (conv2 M = Bblk*HW) while keeping >= 2 grid steps so the
    # "parallel" batch axis can still shard across v7x's two TensorCores.
    for cand in (4, 2):
        if B % cand == 0 and B // cand >= 2:
            return cand
    return 1


def _shift_mats(Bblk, Hh, Wh):
    """0/1 matrices implementing the conv2 halo shift exactly (incl. image boundary).

    S[r, c] = 1 iff c == r - (sm*Wh + sn) and the destination pixel (m, n) of row r
    satisfies m >= sm and n >= sn (otherwise the source is the zero pad)."""
    HW = Hh * Wh
    BH = Bblk * HW
    r = jnp.arange(BH)
    m = (r % HW) // Wh
    n = r % Wh

    def smat(sm, sn):
        k = sm * Wh + sn
        valid = (m >= sm) & (n >= sn)
        sel = (r[:, None] - k) == r[None, :]
        return (sel & valid[:, None]).astype(jnp.float32)

    return jnp.stack([smat(0, 1), smat(1, 0), smat(1, 1)])        # (3, BH, BH)


def ensemble_forward(x_nchw, params):
    Cin = params["bn1_scale"].shape[0]
    D = params["bn2_scale"].shape[0]
    teacher = x_nchw.shape[1] == 2 * Cin

    # --- Ensemble preamble (Teacher mode): take RGB half, hflip, concat on batch ---
    if teacher:
        x_nchw = x_nchw[:, Cin:, :, :]
        x_nchw = jnp.concatenate([x_nchw, x_nchw[:, :, :, ::-1]], axis=0)
    x = jnp.transpose(x_nchw, (0, 2, 3, 1)).astype(jnp.float32)   # NCHW -> NHWC
    B, H, W, _ = x.shape
    Hh, Wh = H // 2, W // 2
    HW = Hh * Wh
    Bblk = _pick_bblk(B)
    G = B // Bblk
    BH = Bblk * HW
    K9 = 9 * Cin
    Kp = 128                      # lane-dense padded im2col K for conv1
    Csp = 8                       # sublane-padded shortcut input channels

    # --- conv1 im2col (pure XLA data movement), rows ordered [parity][image][pixel] ---
    xbn = x * params["bn1_scale"] + params["bn1_shift"]           # BN1 before zero pad
    xp = jnp.pad(xbn, ((0, 0), (1, 1), (1, 1), (0, 0)))
    taps = [xp[:, dy:dy + H, dx:dx + W, :] for dy in range(3) for dx in range(3)]
    patches = jnp.concatenate(taps, axis=-1)                      # (B, H, W, 9*Cin)
    patches = patches.reshape(G, Bblk, Hh, 2, Wh, 2, K9)          # (g, j, m, ry, n, rx, k)
    patches = jnp.transpose(patches, (0, 3, 5, 1, 2, 4, 6))       # (g, ry, rx, j, m, n, k)
    patch1 = patches.reshape(G, 4 * BH, K9)
    patch1 = jnp.pad(patch1, ((0, 0), (0, 0), (0, Kp - K9)))

    # --- shortcut input: RAW x at stride-2 positions, rows ordered [image][pixel] ---
    xs = x[:, ::2, ::2, :].reshape(G, BH, Cin)
    xs = jnp.pad(xs, ((0, 0), (0, 0), (0, Csp - Cin)))

    # --- halo shift matrices for the strided conv ---
    smats = _shift_mats(Bblk, Hh, Wh)                             # (3, BH, BH)

    # --- host-side weight prep: im2col layout + exact output-side BN folds ---
    w1 = jnp.pad(params["w_conv1"].reshape(K9, D), ((0, Kp - K9), (0, 0)))
    w2 = (params["w_conv2"] * params["bn2_scale"][None, None, None, :]).reshape(9, D, D)
    wsc = jnp.pad(params["w_sc"] * params["bnsc_scale"][None, :], ((0, Csp - Cin), (0, 0)))
    alpha = params["prelu_alpha"].reshape(1, D)
    bn2b = params["bn2_shift"].reshape(1, D)
    bnscb = params["bnsc_shift"].reshape(1, D)

    feat = bottleneck_ir_se(patch1, xs, smats, w1, alpha, w2, bn2b, wsc, bnscb,
                            params["w_fc1"], params["w_fc2"],
                            Bblk=Bblk, HW=HW)                     # (G, BH, D)
    feat_flat = feat.reshape(B, HW * D)                           # metadata reshape only

    if teacher:
        Npair = B // 2
        fp = jnp.stack([feat_flat[:Npair], feat_flat[Npair:]], axis=1)   # (N, 2, F)
    else:
        fp = feat_flat[:, None, :]                                       # (B, 1, F)
    return head_forward(fp, params["w_out"], params["w_drl1"], params["w_drl2"])


# =============================================================================
# Pure-JAX reference (HIGHEST precision) for validation
# =============================================================================
def reference_forward(x_nchw, params):
    hp = lax.Precision.HIGHEST
    dn = ("NHWC", "HWIO", "NHWC")
    Cin = params["bn1_scale"].shape[0]
    teacher = x_nchw.shape[1] == 2 * Cin
    if teacher:
        x_nchw = x_nchw[:, Cin:, :, :]
        x_nchw = jnp.concatenate([x_nchw, x_nchw[:, :, :, ::-1]], axis=0)
    x = jnp.transpose(x_nchw, (0, 2, 3, 1)).astype(jnp.float32)

    y = x * params["bn1_scale"] + params["bn1_shift"]
    y = lax.conv_general_dilated(y, params["w_conv1"], (1, 1), ((1, 1), (1, 1)),
                                 dimension_numbers=dn, precision=hp)
    y = jnp.where(y >= 0, y, y * params["prelu_alpha"])
    y = lax.conv_general_dilated(y, params["w_conv2"], (2, 2), ((1, 1), (1, 1)),
                                 dimension_numbers=dn, precision=hp)
    y = y * params["bn2_scale"] + params["bn2_shift"]

    pooled = jnp.mean(y, axis=(1, 2))
    h = jnp.maximum(jnp.matmul(pooled, params["w_fc1"], precision=hp), 0.0)
    s = jax.nn.sigmoid(jnp.matmul(h, params["w_fc2"], precision=hp))
    res = y * s[:, None, None, :]

    sc = lax.conv_general_dilated(x, params["w_sc"][None, None, :, :], (2, 2),
                                  ((0, 0), (0, 0)), dimension_numbers=dn, precision=hp)
    sc = sc * params["bnsc_scale"] + params["bnsc_shift"]
    feat = res + sc                                                # (B, H/2, W/2, D)

    z = jnp.matmul(feat.reshape(feat.shape[0], -1), params["w_out"], precision=hp)
    z = jnp.maximum(jnp.matmul(z, params["w_drl1"], precision=hp), 0.0)
    z = jnp.matmul(z, params["w_drl2"], precision=hp)
    if teacher:
        n = z.shape[0] // 2
        z = z[:n] + z[n:]
    nrm = jnp.sqrt(jnp.sum(z * z, axis=1, keepdims=True))
    return z / jnp.maximum(nrm, 1e-12)


# =============================================================================
# Deterministic parameter construction
# =============================================================================
def make_params(key, in_channel, depth, emb, hw, reduction=16):
    F = (hw // 2) * (hw // 2) * depth
    dmid = depth // reduction
    ks = jax.random.split(key, 12)

    def nrm(k, shape, scale):
        return scale * jax.random.normal(k, shape, jnp.float32)

    def bn(k, c):
        k1, k2, k3, k4 = jax.random.split(k, 4)
        gamma = 1.0 + 0.1 * jax.random.normal(k1, (c,), jnp.float32)
        beta = 0.1 * jax.random.normal(k2, (c,), jnp.float32)
        mean = 0.1 * jax.random.normal(k3, (c,), jnp.float32)
        var = jax.random.uniform(k4, (c,), jnp.float32, 0.5, 1.5)
        scale = gamma / jnp.sqrt(var + 1e-5)
        return scale, beta - mean * scale

    bn1_scale, bn1_shift = bn(ks[0], in_channel)
    bn2_scale, bn2_shift = bn(ks[1], depth)
    bnsc_scale, bnsc_shift = bn(ks[2], depth)
    return {
        "w_conv1": nrm(ks[3], (3, 3, in_channel, depth), 0.1),     # HWIO
        "w_conv2": nrm(ks[4], (3, 3, depth, depth), 0.03),         # HWIO
        "w_sc": nrm(ks[5], (in_channel, depth), 0.1),              # 1x1 conv as (Cin, D)
        "w_fc1": nrm(ks[6], (depth, dmid), 0.1),
        "w_fc2": nrm(ks[7], (dmid, depth), 0.1),
        "prelu_alpha": 0.25 * jnp.ones((depth,), jnp.float32),
        "bn1_scale": bn1_scale, "bn1_shift": bn1_shift,
        "bn2_scale": bn2_scale, "bn2_shift": bn2_shift,
        "bnsc_scale": bnsc_scale, "bnsc_shift": bnsc_shift,
        "w_out": nrm(ks[8], (F, emb), 0.012),                      # resnet output layer
        "w_drl1": nrm(ks[9], (emb, emb), 0.09),                    # DRL MLP
        "w_drl2": nrm(ks[10], (emb, emb), 0.09),
    }


if __name__ == "__main__":
    N, H, W = 2, 16, 16
    in_channel, depth, emb = 3, 128, 128

    key = jax.random.PRNGKey(0)
    kx, kp = jax.random.split(key)
    # 6-channel input -> Teacher-mode path (slice RGB, hflip, concat on batch).
    x_nchw = jax.random.normal(kx, (N, 2 * in_channel, H, W), jnp.float32)
    params = make_params(kp, in_channel, depth, emb, H)

    out = jax.block_until_ready(jax.jit(ensemble_forward)(x_nchw, params))
    ref = jax.block_until_ready(reference_forward(x_nchw, params))

    assert out.shape == (N, emb), out.shape
    max_err = float(jnp.max(jnp.abs(out - ref)))
    assert max_err < 5e-3, f"mismatch vs reference: max abs err = {max_err}"

    print("KERNEL_OK")
</pallas_src>

<mosaic_0001>
module attributes {stable_mosaic.version = 11 : i64} {
  func.func @kernel(%arg0: i32, %arg1: memref<1x512x128xf32, #tpu.memory_space<vmem>>, %arg2: memref<1x128x8xf32, #tpu.memory_space<vmem>>, %arg3: memref<3x128x128xf32, #tpu.memory_space<vmem>>, %arg4: memref<128x128xf32, #tpu.memory_space<vmem>>, %arg5: memref<1x128xf32, #tpu.memory_space<vmem>>, %arg6: memref<9x128x128xf32, #tpu.memory_space<vmem>>, %arg7: memref<1x128xf32, #tpu.memory_space<vmem>>, %arg8: memref<8x128xf32, #tpu.memory_space<vmem>>, %arg9: memref<1x128xf32, #tpu.memory_space<vmem>>, %arg10: memref<128x8xf32, #tpu.memory_space<vmem>>, %arg11: memref<8x128xf32, #tpu.memory_space<vmem>>, %arg12: memref<1x128x128xf32, #tpu.memory_space<vmem>>) attributes {dimension_semantics = [#tpu.dimension_semantics<parallel>], iteration_bounds = array<i64: 2>, scalar_prefetch = 0 : i64, scratch_operands = 0 : i64, tpu.core_type = #tpu.core_type<tc>, window_params = [{transform_indices = @transform_0, window_bounds = array<i64: 1, 512, 128>}, {transform_indices = @transform_1, window_bounds = array<i64: 1, 128, 8>}, {pipeline_mode = #tpu.pipeline_mode<synchronous>, transform_indices = @transform_2, window_bounds = array<i64: 3, 128, 128>}, {pipeline_mode = #tpu.pipeline_mode<synchronous>, transform_indices = @transform_3, window_bounds = array<i64: 128, 128>}, {pipeline_mode = #tpu.pipeline_mode<synchronous>, transform_indices = @transform_4, window_bounds = array<i64: 1, 128>}, {pipeline_mode = #tpu.pipeline_mode<synchronous>, transform_indices = @transform_5, window_bounds = array<i64: 9, 128, 128>}, {pipeline_mode = #tpu.pipeline_mode<synchronous>, transform_indices = @transform_6, window_bounds = array<i64: 1, 128>}, {pipeline_mode = #tpu.pipeline_mode<synchronous>, transform_indices = @transform_7, window_bounds = array<i64: 8, 128>}, {pipeline_mode = #tpu.pipeline_mode<synchronous>, transform_indices = @transform_8, window_bounds = array<i64: 1, 128>}, {pipeline_mode = #tpu.pipeline_mode<synchronous>, transform_indices = @transform_9, window_bounds = array<i64: 128, 8>}, {pipeline_mode = #tpu.pipeline_mode<synchronous>, transform_indices = @transform_10, window_bounds = array<i64: 8, 128>}, {transform_indices = @transform_11, window_bounds = array<i64: 1, 128, 128>}]} {
    %c0 = arith.constant 0 : index
    %c0_0 = arith.constant 0 : index
    %c0_1 = arith.constant 0 : index
    %0 = vector.load %arg1[%c0, %c0_0, %c0_1] : memref<1x512x128xf32, #tpu.memory_space<vmem>>, vector<1x512x128xf32>
    %1 = vector.shape_cast %0 : vector<1x512x128xf32> to vector<512x128xf32>
    %c0_2 = arith.constant 0 : index
    %c0_3 = arith.constant 0 : index
    %2 = vector.load %arg4[%c0_2, %c0_3] : memref<128x128xf32, #tpu.memory_space<vmem>>, vector<128x128xf32>
    %cst = arith.constant dense<0.000000e+00> : vector<512x128xf32>
    %3 = tpu.matmul %1, %2, %cst {dimension_numbers = #tpu.dot_dimension_numbers<[1], [0], [0], [1], [0, 0, 1, 1], [], []>} : vector<512x128xf32>, vector<128x128xf32>, vector<512x128xf32> -> vector<512x128xf32>
    %cst_4 = arith.constant 0.000000e+00 : f32
    %4 = vector.broadcast %cst_4 : f32 to vector<512x128xf32>
    %5 = arith.cmpf oge, %3, %4 : vector<512x128xf32>
    %c0_5 = arith.constant 0 : index
    %c0_6 = arith.constant 0 : index
    %6 = vector.load %arg5[%c0_5, %c0_6] : memref<1x128xf32, #tpu.memory_space<vmem>>, vector<1x128xf32>
    %7 = vector.broadcast %6 : vector<1x128xf32> to vector<512x128xf32>
    %8 = arith.mulf %3, %7 : vector<512x128xf32>
    %9 = arith.select %5, %3, %8 : vector<512x128xi1>, vector<512x128xf32>
    %10 = vector.extract_strided_slice %9 {offsets = [0, 0], sizes = [128, 128], strides = [1, 1]} : vector<512x128xf32> to vector<128x128xf32>
    %11 = vector.extract_strided_slice %9 {offsets = [128, 0], sizes = [128, 128], strides = [1, 1]} : vector<512x128xf32> to vector<128x128xf32>
    %12 = vector.extract_strided_slice %9 {offsets = [256, 0], sizes = [128, 128], strides = [1, 1]} : vector<512x128xf32> to vector<128x128xf32>
    %13 = vector.extract_strided_slice %9 {offsets = [384, 0], sizes = [128, 128], strides = [1, 1]} : vector<512x128xf32> to vector<128x128xf32>
    %c4 = arith.constant 4 : index
    %c0_7 = arith.constant 0 : index
    %c0_8 = arith.constant 0 : index
    %14 = vector.load %arg6[%c4, %c0_7, %c0_8] : memref<9x128x128xf32, #tpu.memory_space<vmem>>, vector<1x128x128xf32>
    %15 = vector.shape_cast %14 : vector<1x128x128xf32> to vector<128x128xf32>
    %cst_9 = arith.constant dense<0.000000e+00> : vector<128x128xf32>
    %16 = tpu.matmul %10, %15, %cst_9 {dimension_numbers = #tpu.dot_dimension_numbers<[1], [0], [0], [1], [0, 0, 1, 1], [], []>} : vector<128x128xf32>, vector<128x128xf32>, vector<128x128xf32> -> vector<128x128xf32>
    %c5 = arith.constant 5 : index
    %c0_10 = arith.constant 0 : index
    %c0_11 = arith.constant 0 : index
    %17 = vector.load %arg6[%c5, %c0_10, %c0_11] : memref<9x128x128xf32, #tpu.memory_space<vmem>>, vector<1x128x128xf32>
    %18 = vector.shape_cast %17 : vector<1x128x128xf32> to vector<128x128xf32>
    %cst_12 = arith.constant dense<0.000000e+00> : vector<128x128xf32>
    %19 = tpu.matmul %11, %18, %cst_12 {dimension_numbers = #tpu.dot_dimension_numbers<[1], [0], [0], [1], [0, 0, 1, 1], [], []>} : vector<128x128xf32>, vector<128x128xf32>, vector<128x128xf32> -> vector<128x128xf32>
    %20 = arith.addf %16, %19 : vector<128x128xf32>
    %c7 = arith.constant 7 : index
    %c0_13 = arith.constant 0 : index
    %c0_14 = arith.constant 0 : index
    %21 = vector.load %arg6[%c7, %c0_13, %c0_14] : memref<9x128x128xf32, #tpu.memory_space<vmem>>, vector<1x128x128xf32>
    %22 = vector.shape_cast %21 : vector<1x128x128xf32> to vector<128x128xf32>
    %cst_15 = arith.constant dense<0.000000e+00> : vector<128x128xf32>
    %23 = tpu.matmul %12, %22, %cst_15 {dimension_numbers = #tpu.dot_dimension_numbers<[1], [0], [0], [1], [0, 0, 1, 1], [], []>} : vector<128x128xf32>, vector<128x128xf32>, vector<128x128xf32> -> vector<128x128xf32>
    %24 = arith.addf %20, %23 : vector<128x128xf32>
    %c8 = arith.constant 8 : index
    %c0_16 = arith.constant 0 : index
    %c0_17 = arith.constant 0 : index
    %25 = vector.load %arg6[%c8, %c0_16, %c0_17] : memref<9x128x128xf32, #tpu.memory_space<vmem>>, vector<1x128x128xf32>
    %26 = vector.shape_cast %25 : vector<1x128x128xf32> to vector<128x128xf32>
    %cst_18 = arith.constant dense<0.000000e+00> : vector<128x128xf32>
    %27 = tpu.matmul %13, %26, %cst_18 {dimension_numbers = #tpu.dot_dimension_numbers<[1], [0], [0], [1], [0, 0, 1, 1], [], []>} : vector<128x128xf32>, vector<128x128xf32>, vector<128x128xf32> -> vector<128x128xf32>
    %28 = arith.addf %24, %27 : vector<128x128xf32>
    %c3 = arith.constant 3 : index
    %c0_19 = arith.constant 0 : index
    %c0_20 = arith.constant 0 : index
    %29 = vector.load %arg6[%c3, %c0_19, %c0_20] : memref<9x128x128xf32, #tpu.memory_space<vmem>>, vector<1x128x128xf32>
    %30 = vector.shape_cast %29 : vector<1x128x128xf32> to vector<128x128xf32>
    %cst_21 = arith.constant dense<0.000000e+00> : vector<128x128xf32>
    %31 = tpu.matmul %11, %30, %cst_21 {dimension_numbers = #tpu.dot_dimension_numbers<[1], [0], [0], [1], [0, 0, 1, 1], [], []>} : vector<128x128xf32>, vector<128x128xf32>, vector<128x128xf32> -> vector<128x128xf32>
    %c6 = arith.constant 6 : index
    %c0_22 = arith.constant 0 : index
    %c0_23 = arith.constant 0 : index
    %32 = vector.load %arg6[%c6, %c0_22, %c0_23] : memref<9x128x128xf32, #tpu.memory_space<vmem>>, vector<1x128x128xf32>
    %33 = vector.shape_cast %32 : vector<1x128x128xf32> to vector<128x128xf32>
    %cst_24 = arith.constant dense<0.000000e+00> : vector<128x128xf32>
    %34 = tpu.matmul %13, %33, %cst_24 {dimension_numbers = #tpu.dot_dimension_numbers<[1], [0], [0], [1], [0, 0, 1, 1], [], []>} : vector<128x128xf32>, vector<128x128xf32>, vector<128x128xf32> -> vector<128x128xf32>
    %35 = arith.addf %31, %34 : vector<128x128xf32>
    %c1 = arith.constant 1 : index
    %c0_25 = arith.constant 0 : index
    %c0_26 = arith.constant 0 : index
    %36 = vector.load %arg6[%c1, %c0_25, %c0_26] : memref<9x128x128xf32, #tpu.memory_space<vmem>>, vector<1x128x128xf32>
    %37 = vector.shape_cast %36 : vector<1x128x128xf32> to vector<128x128xf32>
    %cst_27 = arith.constant dense<0.000000e+00> : vector<128x128xf32>
    %38 = tpu.matmul %12, %37, %cst_27 {dimension_numbers = #tpu.dot_dimension_numbers<[1], [0], [0], [1], [0, 0, 1, 1], [], []>} : vector<128x128xf32>, vector<128x128xf32>, vector<128x128xf32> -> vector<128x128xf32>
    %c2 = arith.constant 2 : index
    %c0_28 = arith.constant 0 : index
    %c0_29 = arith.constant 0 : index
    %39 = vector.load %arg6[%c2, %c0_28, %c0_29] : memref<9x128x128xf32, #tpu.memory_space<vmem>>, vector<1x128x128xf32>
    %40 = vector.shape_cast %39 : vector<1x128x128xf32> to vector<128x128xf32>
    %cst_30 = arith.constant dense<0.000000e+00> : vector<128x128xf32>
    %41 = tpu.matmul %13, %40, %cst_30 {dimension_numbers = #tpu.dot_dimension_numbers<[1], [0], [0], [1], [0, 0, 1, 1], [], []>} : vector<128x128xf32>, vector<128x128xf32>, vector<128x128xf32> -> vector<128x128xf32>
    %42 = arith.addf %38, %41 : vector<128x128xf32>
    %c0_31 = arith.constant 0 : index
    %c0_32 = arith.constant 0 : index
    %c0_33 = arith.constant 0 : index
    %43 = vector.load %arg6[%c0_31, %c0_32, %c0_33] : memref<9x128x128xf32, #tpu.memory_space<vmem>>, vector<1x128x128xf32>
    %44 = vector.shape_cast %43 : vector<1x128x128xf32> to vector<128x128xf32>
    %cst_34 = arith.constant dense<0.000000e+00> : vector<128x128xf32>
    %45 = tpu.matmul %13, %44, %cst_34 {dimension_numbers = #tpu.dot_dimension_numbers<[1], [0], [0], [1], [0, 0, 1, 1], [], []>} : vector<128x128xf32>, vector<128x128xf32>, vector<128x128xf32> -> vector<128x128xf32>
    %c0_35 = arith.constant 0 : index
    %c0_36 = arith.constant 0 : index
    %c0_37 = arith.constant 0 : index
    %46 = vector.load %arg3[%c0_35, %c0_36, %c0_37] : memref<3x128x128xf32, #tpu.memory_space<vmem>>, vector<1x128x128xf32>
    %47 = vector.shape_cast %46 : vector<1x128x128xf32> to vector<128x128xf32>
    %cst_38 = arith.constant dense<0.000000e+00> : vector<128x128xf32>
    %48 = tpu.matmul %47, %35, %cst_38 {dimension_numbers = #tpu.dot_dimension_numbers<[1], [0], [0], [1], [0, 0, 1, 1], [], []>} : vector<128x128xf32>, vector<128x128xf32>, vector<128x128xf32> -> vector<128x128xf32>
    %49 = arith.addf %28, %48 : vector<128x128xf32>
    %c1_39 = arith.constant 1 : index
    %c0_40 = arith.constant 0 : index
    %c0_41 = arith.constant 0 : index
    %50 = vector.load %arg3[%c1_39, %c0_40, %c0_41] : memref<3x128x128xf32, #tpu.memory_space<vmem>>, vector<1x128x128xf32>
    %51 = vector.shape_cast %50 : vector<1x128x128xf32> to vector<128x128xf32>
    %cst_42 = arith.constant dense<0.000000e+00> : vector<128x128xf32>
    %52 = tpu.matmul %51, %42, %cst_42 {dimension_numbers = #tpu.dot_dimension_numbers<[1], [0], [0], [1], [0, 0, 1, 1], [], []>} : vector<128x128xf32>, vector<128x128xf32>, vector<128x128xf32> -> vector<128x128xf32>
    %53 = arith.addf %49, %52 : vector<128x128xf32>
    %c2_43 = arith.constant 2 : index
    %c0_44 = arith.constant 0 : index
    %c0_45 = arith.constant 0 : index
    %54 = vector.load %arg3[%c2_43, %c0_44, %c0_45] : memref<3x128x128xf32, #tpu.memory_space<vmem>>, vector<1x128x128xf32>
    %55 = vector.shape_cast %54 : vector<1x128x128xf32> to vector<128x128xf32>
    %cst_46 = arith.constant dense<0.000000e+00> : vector<128x128xf32>
    %56 = tpu.matmul %55, %45, %cst_46 {dimension_numbers = #tpu.dot_dimension_numbers<[1], [0], [0], [1], [0, 0, 1, 1], [], []>} : vector<128x128xf32>, vector<128x128xf32>, vector<128x128xf32> -> vector<128x128xf32>
    %57 = arith.addf %53, %56 : vector<128x128xf32>
    %c0_47 = arith.constant 0 : index
    %c0_48 = arith.constant 0 : index
    %58 = vector.load %arg7[%c0_47, %c0_48] : memref<1x128xf32, #tpu.memory_space<vmem>>, vector<1x128xf32>
    %59 = vector.broadcast %58 : vector<1x128xf32> to vector<128x128xf32>
    %60 = arith.addf %57, %59 : vector<128x128xf32>
    %c0_49 = arith.constant 0 : index
    %c0_50 = arith.constant 0 : index
    %c0_51 = arith.constant 0 : index
    %61 = vector.load %arg2[%c0_49, %c0_50, %c0_51] : memref<1x128x8xf32, #tpu.memory_space<vmem>>, vector<1x128x8xf32>
    %62 = vector.shape_cast %61 : vector<1x128x8xf32> to vector<128x8xf32>
    %c0_52 = arith.constant 0 : index
    %c0_53 = arith.constant 0 : index
    %63 = vector.load %arg8[%c0_52, %c0_53] : memref<8x128xf32, #tpu.memory_space<vmem>>, vector<8x128xf32>
    %cst_54 = arith.constant dense<0.000000e+00> : vector<128x128xf32>
    %64 = tpu.matmul %62, %63, %cst_54 {dimension_numbers = #tpu.dot_dimension_numbers<[1], [0], [0], [1], [0, 0, 1, 1], [], []>} : vector<128x8xf32>, vector<8x128xf32>, vector<128x128xf32> -> vector<128x128xf32>
    %c0_55 = arith.constant 0 : index
    %c0_56 = arith.constant 0 : index
    %65 = vector.load %arg9[%c0_55, %c0_56] : memref<1x128xf32, #tpu.memory_space<vmem>>, vector<1x128xf32>
    %66 = vector.broadcast %65 : vector<1x128xf32> to vector<128x128xf32>
    %67 = arith.addf %64, %66 : vector<128x128xf32>
    %68 = vector.shape_cast %60 : vector<128x128xf32> to vector<2x64x128xf32>
    %cst_57 = arith.constant dense<0.000000e+00> : vector<2x128xf32>
    %69 = vector.multi_reduction <add>, %68, %cst_57 [1] : vector<2x64x128xf32> to vector<2x128xf32>
    %cst_58 = arith.constant 6.400000e+01 : f32
    %70 = vector.broadcast %cst_58 : f32 to vector<2x128xf32>
    %71 = arith.divf %69, %70 : vector<2x128xf32>
    %c0_59 = arith.constant 0 : index
    %c0_60 = arith.constant 0 : index
    %72 = vector.load %arg10[%c0_59, %c0_60] : memref<128x8xf32, #tpu.memory_space<vmem>>, vector<128x8xf32>
    %cst_61 = arith.constant dense<0.000000e+00> : vector<2x8xf32>
    %73 = tpu.matmul %71, %72, %cst_61 {dimension_numbers = #tpu.dot_dimension_numbers<[1], [0], [0], [1], [0, 0, 1, 1], [], []>} : vector<2x128xf32>, vector<128x8xf32>, vector<2x8xf32> -> vector<2x8xf32>
    %cst_62 = arith.constant 0.000000e+00 : f32
    %74 = vector.broadcast %cst_62 : f32 to vector<2x8xf32>
    %75 = arith.maximumf %73, %74 : vector<2x8xf32>
    %c0_63 = arith.constant 0 : index
    %c0_64 = arith.constant 0 : index
    %76 = vector.load %arg11[%c0_63, %c0_64] : memref<8x128xf32, #tpu.memory_space<vmem>>, vector<8x128xf32>
    %cst_65 = arith.constant dense<0.000000e+00> : vector<2x128xf32>
    %77 = tpu.matmul %75, %76, %cst_65 {dimension_numbers = #tpu.dot_dimension_numbers<[1], [0], [0], [1], [0, 0, 1, 1], [], []>} : vector<2x8xf32>, vector<8x128xf32>, vector<2x128xf32> -> vector<2x128xf32>
    %78 = arith.negf %77 : vector<2x128xf32>
    %79 = math.exp %78 : vector<2x128xf32>
    %cst_66 = arith.constant 1.000000e+00 : f32
    %80 = vector.broadcast %cst_66 : f32 to vector<2x128xf32>
    %81 = arith.addf %80, %79 : vector<2x128xf32>
    %82 = arith.divf %80, %81 : vector<2x128xf32>
    %83 = vector.shape_cast %82 : vector<2x128xf32> to vector<2x1x128xf32>
    %84 = vector.broadcast %83 : vector<2x1x128xf32> to vector<2x64x128xf32>
    %85 = arith.mulf %68, %84 : vector<2x64x128xf32>
    %86 = vector.shape_cast %67 : vector<128x128xf32> to vector<2x64x128xf32>
    %87 = arith.addf %85, %86 : vector<2x64x128xf32>
    %88 = vector.shape_cast %87 : vector<2x64x128xf32> to vector<128x128xf32>
    %c0_67 = arith.constant 0 : index
    %c0_68 = arith.constant 0 : index
    %c0_69 = arith.constant 0 : index
    %89 = vector.load %arg12[%c0_67, %c0_68, %c0_69] : memref<1x128x128xf32, #tpu.memory_space<vmem>>, vector<1x128x128xf32>
    %90 = vector.shape_cast %89 : vector<1x128x128xf32> to vector<128x128xf32>
    %91 = vector.shape_cast %88 : vector<128x128xf32> to vector<1x128x128xf32>
    tpu.vector_store %arg12[%c0_67, %c0_68, %c0_69], %91 {strides = array<i32>} : memref<1x128x128xf32, #tpu.memory_space<vmem>>, vector<1x128x128xf32>,
    return
  }
  func.func @transform_0(%arg0: i32) -> (i32, i32, i32) {
    %c0_i32 = arith.constant 0 : i32
    %c0_i32_0 = arith.constant 0 : i32
    %c0_i32_1 = arith.constant 0 : i32
    return %arg0, %c0_i32, %c0_i32_0 : i32, i32, i32
  }
  func.func @transform_1(%arg0: i32) -> (i32, i32, i32) {
    %c0_i32 = arith.constant 0 : i32
    %c0_i32_0 = arith.constant 0 : i32
    %c0_i32_1 = arith.constant 0 : i32
    return %arg0, %c0_i32, %c0_i32_0 : i32, i32, i32
  }
  func.func @transform_2(%arg0: i32) -> (i32, i32, i32) {
    %c0_i32 = arith.constant 0 : i32
    %c0_i32_0 = arith.constant 0 : i32
    %c0_i32_1 = arith.constant 0 : i32
    %c0_i32_2 = arith.constant 0 : i32
    return %c0_i32, %c0_i32_0, %c0_i32_1 : i32, i32, i32
  }
  func.func @transform_3(%arg0: i32) -> (i32, i32) {
    %c0_i32 = arith.constant 0 : i32
    %c0_i32_0 = arith.constant 0 : i32
    %c0_i32_1 = arith.constant 0 : i32
    return %c0_i32, %c0_i32_0 : i32, i32
  }
  func.func @transform_4(%arg0: i32) -> (i32, i32) {
    %c0_i32 = arith.constant 0 : i32
    %c0_i32_0 = arith.constant 0 : i32
    %c0_i32_1 = arith.constant 0 : i32
    return %c0_i32, %c0_i32_0 : i32, i32
  }
  func.func @transform_5(%arg0: i32) -> (i32, i32, i32) {
    %c0_i32 = arith.constant 0 : i32
    %c0_i32_0 = arith.constant 0 : i32
    %c0_i32_1 = arith.constant 0 : i32
    %c0_i32_2 = arith.constant 0 : i32
    return %c0_i32, %c0_i32_0, %c0_i32_1 : i32, i32, i32
  }
  func.func @transform_6(%arg0: i32) -> (i32, i32) {
    %c0_i32 = arith.constant 0 : i32
    %c0_i32_0 = arith.constant 0 : i32
    %c0_i32_1 = arith.constant 0 : i32
    return %c0_i32, %c0_i32_0 : i32, i32
  }
  func.func @transform_7(%arg0: i32) -> (i32, i32) {
    %c0_i32 = arith.constant 0 : i32
    %c0_i32_0 = arith.constant 0 : i32
    %c0_i32_1 = arith.constant 0 : i32
    return %c0_i32, %c0_i32_0 : i32, i32
  }
  func.func @transform_8(%arg0: i32) -> (i32, i32) {
    %c0_i32 = arith.constant 0 : i32
    %c0_i32_0 = arith.constant 0 : i32
    %c0_i32_1 = arith.constant 0 : i32
    return %c0_i32, %c0_i32_0 : i32, i32
  }
  func.func @transform_9(%arg0: i32) -> (i32, i32) {
    %c0_i32 = arith.constant 0 : i32
    %c0_i32_0 = arith.constant 0 : i32
    %c0_i32_1 = arith.constant 0 : i32
    return %c0_i32, %c0_i32_0 : i32, i32
  }
  func.func @transform_10(%arg0: i32) -> (i32, i32) {
    %c0_i32 = arith.constant 0 : i32
    %c0_i32_0 = arith.constant 0 : i32
    %c0_i32_1 = arith.constant 0 : i32
    return %c0_i32, %c0_i32_0 : i32, i32
  }
  func.func @transform_11(%arg0: i32) -> (i32, i32, i32) {
    %c0_i32 = arith.constant 0 : i32
    %c0_i32_0 = arith.constant 0 : i32
    %c0_i32_1 = arith.constant 0 : i32
    return %arg0, %c0_i32, %c0_i32_0 : i32, i32, i32
  }
}

module attributes {stable_mosaic.version = 11 : i64} {
  func.func @kernel(%arg0: i32, %arg1: i32, %arg2: memref<1x2x2048xf32, #tpu.memory_space<vmem>>, %arg3: memref<2048x128xf32, #tpu.memory_space<vmem>>, %arg4: memref<128x128xf32, #tpu.memory_space<vmem>>, %arg5: memref<128x128xf32, #tpu.memory_space<vmem>>, %arg6: memref<1x1x128xf32, #tpu.memory_space<vmem>>, %arg7: memref<2x128xf32, #tpu.memory_space<vmem>>) attributes {dimension_semantics = [#tpu.dimension_semantics<parallel>, #tpu.dimension_semantics<arbitrary>], iteration_bounds = array<i64: 2, 4>, scalar_prefetch = 0 : i64, scratch_operands = 1 : i64, tpu.core_type = #tpu.core_type<tc>, window_params = [{transform_indices = @transform_0, window_bounds = array<i64: 1, 2, 2048>}, {transform_indices = @transform_1, window_bounds = array<i64: 2048, 128>}, {pipeline_mode = #tpu.pipeline_mode<synchronous>, transform_indices = @transform_2, window_bounds = array<i64: 128, 128>}, {pipeline_mode = #tpu.pipeline_mode<synchronous>, transform_indices = @transform_3, window_bounds = array<i64: 128, 128>}, {transform_indices = @transform_4, window_bounds = array<i64: 1, 1, 128>}]} {
    %c0_i32 = arith.constant 0 : i32
    %0 = arith.cmpi eq, %arg1, %c0_i32 : i32
    %1 = arith.extui %0 : i1 to i32
    %c0_i32_0 = arith.constant 0 : i32
    %2 = arith.cmpi ne, %1, %c0_i32_0 : i32
    scf.if %2 {
      %cst_10 = arith.constant 0.000000e+00 : f32
      %13 = vector.broadcast %cst_10 : f32 to vector<2x128xf32>
      %c0_11 = arith.constant 0 : index
      %c0_12 = arith.constant 0 : index
      %14 = vector.load %arg7[%c0_11, %c0_12] : memref<2x128xf32, #tpu.memory_space<vmem>>, vector<2x128xf32>
      tpu.vector_store %arg7[%c0_11, %c0_12], %13 {strides = array<i32>} : memref<2x128xf32, #tpu.memory_space<vmem>>, vector<2x128xf32>,
    } else {
    }
    %c0 = arith.constant 0 : index
    %c0_1 = arith.constant 0 : index
    %3 = vector.load %arg7[%c0, %c0_1] : memref<2x128xf32, #tpu.memory_space<vmem>>, vector<2x128xf32>
    %c0_2 = arith.constant 0 : index
    %c0_3 = arith.constant 0 : index
    %c0_4 = arith.constant 0 : index
    %4 = vector.load %arg2[%c0_2, %c0_3, %c0_4] : memref<1x2x2048xf32, #tpu.memory_space<vmem>>, vector<1x2x2048xf32>
    %5 = vector.shape_cast %4 : vector<1x2x2048xf32> to vector<2x2048xf32>
    %c0_5 = arith.constant 0 : index
    %c0_6 = arith.constant 0 : index
    %6 = vector.load %arg3[%c0_5, %c0_6] : memref<2048x128xf32, #tpu.memory_space<vmem>>, vector<2048x128xf32>
    %cst = arith.constant dense<0.000000e+00> : vector<2x128xf32>
    %7 = tpu.matmul %5, %6, %cst {dimension_numbers = #tpu.dot_dimension_numbers<[1], [0], [0], [1], [0, 0, 1, 1], [], []>} : vector<2x2048xf32>, vector<2048x128xf32>, vector<2x128xf32> -> vector<2x128xf32>
    %8 = arith.addf %3, %7 : vector<2x128xf32>
    %c0_7 = arith.constant 0 : index
    %c0_8 = arith.constant 0 : index
    %9 = vector.load %arg7[%c0_7, %c0_8] : memref<2x128xf32, #tpu.memory_space<vmem>>, vector<2x128xf32>
    tpu.vector_store %arg7[%c0_7, %c0_8], %8 {strides = array<i32>} : memref<2x128xf32, #tpu.memory_space<vmem>>, vector<2x128xf32>,
    %c3_i32 = arith.constant 3 : i32
    %10 = arith.cmpi eq, %arg1, %c3_i32 : i32
    %11 = arith.extui %10 : i1 to i32
    %c0_i32_9 = arith.constant 0 : i32
    %12 = arith.cmpi ne, %11, %c0_i32_9 : i32
    scf.if %12 {
      %c0_10 = arith.constant 0 : index
      %c0_11 = arith.constant 0 : index
      %13 = vector.load %arg7[%c0_10, %c0_11] : memref<2x128xf32, #tpu.memory_space<vmem>>, vector<2x128xf32>
      %c0_12 = arith.constant 0 : index
      %c0_13 = arith.constant 0 : index
      %14 = vector.load %arg4[%c0_12, %c0_13] : memref<128x128xf32, #tpu.memory_space<vmem>>, vector<128x128xf32>
      %cst_14 = arith.constant dense<0.000000e+00> : vector<2x128xf32>
      %15 = tpu.matmul %13, %14, %cst_14 {dimension_numbers = #tpu.dot_dimension_numbers<[1], [0], [0], [1], [0, 0, 1, 1], [], []>} : vector<2x128xf32>, vector<128x128xf32>, vector<2x128xf32> -> vector<2x128xf32>
      %cst_15 = arith.constant 0.000000e+00 : f32
      %16 = vector.broadcast %cst_15 : f32 to vector<2x128xf32>
      %17 = arith.maximumf %15, %16 : vector<2x128xf32>
      %cst_16 = arith.constant dense<0.000000e+00> : vector<128xf32>
      %18 = vector.multi_reduction <add>, %17, %cst_16 [0] : vector<2x128xf32> to vector<128xf32>
      %19 = vector.shape_cast %18 : vector<128xf32> to vector<1x128xf32>
      %c0_17 = arith.constant 0 : index
      %c0_18 = arith.constant 0 : index
      %20 = vector.load %arg5[%c0_17, %c0_18] : memref<128x128xf32, #tpu.memory_space<vmem>>, vector<128x128xf32>
      %cst_19 = arith.constant dense<0.000000e+00> : vector<1x128xf32>
      %21 = tpu.matmul %19, %20, %cst_19 {dimension_numbers = #tpu.dot_dimension_numbers<[1], [0], [0], [1], [0, 0, 1, 1], [], []>} : vector<1x128xf32>, vector<128x128xf32>, vector<1x128xf32> -> vector<1x128xf32>
      %22 = arith.mulf %21, %21 : vector<1x128xf32>
      %cst_20 = arith.constant dense<0.000000e+00> : vector<1xf32>
      %23 = vector.multi_reduction <add>, %22, %cst_20 [1] : vector<1x128xf32> to vector<1xf32>
      %24 = vector.shape_cast %23 : vector<1xf32> to vector<1x1xf32>
      %cst_21 = arith.constant 1.000000e-24 : f32
      %25 = vector.broadcast %cst_21 : f32 to vector<1x1xf32>
      %26 = arith.maximumf %24, %25 : vector<1x1xf32>
      %27 = math.rsqrt %26 : vector<1x1xf32>
      %28 = vector.broadcast %27 : vector<1x1xf32> to vector<1x128xf32>
      %29 = arith.mulf %21, %28 : vector<1x128xf32>
      %c0_22 = arith.constant 0 : index
      %c0_23 = arith.constant 0 : index
      %c0_24 = arith.constant 0 : index
      %30 = vector.load %arg6[%c0_22, %c0_23, %c0_24] : memref<1x1x128xf32, #tpu.memory_space<vmem>>, vector<1x1x128xf32>
      %31 = vector.shape_cast %30 : vector<1x1x128xf32> to vector<1x128xf32>
      %32 = vector.shape_cast %29 : vector<1x128xf32> to vector<1x1x128xf32>
      tpu.vector_store %arg6[%c0_22, %c0_23, %c0_24], %32 {strides = array<i32>} : memref<1x1x128xf32, #tpu.memory_space<vmem>>, vector<1x1x128xf32>,
    } else {
    }
    return
  }
  func.func @transform_0(%arg0: i32, %arg1: i32) -> (i32, i32, i32) {
    %c0_i32 = arith.constant 0 : i32
    %c0_i32_0 = arith.constant 0 : i32
    return %arg0, %c0_i32, %arg1 : i32, i32, i32
  }
  func.func @transform_1(%arg0: i32, %arg1: i32) -> (i32, i32) {
    %c0_i32 = arith.constant 0 : i32
    %c0_i32_0 = arith.constant 0 : i32
    return %arg1, %c0_i32 : i32, i32
  }
  func.func @transform_2(%arg0: i32, %arg1: i32) -> (i32, i32) {
    %c0_i32 = arith.constant 0 : i32
    %c0_i32_0 = arith.constant 0 : i32
    %c0_i32_1 = arith.constant 0 : i32
    return %c0_i32, %c0_i32_0 : i32, i32
  }
  func.func @transform_3(%arg0: i32, %arg1: i32) -> (i32, i32) {
    %c0_i32 = arith.constant 0 : i32
    %c0_i32_0 = arith.constant 0 : i32
    %c0_i32_1 = arith.constant 0 : i32
    return %c0_i32, %c0_i32_0 : i32, i32
  }
  func.func @transform_4(%arg0: i32, %arg1: i32) -> (i32, i32, i32) {
    %c0_i32 = arith.constant 0 : i32
    %c0_i32_0 = arith.constant 0 : i32
    %c0_i32_1 = arith.constant 0 : i32
    return %arg0, %c0_i32, %c0_i32_0 : i32, i32, i32
  }
}

</mosaic_0001>

<llo_original>
// kernel: ensemble_forward.3
$region0: #{ensemble_forward.3}
  #allocation0 [shape = 'u32[]', space=smem, size = 0x4, offset = 0x4, fixed_abs, tag = 'smem constant byte address 0x4 - core index']
  #allocation1 [shape = 'u32[72,128]{1,0:T(1,128)}', space=vmem, size = 0x9000, scoped, tag = 'internal scratch']
  #allocation2 [shape = 'f32[2,128]{1,0:T(2,128)}', space=vmem, size = 0x400, scoped, tag = 'scratch operand']
  %s0 = inlined_call_operand.vmem [shape: f32[2,2,8192], index: 0, kind: input, shape index: {}]
  %s1 = inlined_call_operand.vmem [shape: f32[8192,128], index: 1, kind: input, shape index: {}]
  %s2 = inlined_call_operand.vmem [shape: f32[128,128], index: 2, kind: input, shape index: {}]
  %s3 = inlined_call_operand.vmem [shape: f32[128,128], index: 3, kind: input, shape index: {}]
  %s4 = inlined_call_operand.hbm [shape: f32[2,1,128], index: 4, kind: output, shape index: {}]
  %s5 = sld [smem:[#allocation0]]
  $region57: #{ensemble_forward.3} parent=0
    _
  %s7 = ssub.s32 1, %s5
  %s8 = scalar_select 0, %s7, %s5
  $region1: #{ensemble_forward.3} parent=0
    #allocation3 [shape = 'u8[1024]{0}', space=vmem, size = 0x400, scoped, tag = 'output window, operand 0']
    #allocation4 [shape = 's32[2]{0}', space=sflag, size = 0x8, scoped, tag = 'scoped memory for ensemble_forward.3']
    %9 = vsyncpa [#allocation4], 0
    %s10 = scalar_lea.sflag [#allocation4], 1
    %11 = vsyncpa %s10, 0
    loop: start=0, step=1, limit=10
    $region2: #{ensemble_forward.3} parent=1 // loop_pre_header
      _
    $region3: #{ensemble_forward.3} parent=1 // loop_header
      %s13 = sphi 0, %s17
      %p14 = scmp.ge.s32.totalorder %s13, 10
      %s20 = sphi 0, %s32
      %s21 = sphi 0, %s28
      %s22 = sphi 0, %s20
      %s23 = sphi 0, %s21
      %s24 = sphi 0, %s22
      %s25 = sphi 0, %s23
      %s37 = sphi 0, %s39
      %s40 = sphi 0, %s37
      %s41 = sphi 0, %s40
      %s57 = sphi 0, %s41
      %s63 = sphi 0, %s65
      %s66 = sphi 0, %s63
      %s67 = sphi 0, %s66
      %s83 = sphi 0, %s67
      %s87 = sphi 0, %s87
      %s89 = sphi 0, %s87
      %s90 = sphi 0, %s89
      %s104 = sphi 0, %s90
      %s108 = sphi 0, %s108
      %s110 = sphi 0, %s108
      %s111 = sphi 0, %s110
      %s125 = sphi 0, %s111
      %s131 = sphi 0, %s133
      %s134 = sphi 0, %s131
      %s135 = sphi 0, %s134
      %s151 = sphi 0, %s135
    $region4: #{ensemble_forward.3} parent=1 // loop_header_branch
      %16 = sbr.rel (%p14) target = $region8
    $region5: #{ensemble_forward.3} parent=1 // loop_body
      %s18 = ssub.s32 %s13, 1
      %s19 = ssub.s32 %s13, 2
      %s26 = sadd.s32 1, %s21
      %p27 = scmp.ge.s32.totalorder %s26, 4
      %s28 = scalar_select %p27, 0, %s26
      %s29 = sadd.s32 1, %s20
      %s30 = scalar_select %p27, %s29, %s20
      %p31 = scmp.ge.s32.totalorder %s30, 2
      %s32 = scalar_select %p31, 0, %s30
      %s33 = ssub.s32 %s20, %s32
      %s34 = ssub.s32 %s21, %s28
      %s35 = sor.u32 %s33, %s34
      %p36 = scmp.eq.s32.totalorder %s35, 0
      %s38 = sadd.s32 %s37, 1
      %s39 = scalar_select %p36, %s37, %s38
      %p42 = pneg %p36
      %p43 = scmp.eq.s32.totalorder %s13, 7
      %p44 = por %p42, %p43
      %p45 = scmp.ne.s32.totalorder %s37, %s40
      %p46 = scmp.eq.s32.totalorder %s13, 0
      %p47 = por %p45, %p46
      %p48 = scmp.ne.s32.totalorder %s37, %s40
      %p49 = scmp.eq.s32.totalorder %s18, 7
      %p50 = por %p48, %p49
      %p51 = scmp.ne.s32.totalorder %s40, %s41
      %p52 = scmp.eq.s32.totalorder %s18, 0
      %p53 = por %p51, %p52
      %p54 = scmp.ne.s32.totalorder %s40, %s41
      %p55 = scmp.eq.s32.totalorder %s19, 7
      %p56 = por %p54, %p55
      %p58 = scmp.ne.s32.totalorder %s41, %s57
      %p59 = scmp.eq.s32.totalorder %s19, 0
      %p60 = por %p58, %p59
      %s61 = ssub.s32 %s21, %s28
      %p62 = scmp.eq.s32.totalorder %s61, 0
      %s64 = sadd.s32 %s63, 1
      %s65 = scalar_select %p62, %s63, %s64
      %p68 = pneg %p62
      %p69 = scmp.eq.s32.totalorder %s13, 7
      %p70 = por %p68, %p69
      %p71 = scmp.ne.s32.totalorder %s63, %s66
      %p72 = scmp.eq.s32.totalorder %s13, 0
      %p73 = por %p71, %p72
      %p74 = scmp.ne.s32.totalorder %s63, %s66
      %p75 = scmp.eq.s32.totalorder %s18, 7
      %p76 = por %p74, %p75
      %p77 = scmp.ne.s32.totalorder %s66, %s67
      %p78 = scmp.eq.s32.totalorder %s18, 0
      %p79 = por %p77, %p78
      %p80 = scmp.ne.s32.totalorder %s66, %s67
      %p81 = scmp.eq.s32.totalorder %s19, 7
      %p82 = por %p80, %p81
      %p84 = scmp.ne.s32.totalorder %s67, %s83
      %p85 = scmp.eq.s32.totalorder %s19, 0
      %p86 = por %p84, %p85
      %s88 = sadd.s32 %s87, 1
      %p91 = scmp.eq.s32.totalorder %s13, 7
      %p92 = scmp.ne.s32.totalorder %s87, %s89
      %p93 = scmp.eq.s32.totalorder %s13, 0
      %p94 = por %p92, %p93
      %p95 = scmp.ne.s32.totalorder %s87, %s89
      %p96 = scmp.eq.s32.totalorder %s18, 7
      %p97 = por %p95, %p96
      %p98 = scmp.ne.s32.totalorder %s89, %s90
      %p99 = scmp.eq.s32.totalorder %s18, 0
      %p100 = por %p98, %p99
      %p101 = scmp.ne.s32.totalorder %s89, %s90
      %p102 = scmp.eq.s32.totalorder %s19, 7
      %p103 = por %p101, %p102
      %p105 = scmp.ne.s32.totalorder %s90, %s104
      %p106 = scmp.eq.s32.totalorder %s19, 0
      %p107 = por %p105, %p106
      %s109 = sadd.s32 %s108, 1
      %p112 = scmp.eq.s32.totalorder %s13, 7
      %p113 = scmp.ne.s32.totalorder %s108, %s110
      %p114 = scmp.eq.s32.totalorder %s13, 0
      %p115 = por %p113, %p114
      %p116 = scmp.ne.s32.totalorder %s108, %s110
      %p117 = scmp.eq.s32.totalorder %s18, 7
      %p118 = por %p116, %p117
      %p119 = scmp.ne.s32.totalorder %s110, %s111
      %p120 = scmp.eq.s32.totalorder %s18, 0
      %p121 = por %p119, %p120
      %p122 = scmp.ne.s32.totalorder %s110, %s111
      %p123 = scmp.eq.s32.totalorder %s19, 7
      %p124 = por %p122, %p123
      %p126 = scmp.ne.s32.totalorder %s111, %s125
      %p127 = scmp.eq.s32.totalorder %s19, 0
      %p128 = por %p126, %p127
      %s129 = ssub.s32 %s20, %s32
      %p130 = scmp.eq.s32.totalorder %s129, 0
      %s132 = sadd.s32 %s131, 1
      %s133 = scalar_select %p130, %s131, %s132
      %p136 = pneg %p130
      %p137 = scmp.eq.s32.totalorder %s13, 7
      %p138 = por %p136, %p137
      %p139 = scmp.ne.s32.totalorder %s131, %s134
      %p140 = scmp.eq.s32.totalorder %s13, 0
      %p141 = por %p139, %p140
      %p142 = scmp.ne.s32.totalorder %s131, %s134
      %p143 = scmp.eq.s32.totalorder %s18, 7
      %p144 = por %p142, %p143
      %p145 = scmp.ne.s32.totalorder %s134, %s135
      %p146 = scmp.eq.s32.totalorder %s18, 0
      %p147 = por %p145, %p146
      %p148 = scmp.ne.s32.totalorder %s134, %s135
      %p149 = scmp.eq.s32.totalorder %s19, 7
      %p150 = por %p148, %p149
      %p152 = scmp.ne.s32.totalorder %s135, %s151
      %p153 = scmp.eq.s32.totalorder %s19, 0
      %p154 = por %p152, %p153
      %p155 = scmp.le.s32.totalorder 1, %s13
      %p156 = scmp.lt.s32.totalorder %s13, 9
      %p157 = pnand %p155, %p156
      %p158 = pneg %p157
      // Predicated region
      $region9: #{ensemble_forward.3} parent=5 // pred_check
        _
      $region10: #{ensemble_forward.3} parent=5 // pred_check_branch
        %160 = sbr.rel (%p157) target = $region12
      $region11: #{ensemble_forward.3} parent=5 // pred_region
        %s161 = ssub.s32 %s13, 1
        // Predicated region
        $region13: #{ensemble_forward.3} parent=11 // pred_check
          %p162 = pneg %p100
        $region14: #{ensemble_forward.3} parent=11 // pred_check_branch
          %164 = sbr.rel (%p162) target = $region16
        $region15: #{ensemble_forward.3} parent=11 // pred_region
          _
        $region16: #{ensemble_forward.3} parent=11 // pred_fallthru
          _
        // Predicated region
        $region17: #{ensemble_forward.3} parent=11 // pred_check
          %p165 = pneg %p121
        $region18: #{ensemble_forward.3} parent=11 // pred_check_branch
          %167 = sbr.rel (%p165) target = $region20
        $region19: #{ensemble_forward.3} parent=11 // pred_region
          _
        $region20: #{ensemble_forward.3} parent=11 // pred_fallthru
          _
      $region12: #{ensemble_forward.3} parent=5 // pred_fallthru
        _
      %p168 = scmp.lt.s32.totalorder %s13, 8
      // Predicated region
      $region21: #{ensemble_forward.3} parent=5 // pred_check
        %p169 = pneg %p168
      $region22: #{ensemble_forward.3} parent=5 // pred_check_branch
        %171 = sbr.rel (%p169) target = $region24
      $region23: #{ensemble_forward.3} parent=5 // pred_region
        // Predicated region
        $region25: #{ensemble_forward.3} parent=23 // pred_check
          %p172 = pneg %p47
        $region26: #{ensemble_forward.3} parent=23 // pred_check_branch
          %174 = sbr.rel (%p172) target = $region28
        $region27: #{ensemble_forward.3} parent=23 // pred_region
          %s175 = smul.u32 16, %s21
          %p176 = scmp.lt.s32.totalorder %s20, 1
          %s177 = scalar_select %p176, %s20, 1
          %p178 = scmp.lt.s32.totalorder %s175, 63
          %s179 = scalar_select %p178, %s175, 63
          %s180 = smul.addr %s177, 64
          %s181 = sadd.s32 %s179, %s180
          %s182 = smul.addr %s181, 2
          %s183 = scalar_lea.vmem %s0, %s182
          %s184 = smul.u32 16, %s21
        $region28: #{ensemble_forward.3} parent=23 // pred_fallthru
          _
        // Predicated region
        $region29: #{ensemble_forward.3} parent=23 // pred_check
          %p185 = pneg %p73
        $region30: #{ensemble_forward.3} parent=23 // pred_check_branch
          %187 = sbr.rel (%p185) target = $region32
        $region31: #{ensemble_forward.3} parent=23 // pred_region
          %s188 = smul.u32 256, %s21
          %p189 = scmp.lt.s32.totalorder %s188, 1023
          %s190 = scalar_select %p189, %s188, 1023
          %s191 = smul.addr %s190, 8
          %s192 = scalar_lea.vmem %s1, %s191
          %s193 = smul.u32 256, %s21
        $region32: #{ensemble_forward.3} parent=23 // pred_fallthru
          _
      $region24: #{ensemble_forward.3} parent=5 // pred_fallthru
        _
      %p194 = scmp.le.s32.totalorder 1, %s13
      %p195 = scmp.lt.s32.totalorder %s13, 9
      %p196 = pnand %p194, %p195
      %p197 = pneg %p196
      // Predicated region
      $region33: #{ensemble_forward.3} parent=5 // pred_check
        _
      $region34: #{ensemble_forward.3} parent=5 // pred_check_branch
        %199 = sbr.rel (%p196) target = $region36
      $region35: #{ensemble_forward.3} parent=5 // pred_region
        %s200 = ssub.s32 %s13, 1
        %s201 = smul.u32 16, %s23
        %p202 = scmp.lt.s32.totalorder %s22, 1
        %s203 = scalar_select %p202, %s22, 1
        %p204 = scmp.lt.s32.totalorder %s201, 63
        %s205 = scalar_select %p204, %s201, 63
        %s206 = smul.addr %s203, 64
        %s207 = sadd.s32 %s205, %s206
        %s208 = smul.addr %s207, 2
        %s209 = scalar_lea.vmem %s0, %s208
        %p210 = pneg %p53
        %p211 = pneg %p50
        %s212 = smul.u32 256, %s23
        %p213 = scmp.lt.s32.totalorder %s212, 1023
        %s214 = scalar_select %p213, %s212, 1023
        %s215 = smul.addr %s214, 8
        %s216 = scalar_lea.vmem %s1, %s215
        %p217 = pneg %p79
        %p218 = pneg %p76
        %p219 = pneg %p100
        %p220 = pneg %p97
        %p221 = pneg %p121
        %p222 = pneg %p118
        %p223 = pneg %p147
        %p224 = pneg %p144
        %s225 = sand.u32 %s134, 1
        %s226 = scalar_lea.sflag [#allocation4], %s225
        %s227 = sand.u32 %s134, 1
        %s228 = scalar_lea.vmem [#allocation3], %s227
        %s229 = smul.u32 16, %s23
        %p230 = scmp.lt.s32.totalorder %s22, 1
        %s231 = scalar_select %p230, %s22, 1
        %p232 = scmp.lt.s32.totalorder %s229, 63
        %s233 = scalar_select %p232, %s229, 63
        %s234 = smul.addr %s231, 64
        %s235 = sadd.s32 %s233, %s234
        %s236 = smul.addr %s235, 2
        %s237 = scalar_lea.vmem %s0, %s236
        %s238 = smul.u32 16, %s23
        %s239 = smul.u32 256, %s23
        %p240 = scmp.lt.s32.totalorder %s239, 1023
        %s241 = scalar_select %p240, %s239, 1023
        %s242 = smul.addr %s241, 8
        %s243 = scalar_lea.vmem %s1, %s242
        %s244 = smul.u32 256, %s23
        %p245 = scmp.eq.s32.totalorder %s23, 0
        // Predicated region
        $region37: #{ensemble_forward.3} parent=35 // pred_check
          %p246 = pneg %p245
        $region38: #{ensemble_forward.3} parent=35 // pred_check_branch
          %248 = sbr.rel (%p246) target = $region40
        $region39: #{ensemble_forward.3} parent=35 // pred_region
          %249 = vst [vmem:[#allocation2] sm:$0x3] 0.0
        $region40: #{ensemble_forward.3} parent=35 // pred_fallthru
          _
        %v250 = vld [vmem:[#allocation2] sm:$0x3]
        %v251 = vld [vmem:[%s237] sm:$0xff]
        %v252 = vld [vmem:[%s237 + $0x8] sm:$0xff]
        %v253 = vld [vmem:[%s237 + $0x10] sm:$0xff]
        %v254 = vld [vmem:[%s237 + $0x18] sm:$0xff]
        %v255 = vld [vmem:[%s243] sm:$0xff]
        %v256 = vld [vmem:[%s243 + $0x8] sm:$0xff]
        %v257 = vld [vmem:[%s243 + $0x10] sm:$0xff]
        %v258 = vld [vmem:[%s243 + $0x18] sm:$0xff]
        %v259 = vld [vmem:[%s243 + $0x20] sm:$0xff]
        %v260 = vld [vmem:[%s243 + $0x28] sm:$0xff]
        %v261 = vld [vmem:[%s243 + $0x30] sm:$0xff]
        %v262 = vld [vmem:[%s243 + $0x38] sm:$0xff]
        %v263 = vld [vmem:[%s243 + $0x40] sm:$0xff]
        %v264 = vld [vmem:[%s243 + $0x48] sm:$0xff]
        %v265 = vld [vmem:[%s243 + $0x50] sm:$0xff]
        %v266 = vld [vmem:[%s243 + $0x58] sm:$0xff]
        %v267 = vld [vmem:[%s243 + $0x60] sm:$0xff]
        %v268 = vld [vmem:[%s243 + $0x68] sm:$0xff]
        %v269 = vld [vmem:[%s243 + $0x70] sm:$0xff]
        %v270 = vld [vmem:[%s243 + $0x78] sm:$0xff]
        %v271 = vld [vmem:[%s243 + $0x80] sm:$0xff]
        %v272 = vld [vmem:[%s243 + $0x88] sm:$0xff]
        %v273 = vld [vmem:[%s243 + $0x90] sm:$0xff]
        %v274 = vld [vmem:[%s243 + $0x98] sm:$0xff]
        %v275 = vld [vmem:[%s243 + $0xa0] sm:$0xff]
        %v276 = vld [vmem:[%s243 + $0xa8] sm:$0xff]
        %v277 = vld [vmem:[%s243 + $0xb0] sm:$0xff]
        %v278 = vld [vmem:[%s243 + $0xb8] sm:$0xff]
        %v279 = vld [vmem:[%s243 + $0xc0] sm:$0xff]
        %v280 = vld [vmem:[%s243 + $0xc8] sm:$0xff]
        %v281 = vld [vmem:[%s243 + $0xd0] sm:$0xff]
        %v282 = vld [vmem:[%s243 + $0xd8] sm:$0xff]
        %v283 = vld [vmem:[%s243 + $0xe0] sm:$0xff]
        %v284 = vld [vmem:[%s243 + $0xe8] sm:$0xff]
        %v285 = vld [vmem:[%s243 + $0xf0] sm:$0xff]
        %v286 = vld [vmem:[%s243 + $0xf8] sm:$0xff]
        %v287 = vld [vmem:[%s243 + $0x100] sm:$0xff]
        %v288 = vld [vmem:[%s243 + $0x108] sm:$0xff]
        %v289 = vld [vmem:[%s243 + $0x110] sm:$0xff]
        %v290 = vld [vmem:[%s243 + $0x118] sm:$0xff]
        %v291 = vld [vmem:[%s243 + $0x120] sm:$0xff]
        %v292 = vld [vmem:[%s243 + $0x128] sm:$0xff]
        %v293 = vld [vmem:[%s243 + $0x130] sm:$0xff]
        %v294 = vld [vmem:[%s243 + $0x138] sm:$0xff]
        %v295 = vld [vmem:[%s243 + $0x140] sm:$0xff]
        %v296 = vld [vmem:[%s243 + $0x148] sm:$0xff]
        %v297 = vld [vmem:[%s243 + $0x150] sm:$0xff]
        %v298 = vld [vmem:[%s243 + $0x158] sm:$0xff]
        %v299 = vld [vmem:[%s243 + $0x160] sm:$0xff]
        %v300 = vld [vmem:[%s243 + $0x168] sm:$0xff]
        %v301 = vld [vmem:[%s243 + $0x170] sm:$0xff]
        %v302 = vld [vmem:[%s243 + $0x178] sm:$0xff]
        %v303 = vld [vmem:[%s243 + $0x180] sm:$0xff]
        %v304 = vld [vmem:[%s243 + $0x188] sm:$0xff]
        %v305 = vld [vmem:[%s243 + $0x190] sm:$0xff]
        %v306 = vld [vmem:[%s243 + $0x198] sm:$0xff]
        %v307 = vld [vmem:[%s243 + $0x1a0] sm:$0xff]
        %v308 = vld [vmem:[%s243 + $0x1a8] sm:$0xff]
        %v309 = vld [vmem:[%s243 + $0x1b0] sm:$0xff]
        %v310 = vld [vmem:[%s243 + $0x1b8] sm:$0xff]
        %v311 = vld [vmem:[%s243 + $0x1c0] sm:$0xff]
        %v312 = vld [vmem:[%s243 + $0x1c8] sm:$0xff]
        %v313 = vld [vmem:[%s243 + $0x1d0] sm:$0xff]
        %v314 = vld [vmem:[%s243 + $0x1d8] sm:$0xff]
        %v315 = vld [vmem:[%s243 + $0x1e0] sm:$0xff]
        %v316 = vld [vmem:[%s243 + $0x1e8] sm:$0xff]
        %v317 = vld [vmem:[%s243 + $0x1f0] sm:$0xff]
        %v318 = vld [vmem:[%s243 + $0x1f8] sm:$0xff]
        %v319 = vld [vmem:[%s243 + $0x200] sm:$0xff]
        %v320 = vld [vmem:[%s243 + $0x208] sm:$0xff]
        %v321 = vld [vmem:[%s243 + $0x210] sm:$0xff]
        %v322 = vld [vmem:[%s243 + $0x218] sm:$0xff]
        %v323 = vld [vmem:[%s243 + $0x220] sm:$0xff]
        %v324 = vld [vmem:[%s243 + $0x228] sm:$0xff]
        %v325 = vld [vmem:[%s243 + $0x230] sm:$0xff]
        %v326 = vld [vmem:[%s243 + $0x238] sm:$0xff]
        %v327 = vld [vmem:[%s243 + $0x240] sm:$0xff]
        %v328 = vld [vmem:[%s243 + $0x248] sm:$0xff]
        %v329 = vld [vmem:[%s243 + $0x250] sm:$0xff]
        %v330 = vld [vmem:[%s243 + $0x258] sm:$0xff]
        %v331 = vld [vmem:[%s243 + $0x260] sm:$0xff]
        %v332 = vld [vmem:[%s243 + $0x268] sm:$0xff]
        %v333 = vld [vmem:[%s243 + $0x270] sm:$0xff]
        %v334 = vld [vmem:[%s243 + $0x278] sm:$0xff]
        %v335 = vld [vmem:[%s243 + $0x280] sm:$0xff]
        %v336 = vld [vmem:[%s243 + $0x288] sm:$0xff]
        %v337 = vld [vmem:[%s243 + $0x290] sm:$0xff]
        %v338 = vld [vmem:[%s243 + $0x298] sm:$0xff]
        %v339 = vld [vmem:[%s243 + $0x2a0] sm:$0xff]
        %v340 = vld [vmem:[%s243 + $0x2a8] sm:$0xff]
        %v341 = vld [vmem:[%s243 + $0x2b0] sm:$0xff]
        %v342 = vld [vmem:[%s243 + $0x2b8] sm:$0xff]
        %v343 = vld [vmem:[%s243 + $0x2c0] sm:$0xff]
        %v344 = vld [vmem:[%s243 + $0x2c8] sm:$0xff]
        %v345 = vld [vmem:[%s243 + $0x2d0] sm:$0xff]
        %v346 = vld [vmem:[%s243 + $0x2d8] sm:$0xff]
        %v347 = vld [vmem:[%s243 + $0x2e0] sm:$0xff]
        %v348 = vld [vmem:[%s243 + $0x2e8] sm:$0xff]
        %v349 = vld [vmem:[%s243 + $0x2f0] sm:$0xff]
        %v350 = vld [vmem:[%s243 + $0x2f8] sm:$0xff]
        %v351 = vld [vmem:[%s243 + $0x300] sm:$0xff]
        %v352 = vld [vmem:[%s243 + $0x308] sm:$0xff]
        %v353 = vld [vmem:[%s243 + $0x310] sm:$0xff]
        %v354 = vld [vmem:[%s243 + $0x318] sm:$0xff]
        %v355 = vld [vmem:[%s243 + $0x320] sm:$0xff]
        %v356 = vld [vmem:[%s243 + $0x328] sm:$0xff]
        %v357 = vld [vmem:[%s243 + $0x330] sm:$0xff]
        %v358 = vld [vmem:[%s243 + $0x338] sm:$0xff]
        %v359 = vld [vmem:[%s243 + $0x340] sm:$0xff]
        %v360 = vld [vmem:[%s243 + $0x348] sm:$0xff]
        %v361 = vld [vmem:[%s243 + $0x350] sm:$0xff]
        %v362 = vld [vmem:[%s243 + $0x358] sm:$0xff]
        %v363 = vld [vmem:[%s243 + $0x360] sm:$0xff]
        %v364 = vld [vmem:[%s243 + $0x368] sm:$0xff]
        %v365 = vld [vmem:[%s243 + $0x370] sm:$0xff]
        %v366 = vld [vmem:[%s243 + $0x378] sm:$0xff]
        %v367 = vld [vmem:[%s243 + $0x380] sm:$0xff]
        %v368 = vld [vmem:[%s243 + $0x388] sm:$0xff]
        %v369 = vld [vmem:[%s243 + $0x390] sm:$0xff]
        %v370 = vld [vmem:[%s243 + $0x398] sm:$0xff]
        %v371 = vld [vmem:[%s243 + $0x3a0] sm:$0xff]
        %v372 = vld [vmem:[%s243 + $0x3a8] sm:$0xff]
        %v373 = vld [vmem:[%s243 + $0x3b0] sm:$0xff]
        %v374 = vld [vmem:[%s243 + $0x3b8] sm:$0xff]
        %v375 = vld [vmem:[%s243 + $0x3c0] sm:$0xff]
        %v376 = vld [vmem:[%s243 + $0x3c8] sm:$0xff]
        %v377 = vld [vmem:[%s243 + $0x3d0] sm:$0xff]
        %v378 = vld [vmem:[%s243 + $0x3d8] sm:$0xff]
        %v379 = vld [vmem:[%s243 + $0x3e0] sm:$0xff]
        %v380 = vld [vmem:[%s243 + $0x3e8] sm:$0xff]
        %v381 = vld [vmem:[%s243 + $0x3f0] sm:$0xff]
        %v382 = vld [vmem:[%s243 + $0x3f8] sm:$0xff]
        %v383 = vld [vmem:[%s243 + $0x400] sm:$0xff]
        %v384 = vld [vmem:[%s243 + $0x408] sm:$0xff]
        %v385 = vld [vmem:[%s243 + $0x410] sm:$0xff]
        %v386 = vld [vmem:[%s243 + $0x418] sm:$0xff]
        %v387 = vld [vmem:[%s243 + $0x420] sm:$0xff]
        %v388 = vld [vmem:[%s243 + $0x428] sm:$0xff]
        %v389 = vld [vmem:[%s243 + $0x430] sm:$0xff]
        %v390 = vld [vmem:[%s243 + $0x438] sm:$0xff]
        %v391 = vld [vmem:[%s243 + $0x440] sm:$0xff]
        %v392 = vld [vmem:[%s243 + $0x448] sm:$0xff]
        %v393 = vld [vmem:[%s243 + $0x450] sm:$0xff]
        %v394 = vld [vmem:[%s243 + $0x458] sm:$0xff]
        %v395 = vld [vmem:[%s243 + $0x460] sm:$0xff]
        %v396 = vld [vmem:[%s243 + $0x468] sm:$0xff]
        %v397 = vld [vmem:[%s243 + $0x470] sm:$0xff]
        %v398 = vld [vmem:[%s243 + $0x478] sm:$0xff]
        %v399 = vld [vmem:[%s243 + $0x480] sm:$0xff]
        %v400 = vld [vmem:[%s243 + $0x488] sm:$0xff]
        %v401 = vld [vmem:[%s243 + $0x490] sm:$0xff]
        %v402 = vld [vmem:[%s243 + $0x498] sm:$0xff]
        %v403 = vld [vmem:[%s243 + $0x4a0] sm:$0xff]
        %v404 = vld [vmem:[%s243 + $0x4a8] sm:$0xff]
        %v405 = vld [vmem:[%s243 + $0x4b0] sm:$0xff]
        %v406 = vld [vmem:[%s243 + $0x4b8] sm:$0xff]
        %v407 = vld [vmem:[%s243 + $0x4c0] sm:$0xff]
        %v408 = vld [vmem:[%s243 + $0x4c8] sm:$0xff]
        %v409 = vld [vmem:[%s243 + $0x4d0] sm:$0xff]
        %v410 = vld [vmem:[%s243 + $0x4d8] sm:$0xff]
        %v411 = vld [vmem:[%s243 + $0x4e0] sm:$0xff]
        %v412 = vld [vmem:[%s243 + $0x4e8] sm:$0xff]
        %v413 = vld [vmem:[%s243 + $0x4f0] sm:$0xff]
        %v414 = vld [vmem:[%s243 + $0x4f8] sm:$0xff]
        %v415 = vld [vmem:[%s243 + $0x500] sm:$0xff]
        %v416 = vld [vmem:[%s243 + $0x508] sm:$0xff]
        %v417 = vld [vmem:[%s243 + $0x510] sm:$0xff]
        %v418 = vld [vmem:[%s243 + $0x518] sm:$0xff]
        %v419 = vld [vmem:[%s243 + $0x520] sm:$0xff]
        %v420 = vld [vmem:[%s243 + $0x528] sm:$0xff]
        %v421 = vld [vmem:[%s243 + $0x530] sm:$0xff]
        %v422 = vld [vmem:[%s243 + $0x538] sm:$0xff]
        %v423 = vld [vmem:[%s243 + $0x540] sm:$0xff]
        %v424 = vld [vmem:[%s243 + $0x548] sm:$0xff]
        %v425 = vld [vmem:[%s243 + $0x550] sm:$0xff]
        %v426 = vld [vmem:[%s243 + $0x558] sm:$0xff]
        %v427 = vld [vmem:[%s243 + $0x560] sm:$0xff]
        %v428 = vld [vmem:[%s243 + $0x568] sm:$0xff]
        %v429 = vld [vmem:[%s243 + $0x570] sm:$0xff]
        %v430 = vld [vmem:[%s243 + $0x578] sm:$0xff]
        %v431 = vld [vmem:[%s243 + $0x580] sm:$0xff]
        %v432 = vld [vmem:[%s243 + $0x588] sm:$0xff]
        %v433 = vld [vmem:[%s243 + $0x590] sm:$0xff]
        %v434 = vld [vmem:[%s243 + $0x598] sm:$0xff]
        %v435 = vld [vmem:[%s243 + $0x5a0] sm:$0xff]
        %v436 = vld [vmem:[%s243 + $0x5a8] sm:$0xff]
        %v437 = vld [vmem:[%s243 + $0x5b0] sm:$0xff]
        %v438 = vld [vmem:[%s243 + $0x5b8] sm:$0xff]
        %v439 = vld [vmem:[%s243 + $0x5c0] sm:$0xff]
        %v440 = vld [vmem:[%s243 + $0x5c8] sm:$0xff]
        %v441 = vld [vmem:[%s243 + $0x5d0] sm:$0xff]
        %v442 = vld [vmem:[%s243 + $0x5d8] sm:$0xff]
        %v443 = vld [vmem:[%s243 + $0x5e0] sm:$0xff]
        %v444 = vld [vmem:[%s243 + $0x5e8] sm:$0xff]
        %v445 = vld [vmem:[%s243 + $0x5f0] sm:$0xff]
        %v446 = vld [vmem:[%s243 + $0x5f8] sm:$0xff]
        %v447 = vld [vmem:[%s243 + $0x600] sm:$0xff]
        %v448 = vld [vmem:[%s243 + $0x608] sm:$0xff]
        %v449 = vld [vmem:[%s243 + $0x610] sm:$0xff]
        %v450 = vld [vmem:[%s243 + $0x618] sm:$0xff]
        %v451 = vld [vmem:[%s243 + $0x620] sm:$0xff]
        %v452 = vld [vmem:[%s243 + $0x628] sm:$0xff]
        %v453 = vld [vmem:[%s243 + $0x630] sm:$0xff]
        %v454 = vld [vmem:[%s243 + $0x638] sm:$0xff]
        %v455 = vld [vmem:[%s243 + $0x640] sm:$0xff]
        %v456 = vld [vmem:[%s243 + $0x648] sm:$0xff]
        %v457 = vld [vmem:[%s243 + $0x650] sm:$0xff]
        %v458 = vld [vmem:[%s243 + $0x658] sm:$0xff]
        %v459 = vld [vmem:[%s243 + $0x660] sm:$0xff]
        %v460 = vld [vmem:[%s243 + $0x668] sm:$0xff]
        %v461 = vld [vmem:[%s243 + $0x670] sm:$0xff]
        %v462 = vld [vmem:[%s243 + $0x678] sm:$0xff]
        %v463 = vld [vmem:[%s243 + $0x680] sm:$0xff]
        %v464 = vld [vmem:[%s243 + $0x688] sm:$0xff]
        %v465 = vld [vmem:[%s243 + $0x690] sm:$0xff]
        %v466 = vld [vmem:[%s243 + $0x698] sm:$0xff]
        %v467 = vld [vmem:[%s243 + $0x6a0] sm:$0xff]
        %v468 = vld [vmem:[%s243 + $0x6a8] sm:$0xff]
        %v469 = vld [vmem:[%s243 + $0x6b0] sm:$0xff]
        %v470 = vld [vmem:[%s243 + $0x6b8] sm:$0xff]
        %v471 = vld [vmem:[%s243 + $0x6c0] sm:$0xff]
        %v472 = vld [vmem:[%s243 + $0x6c8] sm:$0xff]
        %v473 = vld [vmem:[%s243 + $0x6d0] sm:$0xff]
        %v474 = vld [vmem:[%s243 + $0x6d8] sm:$0xff]
        %v475 = vld [vmem:[%s243 + $0x6e0] sm:$0xff]
        %v476 = vld [vmem:[%s243 + $0x6e8] sm:$0xff]
        %v477 = vld [vmem:[%s243 + $0x6f0] sm:$0xff]
        %v478 = vld [vmem:[%s243 + $0x6f8] sm:$0xff]
        %v479 = vld [vmem:[%s243 + $0x700] sm:$0xff]
        %v480 = vld [vmem:[%s243 + $0x708] sm:$0xff]
        %v481 = vld [vmem:[%s243 + $0x710] sm:$0xff]
        %v482 = vld [vmem:[%s243 + $0x718] sm:$0xff]
        %v483 = vld [vmem:[%s243 + $0x720] sm:$0xff]
        %v484 = vld [vmem:[%s243 + $0x728] sm:$0xff]
        %v485 = vld [vmem:[%s243 + $0x730] sm:$0xff]
        %v486 = vld [vmem:[%s243 + $0x738] sm:$0xff]
        %v487 = vld [vmem:[%s243 + $0x740] sm:$0xff]
        %v488 = vld [vmem:[%s243 + $0x748] sm:$0xff]
        %v489 = vld [vmem:[%s243 + $0x750] sm:$0xff]
        %v490 = vld [vmem:[%s243 + $0x758] sm:$0xff]
        %v491 = vld [vmem:[%s243 + $0x760] sm:$0xff]
        %v492 = vld [vmem:[%s243 + $0x768] sm:$0xff]
        %v493 = vld [vmem:[%s243 + $0x770] sm:$0xff]
        %v494 = vld [vmem:[%s243 + $0x778] sm:$0xff]
        %v495 = vld [vmem:[%s243 + $0x780] sm:$0xff]
        %v496 = vld [vmem:[%s243 + $0x788] sm:$0xff]
        %v497 = vld [vmem:[%s243 + $0x790] sm:$0xff]
        %v498 = vld [vmem:[%s243 + $0x798] sm:$0xff]
        %v499 = vld [vmem:[%s243 + $0x7a0] sm:$0xff]
        %v500 = vld [vmem:[%s243 + $0x7a8] sm:$0xff]
        %v501 = vld [vmem:[%s243 + $0x7b0] sm:$0xff]
        %v502 = vld [vmem:[%s243 + $0x7b8] sm:$0xff]
        %v503 = vld [vmem:[%s243 + $0x7c0] sm:$0xff]
        %v504 = vld [vmem:[%s243 + $0x7c8] sm:$0xff]
        %v505 = vld [vmem:[%s243 + $0x7d0] sm:$0xff]
        %v506 = vld [vmem:[%s243 + $0x7d8] sm:$0xff]
        %v507 = vld [vmem:[%s243 + $0x7e0] sm:$0xff]
        %v508 = vld [vmem:[%s243 + $0x7e8] sm:$0xff]
        %v509 = vld [vmem:[%s243 + $0x7f0] sm:$0xff]
        %v510 = vld [vmem:[%s243 + $0x7f8] sm:$0xff]
        %515 = vst [vmem:[#allocation1] ss:$4 sm:$0xff] %v251
        %s516 = scalar_lea.vmem [#allocation1], 32
        %517 = vst [vmem:[%s516] ss:$4 sm:$0xff] %v252
        %v518 = vld.sshfl [vmem:[#allocation1] sm:$0xff pattern:$0x73625140]
        %v519 = vld.sshfl [vmem:[#allocation1 + $0x8] sm:$0xff pattern:$0x73625140]
        %v520 = vld.sshfl [vmem:[#allocation1 + $0x10] sm:$0xff pattern:$0x73625140]
        %v521 = vld.sshfl [vmem:[#allocation1 + $0x18] sm:$0xff pattern:$0x73625140]
        %v522 = vld.sshfl [vmem:[#allocation1 + $0x20] sm:$0xff pattern:$0x73625140]
        %v523 = vld.sshfl [vmem:[#allocation1 + $0x28] sm:$0xff pattern:$0x73625140]
        %v524 = vld.sshfl [vmem:[#allocation1 + $0x30] sm:$0xff pattern:$0x73625140]
        %v525 = vld.sshfl [vmem:[#allocation1 + $0x38] sm:$0xff pattern:$0x73625140]
        %526 = vst [vmem:[#allocation1] ss:$4 sm:$0xff] %v253
        %527 = vst [vmem:[%s516] ss:$4 sm:$0xff] %v254
        %v528 = vld.sshfl [vmem:[#allocation1] sm:$0xff pattern:$0x73625140]
        %v529 = vld.sshfl [vmem:[#allocation1 + $0x8] sm:$0xff pattern:$0x73625140]
        %v530 = vld.sshfl [vmem:[#allocation1 + $0x10] sm:$0xff pattern:$0x73625140]
        %v531 = vld.sshfl [vmem:[#allocation1 + $0x18] sm:$0xff pattern:$0x73625140]
        %v532 = vld.sshfl [vmem:[#allocation1 + $0x20] sm:$0xff pattern:$0x73625140]
        %v533 = vld.sshfl [vmem:[#allocation1 + $0x28] sm:$0xff pattern:$0x73625140]
        %v534 = vld.sshfl [vmem:[#allocation1 + $0x30] sm:$0xff pattern:$0x73625140]
        %v535 = vld.sshfl [vmem:[#allocation1 + $0x38] sm:$0xff pattern:$0x73625140]
        %552 = vmatpush.msra.mxu0 %v270
        %553 = vmatpush.msra.mxu0 %v269
        %554 = vmatpush.msra.mxu0 %v268
        %555 = vmatpush.msra.mxu0 %v267
        %556 = vmatpush.msra.mxu0 %v266
        %557 = vmatpush.msra.mxu0 %v265
        %558 = vmatpush.msra.mxu0 %v264
        %559 = vmatpush.msra.mxu0 %v263
        %560 = vmatpush.msra.mxu0 %v262
        %561 = vmatpush.msra.mxu0 %v261
        %562 = vmatpush.msra.mxu0 %v260
        %563 = vmatpush.msra.mxu0 %v259
        %564 = vmatpush.msra.mxu0 %v258
        %565 = vmatpush.msra.mxu0 %v257
        %566 = vmatpush.msra.mxu0 %v256
        %567 = vmatpush.msra.mxu0 %v255
        %568 = vmatmul.f32.gmra.mxu0 %v518
        %v569 = vpop.f32.mrf.mxu0
        %v570 = vadd.f32 0.0, %v569
        %571 = vdwg.mxu0
        %572 = vmatpush.msra.mxu0 %v286
        %573 = vmatpush.msra.mxu0 %v285
        %574 = vmatpush.msra.mxu0 %v284
        %575 = vmatpush.msra.mxu0 %v283
        %576 = vmatpush.msra.mxu0 %v282
        %577 = vmatpush.msra.mxu0 %v281
        %578 = vmatpush.msra.mxu0 %v280
        %579 = vmatpush.msra.mxu0 %v279
        %580 = vmatpush.msra.mxu0 %v278
        %581 = vmatpush.msra.mxu0 %v277
        %582 = vmatpush.msra.mxu0 %v276
        %583 = vmatpush.msra.mxu0 %v275
        %584 = vmatpush.msra.mxu0 %v274
        %585 = vmatpush.msra.mxu0 %v273
        %586 = vmatpush.msra.mxu0 %v272
        %587 = vmatpush.msra.mxu0 %v271
        %588 = vmatmul.f32.gmra.mxu0 %v519
        %v589 = vpop.f32.mrf.mxu0
        %v590 = vadd.f32 %v570, %v589
        %591 = vdwg.mxu0
        %592 = vmatpush.msra.mxu0 %v302
        %593 = vmatpush.msra.mxu0 %v301
        %594 = vmatpush.msra.mxu0 %v300
        %595 = vmatpush.msra.mxu0 %v299
        %596 = vmatpush.msra.mxu0 %v298
        %597 = vmatpush.msra.mxu0 %v297
        %598 = vmatpush.msra.mxu0 %v296
        %599 = vmatpush.msra.mxu0 %v295
        %600 = vmatpush.msra.mxu0 %v294
        %601 = vmatpush.msra.mxu0 %v293
        %602 = vmatpush.msra.mxu0 %v292
        %603 = vmatpush.msra.mxu0 %v291
        %604 = vmatpush.msra.mxu0 %v290
        %605 = vmatpush.msra.mxu0 %v289
        %606 = vmatpush.msra.mxu0 %v288
        %607 = vmatpush.msra.mxu0 %v287
        %608 = vmatmul.f32.gmra.mxu0 %v520
        %v609 = vpop.f32.mrf.mxu0
        %v610 = vadd.f32 %v590, %v609
        %611 = vdwg.mxu0
        %612 = vmatpush.msra.mxu0 %v318
        %613 = vmatpush.msra.mxu0 %v317
        %614 = vmatpush.msra.mxu0 %v316
        %615 = vmatpush.msra.mxu0 %v315
        %616 = vmatpush.msra.mxu0 %v314
        %617 = vmatpush.msra.mxu0 %v313
        %618 = vmatpush.msra.mxu0 %v312
        %619 = vmatpush.msra.mxu0 %v311
        %620 = vmatpush.msra.mxu0 %v310
        %621 = vmatpush.msra.mxu0 %v309
        %622 = vmatpush.msra.mxu0 %v308
        %623 = vmatpush.msra.mxu0 %v307
        %624 = vmatpush.msra.mxu0 %v306
        %625 = vmatpush.msra.mxu0 %v305
        %626 = vmatpush.msra.mxu0 %v304
        %627 = vmatpush.msra.mxu0 %v303
        %628 = vmatmul.f32.gmra.mxu0 %v521
        %v629 = vpop.f32.mrf.mxu0
        %v630 = vadd.f32 %v610, %v629
        %631 = vdwg.mxu0
        %632 = vmatpush.msra.mxu0 %v334
        %633 = vmatpush.msra.mxu0 %v333
        %634 = vmatpush.msra.mxu0 %v332
        %635 = vmatpush.msra.mxu0 %v331
        %636 = vmatpush.msra.mxu0 %v330
        %637 = vmatpush.msra.mxu0 %v329
        %638 = vmatpush.msra.mxu0 %v328
        %639 = vmatpush.msra.mxu0 %v327
        %640 = vmatpush.msra.mxu0 %v326
        %641 = vmatpush.msra.mxu0 %v325
        %642 = vmatpush.msra.mxu0 %v324
        %643 = vmatpush.msra.mxu0 %v323
        %644 = vmatpush.msra.mxu0 %v322
        %645 = vmatpush.msra.mxu0 %v321
        %646 = vmatpush.msra.mxu0 %v320
        %647 = vmatpush.msra.mxu0 %v319
        %648 = vmatmul.f32.gmra.mxu0 %v522
        %v649 = vpop.f32.mrf.mxu0
        %v650 = vadd.f32 %v630, %v649
        %651 = vdwg.mxu0
        %652 = vmatpush.msra.mxu0 %v350
        %653 = vmatpush.msra.mxu0 %v349
        %654 = vmatpush.msra.mxu0 %v348
        %655 = vmatpush.msra.mxu0 %v347
        %656 = vmatpush.msra.mxu0 %v346
        %657 = vmatpush.msra.mxu0 %v345
        %658 = vmatpush.msra.mxu0 %v344
        %659 = vmatpush.msra.mxu0 %v343
        %660 = vmatpush.msra.mxu0 %v342
        %661 = vmatpush.msra.mxu0 %v341
        %662 = vmatpush.msra.mxu0 %v340
        %663 = vmatpush.msra.mxu0 %v339
        %664 = vmatpush.msra.mxu0 %v338
        %665 = vmatpush.msra.mxu0 %v337
        %666 = vmatpush.msra.mxu0 %v336
        %667 = vmatpush.msra.mxu0 %v335
        %668 = vmatmul.f32.gmra.mxu0 %v523
        %v669 = vpop.f32.mrf.mxu0
        %v670 = vadd.f32 %v650, %v669
        %671 = vdwg.mxu0
        %672 = vmatpush.msra.mxu0 %v366
        %673 = vmatpush.msra.mxu0 %v365
        %674 = vmatpush.msra.mxu0 %v364
        %675 = vmatpush.msra.mxu0 %v363
        %676 = vmatpush.msra.mxu0 %v362
        %677 = vmatpush.msra.mxu0 %v361
        %678 = vmatpush.msra.mxu0 %v360
        %679 = vmatpush.msra.mxu0 %v359
        %680 = vmatpush.msra.mxu0 %v358
        %681 = vmatpush.msra.mxu0 %v357
        %682 = vmatpush.msra.mxu0 %v356
        %683 = vmatpush.msra.mxu0 %v355
        %684 = vmatpush.msra.mxu0 %v354
        %685 = vmatpush.msra.mxu0 %v353
        %686 = vmatpush.msra.mxu0 %v352
        %687 = vmatpush.msra.mxu0 %v351
        %688 = vmatmul.f32.gmra.mxu0 %v524
        %v689 = vpop.f32.mrf.mxu0
        %v690 = vadd.f32 %v670, %v689
        %691 = vdwg.mxu0
        %692 = vmatpush.msra.mxu0 %v382
        %693 = vmatpush.msra.mxu0 %v381
        %694 = vmatpush.msra.mxu0 %v380
        %695 = vmatpush.msra.mxu0 %v379
        %696 = vmatpush.msra.mxu0 %v378
        %697 = vmatpush.msra.mxu0 %v377
        %698 = vmatpush.msra.mxu0 %v376
        %699 = vmatpush.msra.mxu0 %v375
        %700 = vmatpush.msra.mxu0 %v374
        %701 = vmatpush.msra.mxu0 %v373
        %702 = vmatpush.msra.mxu0 %v372
        %703 = vmatpush.msra.mxu0 %v371
        %704 = vmatpush.msra.mxu0 %v370
        %705 = vmatpush.msra.mxu0 %v369
        %706 = vmatpush.msra.mxu0 %v368
        %707 = vmatpush.msra.mxu0 %v367
        %708 = vmatmul.f32.gmra.mxu0 %v525
        %v709 = vpop.f32.mrf.mxu0
        %v710 = vadd.f32 %v690, %v709
        %711 = vdwg.mxu0
        %712 = vmatpush.msra.mxu0 %v398
        %713 = vmatpush.msra.mxu0 %v397
        %714 = vmatpush.msra.mxu0 %v396
        %715 = vmatpush.msra.mxu0 %v395
        %716 = vmatpush.msra.mxu0 %v394
        %717 = vmatpush.msra.mxu0 %v393
        %718 = vmatpush.msra.mxu0 %v392
        %719 = vmatpush.msra.mxu0 %v391
        %720 = vmatpush.msra.mxu0 %v390
        %721 = vmatpush.msra.mxu0 %v389
        %722 = vmatpush.msra.mxu0 %v388
        %723 = vmatpush.msra.mxu0 %v387
        %724 = vmatpush.msra.mxu0 %v386
        %725 = vmatpush.msra.mxu0 %v385
        %726 = vmatpush.msra.mxu0 %v384
        %727 = vmatpush.msra.mxu0 %v383
        %728 = vmatmul.f32.gmra.mxu0 %v528
        %v729 = vpop.f32.mrf.mxu0
        %v730 = vadd.f32 %v710, %v729
        %731 = vdwg.mxu0
        %732 = vmatpush.msra.mxu0 %v414
        %733 = vmatpush.msra.mxu0 %v413
        %734 = vmatpush.msra.mxu0 %v412
        %735 = vmatpush.msra.mxu0 %v411
        %736 = vmatpush.msra.mxu0 %v410
        %737 = vmatpush.msra.mxu0 %v409
        %738 = vmatpush.msra.mxu0 %v408
        %739 = vmatpush.msra.mxu0 %v407
        %740 = vmatpush.msra.mxu0 %v406
        %741 = vmatpush.msra.mxu0 %v405
        %742 = vmatpush.msra.mxu0 %v404
        %743 = vmatpush.msra.mxu0 %v403
        %744 = vmatpush.msra.mxu0 %v402
        %745 = vmatpush.msra.mxu0 %v401
        %746 = vmatpush.msra.mxu0 %v400
        %747 = vmatpush.msra.mxu0 %v399
        %748 = vmatmul.f32.gmra.mxu0 %v529
        %v749 = vpop.f32.mrf.mxu0
        %v750 = vadd.f32 %v730, %v749
        %751 = vdwg.mxu0
        %752 = vmatpush.msra.mxu0 %v430
        %753 = vmatpush.msra.mxu0 %v429
        %754 = vmatpush.msra.mxu0 %v428
        %755 = vmatpush.msra.mxu0 %v427
        %756 = vmatpush.msra.mxu0 %v426
        %757 = vmatpush.msra.mxu0 %v425
        %758 = vmatpush.msra.mxu0 %v424
        %759 = vmatpush.msra.mxu0 %v423
        %760 = vmatpush.msra.mxu0 %v422
        %761 = vmatpush.msra.mxu0 %v421
        %762 = vmatpush.msra.mxu0 %v420
        %763 = vmatpush.msra.mxu0 %v419
        %764 = vmatpush.msra.mxu0 %v418
        %765 = vmatpush.msra.mxu0 %v417
        %766 = vmatpush.msra.mxu0 %v416
        %767 = vmatpush.msra.mxu0 %v415
        %768 = vmatmul.f32.gmra.mxu0 %v530
        %v769 = vpop.f32.mrf.mxu0
        %v770 = vadd.f32 %v750, %v769
        %771 = vdwg.mxu0
        %772 = vmatpush.msra.mxu0 %v446
        %773 = vmatpush.msra.mxu0 %v445
        %774 = vmatpush.msra.mxu0 %v444
        %775 = vmatpush.msra.mxu0 %v443
        %776 = vmatpush.msra.mxu0 %v442
        %777 = vmatpush.msra.mxu0 %v441
        %778 = vmatpush.msra.mxu0 %v440
        %779 = vmatpush.msra.mxu0 %v439
        %780 = vmatpush.msra.mxu0 %v438
        %781 = vmatpush.msra.mxu0 %v437
        %782 = vmatpush.msra.mxu0 %v436
        %783 = vmatpush.msra.mxu0 %v435
        %784 = vmatpush.msra.mxu0 %v434
        %785 = vmatpush.msra.mxu0 %v433
        %786 = vmatpush.msra.mxu0 %v432
        %787 = vmatpush.msra.mxu0 %v431
        %788 = vmatmul.f32.gmra.mxu0 %v531
        %v789 = vpop.f32.mrf.mxu0
        %v790 = vadd.f32 %v770, %v789
        %791 = vdwg.mxu0
        %792 = vmatpush.msra.mxu0 %v462
        %793 = vmatpush.msra.mxu0 %v461
        %794 = vmatpush.msra.mxu0 %v460
        %795 = vmatpush.msra.mxu0 %v459
        %796 = vmatpush.msra.mxu0 %v458
        %797 = vmatpush.msra.mxu0 %v457
        %798 = vmatpush.msra.mxu0 %v456
        %799 = vmatpush.msra.mxu0 %v455
        %800 = vmatpush.msra.mxu0 %v454
        %801 = vmatpush.msra.mxu0 %v453
        %802 = vmatpush.msra.mxu0 %v452
        %803 = vmatpush.msra.mxu0 %v451
        %804 = vmatpush.msra.mxu0 %v450
        %805 = vmatpush.msra.mxu0 %v449
        %806 = vmatpush.msra.mxu0 %v448
        %807 = vmatpush.msra.mxu0 %v447
        %808 = vmatmul.f32.gmra.mxu0 %v532
        %v809 = vpop.f32.mrf.mxu0
        %v810 = vadd.f32 %v790, %v809
        %811 = vdwg.mxu0
        %812 = vmatpush.msra.mxu0 %v478
        %813 = vmatpush.msra.mxu0 %v477
        %814 = vmatpush.msra.mxu0 %v476
        %815 = vmatpush.msra.mxu0 %v475
        %816 = vmatpush.msra.mxu0 %v474
        %817 = vmatpush.msra.mxu0 %v473
        %818 = vmatpush.msra.mxu0 %v472
        %819 = vmatpush.msra.mxu0 %v471
        %820 = vmatpush.msra.mxu0 %v470
        %821 = vmatpush.msra.mxu0 %v469
        %822 = vmatpush.msra.mxu0 %v468
        %823 = vmatpush.msra.mxu0 %v467
        %824 = vmatpush.msra.mxu0 %v466
        %825 = vmatpush.msra.mxu0 %v465
        %826 = vmatpush.msra.mxu0 %v464
        %827 = vmatpush.msra.mxu0 %v463
        %828 = vmatmul.f32.gmra.mxu0 %v533
        %v829 = vpop.f32.mrf.mxu0
        %v830 = vadd.f32 %v810, %v829
        %831 = vdwg.mxu0
        %832 = vmatpush.msra.mxu0 %v494
        %833 = vmatpush.msra.mxu0 %v493
        %834 = vmatpush.msra.mxu0 %v492
        %835 = vmatpush.msra.mxu0 %v491
        %836 = vmatpush.msra.mxu0 %v490
        %837 = vmatpush.msra.mxu0 %v489
        %838 = vmatpush.msra.mxu0 %v488
        %839 = vmatpush.msra.mxu0 %v487
        %840 = vmatpush.msra.mxu0 %v486
        %841 = vmatpush.msra.mxu0 %v485
        %842 = vmatpush.msra.mxu0 %v484
        %843 = vmatpush.msra.mxu0 %v483
        %844 = vmatpush.msra.mxu0 %v482
        %845 = vmatpush.msra.mxu0 %v481
        %846 = vmatpush.msra.mxu0 %v480
        %847 = vmatpush.msra.mxu0 %v479
        %848 = vmatmul.f32.gmra.mxu0 %v534
        %v849 = vpop.f32.mrf.mxu0
        %v850 = vadd.f32 %v830, %v849
        %851 = vdwg.mxu0
        %852 = vmatpush.msra.mxu0 %v510
        %853 = vmatpush.msra.mxu0 %v509
        %854 = vmatpush.msra.mxu0 %v508
        %855 = vmatpush.msra.mxu0 %v507
        %856 = vmatpush.msra.mxu0 %v506
        %857 = vmatpush.msra.mxu0 %v505
        %858 = vmatpush.msra.mxu0 %v504
        %859 = vmatpush.msra.mxu0 %v503
        %860 = vmatpush.msra.mxu0 %v502
        %861 = vmatpush.msra.mxu0 %v501
        %862 = vmatpush.msra.mxu0 %v500
        %863 = vmatpush.msra.mxu0 %v499
        %864 = vmatpush.msra.mxu0 %v498
        %865 = vmatpush.msra.mxu0 %v497
        %866 = vmatpush.msra.mxu0 %v496
        %867 = vmatpush.msra.mxu0 %v495
        %868 = vmatmul.f32.gmra.mxu0 %v535
        %v869 = vpop.f32.mrf.mxu0
        %v870 = vadd.f32 %v850, %v869
        %871 = vdwg.mxu0
        %v872 = vadd.f32 %v250, %v870
        %873 = vst [vmem:[#allocation2] sm:$0x3] %v872
        %p874 = scmp.eq.s32.totalorder %s23, 3
        // Predicated region
        $region41: #{ensemble_forward.3} parent=35 // pred_check
          %p875 = pneg %p874
        $region42: #{ensemble_forward.3} parent=35 // pred_check_branch
          %877 = sbr.rel (%p875) target = $region44
        $region43: #{ensemble_forward.3} parent=35 // pred_region
          %v878 = vld [vmem:[#allocation2] sm:$0x3]
          %v879 = vld [vmem:[%s2] sm:$0xff]
          %v880 = vld [vmem:[%s2 + $0x8] sm:$0xff]
          %v881 = vld [vmem:[%s2 + $0x10] sm:$0xff]
          %v882 = vld [vmem:[%s2 + $0x18] sm:$0xff]
          %v883 = vld [vmem:[%s2 + $0x20] sm:$0xff]
          %v884 = vld [vmem:[%s2 + $0x28] sm:$0xff]
          %v885 = vld [vmem:[%s2 + $0x30] sm:$0xff]
          %v886 = vld [vmem:[%s2 + $0x38] sm:$0xff]
          %v887 = vld [vmem:[%s2 + $0x40] sm:$0xff]
          %v888 = vld [vmem:[%s2 + $0x48] sm:$0xff]
          %v889 = vld [vmem:[%s2 + $0x50] sm:$0xff]
          %v890 = vld [vmem:[%s2 + $0x58] sm:$0xff]
          %v891 = vld [vmem:[%s2 + $0x60] sm:$0xff]
          %v892 = vld [vmem:[%s2 + $0x68] sm:$0xff]
          %v893 = vld [vmem:[%s2 + $0x70] sm:$0xff]
          %v894 = vld [vmem:[%s2 + $0x78] sm:$0xff]
          %895 = vmatpush.msra.mxu0 %v894
          %896 = vmatpush.msra.mxu0 %v893
          %897 = vmatpush.msra.mxu0 %v892
          %898 = vmatpush.msra.mxu0 %v891
          %899 = vmatpush.msra.mxu0 %v890
          %900 = vmatpush.msra.mxu0 %v889
          %901 = vmatpush.msra.mxu0 %v888
          %902 = vmatpush.msra.mxu0 %v887
          %903 = vmatpush.msra.mxu0 %v886
          %904 = vmatpush.msra.mxu0 %v885
          %905 = vmatpush.msra.mxu0 %v884
          %906 = vmatpush.msra.mxu0 %v883
          %907 = vmatpush.msra.mxu0 %v882
          %908 = vmatpush.msra.mxu0 %v881
          %909 = vmatpush.msra.mxu0 %v880
          %910 = vmatpush.msra.mxu0 %v879
          %911 = vmatmul.f32.gmra.mxu0 %v878
          %v912 = vpop.f32.mrf.mxu0
          %v913 = vadd.f32 0.0, %v912
          %914 = vdwg.mxu0
          %v915 = vmax.f32 %v913, 0.0
          %vm916 = vcmask 1041408
          %v917 = vsel %vm916, %v915, 0.0
          %v918 = vrot.slane %v917, 4
          %v919 = vadd.f32 %v917, %v918
          %v920 = vrot.slane %v919, 2
          %v921 = vadd.f32 %v919, %v920
          %v922 = vrot.slane %v921, 1
          %v923 = vadd.f32 %v921, %v922
          %v924 = vld [vmem:[%s3] sm:$0xff]
          %v925 = vld [vmem:[%s3 + $0x8] sm:$0xff]
          %v926 = vld [vmem:[%s3 + $0x10] sm:$0xff]
          %v927 = vld [vmem:[%s3 + $0x18] sm:$0xff]
          %v928 = vld [vmem:[%s3 + $0x20] sm:$0xff]
          %v929 = vld [vmem:[%s3 + $0x28] sm:$0xff]
          %v930 = vld [vmem:[%s3 + $0x30] sm:$0xff]
          %v931 = vld [vmem:[%s3 + $0x38] sm:$0xff]
          %v932 = vld [vmem:[%s3 + $0x40] sm:$0xff]
          %v933 = vld [vmem:[%s3 + $0x48] sm:$0xff]
          %v934 = vld [vmem:[%s3 + $0x50] sm:$0xff]
          %v935 = vld [vmem:[%s3 + $0x58] sm:$0xff]
          %v936 = vld [vmem:[%s3 + $0x60] sm:$0xff]
          %v937 = vld [vmem:[%s3 + $0x68] sm:$0xff]
          %v938 = vld [vmem:[%s3 + $0x70] sm:$0xff]
          %v939 = vld [vmem:[%s3 + $0x78] sm:$0xff]
          %940 = vmatpush.msra.mxu0 %v939
          %941 = vmatpush.msra.mxu0 %v938
          %942 = vmatpush.msra.mxu0 %v937
          %943 = vmatpush.msra.mxu0 %v936
          %944 = vmatpush.msra.mxu0 %v935
          %945 = vmatpush.msra.mxu0 %v934
          %946 = vmatpush.msra.mxu0 %v933
          %947 = vmatpush.msra.mxu0 %v932
          %948 = vmatpush.msra.mxu0 %v931
          %949 = vmatpush.msra.mxu0 %v930
          %950 = vmatpush.msra.mxu0 %v929
          %951 = vmatpush.msra.mxu0 %v928
          %952 = vmatpush.msra.mxu0 %v927
          %953 = vmatpush.msra.mxu0 %v926
          %954 = vmatpush.msra.mxu0 %v925
          %955 = vmatpush.msra.mxu0 %v924
          %956 = vmatmul.f32.gmra.mxu0 %v923
          %v957 = vpop.f32.mrf.mxu0
          %v958 = vadd.f32 0.0, %v957
          %959 = vdwg.mxu0
          %v960 = vmul.f32 %v958, %v958
          %vm961 = vcmask 1040384
          %v962 = vsel %vm961, %v960, 0.0
          %963 = vadd.xlane.f32.xlu0 %v962
          %v964 = vpop.xlane.xlu0 %963
          %v965 = vmax.f32 %v964, 1e-24
          %v966 = vrsqrt.pop %v965
          %v967 = vmul.f32 %v966, %v965
          %v968 = vmul.f32 %v967, %v966
          %v969 = vmul.f32 0.5, %v968
          %v970 = vsub.f32 1.5, %v969
          %v971 = vmul.f32 %v966, %v970
          %vm972 = vweird.f32 %v965
          %vm973 = vweird.f32 %v966
          %vm974 = vmor %vm972, %vm973
          %v975 = vsel %vm974, %v966, %v971
          %v976 = vmul.f32 %v958, %v975
          %977 = vst [vmem:[%s228] sm:$0x1] %v976
        $region44: #{ensemble_forward.3} parent=35 // pred_fallthru
          _
        %s978 = sand.u32 %s134, 1
        %s979 = scalar_lea.sflag [#allocation4], %s978
        %s980 = sand.u32 %s134, 1
        %s981 = scalar_lea.vmem [#allocation3], %s980
        // Predicated region
        $region45: #{ensemble_forward.3} parent=35 // pred_check
          %p982 = pneg %p144
        $region46: #{ensemble_forward.3} parent=35 // pred_check_branch
          %984 = sbr.rel (%p982) target = $region48
        $region47: #{ensemble_forward.3} parent=35 // pred_region
          %986 = vsyncadd %s979, 0
          %s987 = scalar_lea.hbm %s4, %s22
          %s989 = sshll.u32 %s981, 4
          %s990 = int_to_ptr.vmem [resolvable:$true] %s989
          %s991 = sshll.u32 %s987, 4
          %s992 = int_to_ptr.hbm [resolvable:$true] %s991
          %994 = dma.vmem_to_hbm [thread:$0]  %s990, 16, %s992, %s979
        $region48: #{ensemble_forward.3} parent=35 // pred_fallthru
          _
      $region36: #{ensemble_forward.3} parent=5 // pred_fallthru
        _
      %p995 = scmp.le.s32.totalorder 2, %s13
      // Predicated region
      $region49: #{ensemble_forward.3} parent=5 // pred_check
        %p996 = pneg %p995
      $region50: #{ensemble_forward.3} parent=5 // pred_check_branch
        %998 = sbr.rel (%p996) target = $region52
      $region51: #{ensemble_forward.3} parent=5 // pred_region
        %s999 = ssub.s32 %s13, 2
        // Predicated region
        $region53: #{ensemble_forward.3} parent=51 // pred_check
          %p1000 = pneg %p150
        $region54: #{ensemble_forward.3} parent=51 // pred_check_branch
          %1002 = sbr.rel (%p1000) target = $region56
        $region55: #{ensemble_forward.3} parent=51 // pred_region
          %s1003 = sand.u32 %s135, 1
          %s1004 = scalar_lea.sflag [#allocation4], %s1003
          %s1005 = sand.u32 %s135, 1
          %s1006 = scalar_lea.vmem [#allocation3], %s1005
          %1008 = dma.done %s1004, 16
        $region56: #{ensemble_forward.3} parent=51 // pred_fallthru
          _
      $region52: #{ensemble_forward.3} parent=5 // pred_fallthru
        _
    $region6: #{ensemble_forward.3} parent=1 // loop_footer
      %s17 = sadd.s32 1, %s13
    $region7: #{ensemble_forward.3} parent=1 // loop_footer_branch
      %12 = sbr.rel target = $region3
    $region8: #{ensemble_forward.3} parent=1 // loop_exit
      _
    %1009 = vsyncpa [#allocation4], 1
    %s1010 = scalar_lea.sflag [#allocation4], 1
    %1011 = vsyncpa %s1010, 1

// kernel: ensemble_forward.2
$region0: #{ensemble_forward.2}
  #allocation0 [shape = 'u32[]', space=smem, size = 0x4, offset = 0x4, fixed_abs, tag = 'smem constant byte address 0x4 - core index']
  #allocation1 [shape = 'u32[72,128]{1,0:T(1,128)}', space=vmem, size = 0x9000, scoped, tag = 'internal scratch']
  %s0 = inlined_call_operand.vmem [shape: f32[2,512,128], index: 0, kind: input, shape index: {}]
  %s1 = inlined_call_operand.vmem [shape: f32[2,128,8], index: 1, kind: input, shape index: {}]
  %s2 = inlined_call_operand.vmem [shape: f32[3,128,128], index: 2, kind: input, shape index: {}]
  %s3 = inlined_call_operand.vmem [shape: f32[128,128], index: 3, kind: input, shape index: {}]
  %s4 = inlined_call_operand.vmem [shape: f32[1,128], index: 4, kind: input, shape index: {}]
  %s5 = inlined_call_operand.vmem [shape: f32[9,128,128], index: 5, kind: input, shape index: {}]
  %s6 = inlined_call_operand.vmem [shape: f32[1,128], index: 6, kind: input, shape index: {}]
  %s7 = inlined_call_operand.vmem [shape: f32[8,128], index: 7, kind: input, shape index: {}]
  %s8 = inlined_call_operand.vmem [shape: f32[1,128], index: 8, kind: input, shape index: {}]
  %s9 = inlined_call_operand.vmem [shape: f32[128,8], index: 9, kind: input, shape index: {}]
  %s10 = inlined_call_operand.vmem [shape: f32[8,128], index: 10, kind: input, shape index: {}]
  %s11 = inlined_call_operand.vmem [shape: f32[2,128,128], index: 11, kind: output, shape index: {}]
  %s12 = sld [smem:[#allocation0]]
  $region77: #{ensemble_forward.2} parent=0
    _
  %s14 = ssub.s32 1, %s12
  %s15 = scalar_select 0, %s14, %s12
  loop: start=0, step=1, limit=4
  $region2: #{ensemble_forward.2} parent=0 // loop_pre_header
    _
  $region3: #{ensemble_forward.2} parent=0 // loop_header
    %s17 = sphi 0, %s21
    %p18 = scmp.ge.s32.totalorder %s17, 4
    %s27 = sphi 0, %s29
    %s30 = sphi 0, %s27
    %s31 = sphi 0, %s30
    %s47 = sphi 0, %s31
    %s53 = sphi 0, %s55
    %s56 = sphi 0, %s53
    %s57 = sphi 0, %s56
    %s73 = sphi 0, %s57
    %s77 = sphi 0, %s77
    %s79 = sphi 0, %s77
    %s80 = sphi 0, %s79
    %s94 = sphi 0, %s80
    %s98 = sphi 0, %s98
    %s100 = sphi 0, %s98
    %s101 = sphi 0, %s100
    %s115 = sphi 0, %s101
    %s119 = sphi 0, %s119
    %s121 = sphi 0, %s119
    %s122 = sphi 0, %s121
    %s136 = sphi 0, %s122
    %s140 = sphi 0, %s140
    %s142 = sphi 0, %s140
    %s143 = sphi 0, %s142
    %s157 = sphi 0, %s143
    %s161 = sphi 0, %s161
    %s163 = sphi 0, %s161
    %s164 = sphi 0, %s163
    %s178 = sphi 0, %s164
    %s182 = sphi 0, %s182
    %s184 = sphi 0, %s182
    %s185 = sphi 0, %s184
    %s199 = sphi 0, %s185
    %s203 = sphi 0, %s203
    %s205 = sphi 0, %s203
    %s206 = sphi 0, %s205
    %s220 = sphi 0, %s206
    %s224 = sphi 0, %s224
    %s226 = sphi 0, %s224
    %s227 = sphi 0, %s226
    %s241 = sphi 0, %s227
    %s245 = sphi 0, %s245
    %s247 = sphi 0, %s245
    %s248 = sphi 0, %s247
    %s262 = sphi 0, %s248
    %s268 = sphi 0, %s270
    %s271 = sphi 0, %s268
    %s272 = sphi 0, %s271
    %s288 = sphi 0, %s272
  $region4: #{ensemble_forward.2} parent=0 // loop_header_branch
    %20 = sbr.rel (%p18) target = $region8
  $region5: #{ensemble_forward.2} parent=0 // loop_body
    %s22 = ssub.s32 %s17, 1
    %s23 = ssub.s32 %s17, 2
    %s24 = sadd.s32 %s17, 1
    %s25 = ssub.s32 %s17, %s24
    %p26 = scmp.eq.s32.totalorder %s25, 0
    %s28 = sadd.s32 %s27, 1
    %s29 = scalar_select %p26, %s27, %s28
    %p32 = pneg %p26
    %p33 = scmp.eq.s32.totalorder %s17, 1
    %p34 = por %p32, %p33
    %p35 = scmp.ne.s32.totalorder %s27, %s30
    %p36 = scmp.eq.s32.totalorder %s17, 0
    %p37 = por %p35, %p36
    %p38 = scmp.ne.s32.totalorder %s27, %s30
    %p39 = scmp.eq.s32.totalorder %s22, 1
    %p40 = por %p38, %p39
    %p41 = scmp.ne.s32.totalorder %s30, %s31
    %p42 = scmp.eq.s32.totalorder %s22, 0
    %p43 = por %p41, %p42
    %p44 = scmp.ne.s32.totalorder %s30, %s31
    %p45 = scmp.eq.s32.totalorder %s23, 1
    %p46 = por %p44, %p45
    %p48 = scmp.ne.s32.totalorder %s31, %s47
    %p49 = scmp.eq.s32.totalorder %s23, 0
    %p50 = por %p48, %p49
    %s51 = ssub.s32 %s17, %s24
    %p52 = scmp.eq.s32.totalorder %s51, 0
    %s54 = sadd.s32 %s53, 1
    %s55 = scalar_select %p52, %s53, %s54
    %p58 = pneg %p52
    %p59 = scmp.eq.s32.totalorder %s17, 1
    %p60 = por %p58, %p59
    %p61 = scmp.ne.s32.totalorder %s53, %s56
    %p62 = scmp.eq.s32.totalorder %s17, 0
    %p63 = por %p61, %p62
    %p64 = scmp.ne.s32.totalorder %s53, %s56
    %p65 = scmp.eq.s32.totalorder %s22, 1
    %p66 = por %p64, %p65
    %p67 = scmp.ne.s32.totalorder %s56, %s57
    %p68 = scmp.eq.s32.totalorder %s22, 0
    %p69 = por %p67, %p68
    %p70 = scmp.ne.s32.totalorder %s56, %s57
    %p71 = scmp.eq.s32.totalorder %s23, 1
    %p72 = por %p70, %p71
    %p74 = scmp.ne.s32.totalorder %s57, %s73
    %p75 = scmp.eq.s32.totalorder %s23, 0
    %p76 = por %p74, %p75
    %s78 = sadd.s32 %s77, 1
    %p81 = scmp.eq.s32.totalorder %s17, 1
    %p82 = scmp.ne.s32.totalorder %s77, %s79
    %p83 = scmp.eq.s32.totalorder %s17, 0
    %p84 = por %p82, %p83
    %p85 = scmp.ne.s32.totalorder %s77, %s79
    %p86 = scmp.eq.s32.totalorder %s22, 1
    %p87 = por %p85, %p86
    %p88 = scmp.ne.s32.totalorder %s79, %s80
    %p89 = scmp.eq.s32.totalorder %s22, 0
    %p90 = por %p88, %p89
    %p91 = scmp.ne.s32.totalorder %s79, %s80
    %p92 = scmp.eq.s32.totalorder %s23, 1
    %p93 = por %p91, %p92
    %p95 = scmp.ne.s32.totalorder %s80, %s94
    %p96 = scmp.eq.s32.totalorder %s23, 0
    %p97 = por %p95, %p96
    %s99 = sadd.s32 %s98, 1
    %p102 = scmp.eq.s32.totalorder %s17, 1
    %p103 = scmp.ne.s32.totalorder %s98, %s100
    %p104 = scmp.eq.s32.totalorder %s17, 0
    %p105 = por %p103, %p104
    %p106 = scmp.ne.s32.totalorder %s98, %s100
    %p107 = scmp.eq.s32.totalorder %s22, 1
    %p108 = por %p106, %p107
    %p109 = scmp.ne.s32.totalorder %s100, %s101
    %p110 = scmp.eq.s32.totalorder %s22, 0
    %p111 = por %p109, %p110
    %p112 = scmp.ne.s32.totalorder %s100, %s101
    %p113 = scmp.eq.s32.totalorder %s23, 1
    %p114 = por %p112, %p113
    %p116 = scmp.ne.s32.totalorder %s101, %s115
    %p117 = scmp.eq.s32.totalorder %s23, 0
    %p118 = por %p116, %p117
    %s120 = sadd.s32 %s119, 1
    %p123 = scmp.eq.s32.totalorder %s17, 1
    %p124 = scmp.ne.s32.totalorder %s119, %s121
    %p125 = scmp.eq.s32.totalorder %s17, 0
    %p126 = por %p124, %p125
    %p127 = scmp.ne.s32.totalorder %s119, %s121
    %p128 = scmp.eq.s32.totalorder %s22, 1
    %p129 = por %p127, %p128
    %p130 = scmp.ne.s32.totalorder %s121, %s122
    %p131 = scmp.eq.s32.totalorder %s22, 0
    %p132 = por %p130, %p131
    %p133 = scmp.ne.s32.totalorder %s121, %s122
    %p134 = scmp.eq.s32.totalorder %s23, 1
    %p135 = por %p133, %p134
    %p137 = scmp.ne.s32.totalorder %s122, %s136
    %p138 = scmp.eq.s32.totalorder %s23, 0
    %p139 = por %p137, %p138
    %s141 = sadd.s32 %s140, 1
    %p144 = scmp.eq.s32.totalorder %s17, 1
    %p145 = scmp.ne.s32.totalorder %s140, %s142
    %p146 = scmp.eq.s32.totalorder %s17, 0
    %p147 = por %p145, %p146
    %p148 = scmp.ne.s32.totalorder %s140, %s142
    %p149 = scmp.eq.s32.totalorder %s22, 1
    %p150 = por %p148, %p149
    %p151 = scmp.ne.s32.totalorder %s142, %s143
    %p152 = scmp.eq.s32.totalorder %s22, 0
    %p153 = por %p151, %p152
    %p154 = scmp.ne.s32.totalorder %s142, %s143
    %p155 = scmp.eq.s32.totalorder %s23, 1
    %p156 = por %p154, %p155
    %p158 = scmp.ne.s32.totalorder %s143, %s157
    %p159 = scmp.eq.s32.totalorder %s23, 0
    %p160 = por %p158, %p159
    %s162 = sadd.s32 %s161, 1
    %p165 = scmp.eq.s32.totalorder %s17, 1
    %p166 = scmp.ne.s32.totalorder %s161, %s163
    %p167 = scmp.eq.s32.totalorder %s17, 0
    %p168 = por %p166, %p167
    %p169 = scmp.ne.s32.totalorder %s161, %s163
    %p170 = scmp.eq.s32.totalorder %s22, 1
    %p171 = por %p169, %p170
    %p172 = scmp.ne.s32.totalorder %s163, %s164
    %p173 = scmp.eq.s32.totalorder %s22, 0
    %p174 = por %p172, %p173
    %p175 = scmp.ne.s32.totalorder %s163, %s164
    %p176 = scmp.eq.s32.totalorder %s23, 1
    %p177 = por %p175, %p176
    %p179 = scmp.ne.s32.totalorder %s164, %s178
    %p180 = scmp.eq.s32.totalorder %s23, 0
    %p181 = por %p179, %p180
    %s183 = sadd.s32 %s182, 1
    %p186 = scmp.eq.s32.totalorder %s17, 1
    %p187 = scmp.ne.s32.totalorder %s182, %s184
    %p188 = scmp.eq.s32.totalorder %s17, 0
    %p189 = por %p187, %p188
    %p190 = scmp.ne.s32.totalorder %s182, %s184
    %p191 = scmp.eq.s32.totalorder %s22, 1
    %p192 = por %p190, %p191
    %p193 = scmp.ne.s32.totalorder %s184, %s185
    %p194 = scmp.eq.s32.totalorder %s22, 0
    %p195 = por %p193, %p194
    %p196 = scmp.ne.s32.totalorder %s184, %s185
    %p197 = scmp.eq.s32.totalorder %s23, 1
    %p198 = por %p196, %p197
    %p200 = scmp.ne.s32.totalorder %s185, %s199
    %p201 = scmp.eq.s32.totalorder %s23, 0
    %p202 = por %p200, %p201
    %s204 = sadd.s32 %s203, 1
    %p207 = scmp.eq.s32.totalorder %s17, 1
    %p208 = scmp.ne.s32.totalorder %s203, %s205
    %p209 = scmp.eq.s32.totalorder %s17, 0
    %p210 = por %p208, %p209
    %p211 = scmp.ne.s32.totalorder %s203, %s205
    %p212 = scmp.eq.s32.totalorder %s22, 1
    %p213 = por %p211, %p212
    %p214 = scmp.ne.s32.totalorder %s205, %s206
    %p215 = scmp.eq.s32.totalorder %s22, 0
    %p216 = por %p214, %p215
    %p217 = scmp.ne.s32.totalorder %s205, %s206
    %p218 = scmp.eq.s32.totalorder %s23, 1
    %p219 = por %p217, %p218
    %p221 = scmp.ne.s32.totalorder %s206, %s220
    %p222 = scmp.eq.s32.totalorder %s23, 0
    %p223 = por %p221, %p222
    %s225 = sadd.s32 %s224, 1
    %p228 = scmp.eq.s32.totalorder %s17, 1
    %p229 = scmp.ne.s32.totalorder %s224, %s226
    %p230 = scmp.eq.s32.totalorder %s17, 0
    %p231 = por %p229, %p230
    %p232 = scmp.ne.s32.totalorder %s224, %s226
    %p233 = scmp.eq.s32.totalorder %s22, 1
    %p234 = por %p232, %p233
    %p235 = scmp.ne.s32.totalorder %s226, %s227
    %p236 = scmp.eq.s32.totalorder %s22, 0
    %p237 = por %p235, %p236
    %p238 = scmp.ne.s32.totalorder %s226, %s227
    %p239 = scmp.eq.s32.totalorder %s23, 1
    %p240 = por %p238, %p239
    %p242 = scmp.ne.s32.totalorder %s227, %s241
    %p243 = scmp.eq.s32.totalorder %s23, 0
    %p244 = por %p242, %p243
    %s246 = sadd.s32 %s245, 1
    %p249 = scmp.eq.s32.totalorder %s17, 1
    %p250 = scmp.ne.s32.totalorder %s245, %s247
    %p251 = scmp.eq.s32.totalorder %s17, 0
    %p252 = por %p250, %p251
    %p253 = scmp.ne.s32.totalorder %s245, %s247
    %p254 = scmp.eq.s32.totalorder %s22, 1
    %p255 = por %p253, %p254
    %p256 = scmp.ne.s32.totalorder %s247, %s248
    %p257 = scmp.eq.s32.totalorder %s22, 0
    %p258 = por %p256, %p257
    %p259 = scmp.ne.s32.totalorder %s247, %s248
    %p260 = scmp.eq.s32.totalorder %s23, 1
    %p261 = por %p259, %p260
    %p263 = scmp.ne.s32.totalorder %s248, %s262
    %p264 = scmp.eq.s32.totalorder %s23, 0
    %p265 = por %p263, %p264
    %s266 = ssub.s32 %s17, %s24
    %p267 = scmp.eq.s32.totalorder %s266, 0
    %s269 = sadd.s32 %s268, 1
    %s270 = scalar_select %p267, %s268, %s269
    %p273 = pneg %p267
    %p274 = scmp.eq.s32.totalorder %s17, 1
    %p275 = por %p273, %p274
    %p276 = scmp.ne.s32.totalorder %s268, %s271
    %p277 = scmp.eq.s32.totalorder %s17, 0
    %p278 = por %p276, %p277
    %p279 = scmp.ne.s32.totalorder %s268, %s271
    %p280 = scmp.eq.s32.totalorder %s22, 1
    %p281 = por %p279, %p280
    %p282 = scmp.ne.s32.totalorder %s271, %s272
    %p283 = scmp.eq.s32.totalorder %s22, 0
    %p284 = por %p282, %p283
    %p285 = scmp.ne.s32.totalorder %s271, %s272
    %p286 = scmp.eq.s32.totalorder %s23, 1
    %p287 = por %p285, %p286
    %p289 = scmp.ne.s32.totalorder %s272, %s288
    %p290 = scmp.eq.s32.totalorder %s23, 0
    %p291 = por %p289, %p290
    %p292 = scmp.le.s32.totalorder 1, %s17
    %p293 = scmp.lt.s32.totalorder %s17, 3
    %p294 = pnand %p292, %p293
    %p295 = pneg %p294
    // Predicated region
    $region9: #{ensemble_forward.2} parent=5 // pred_check
      _
    $region10: #{ensemble_forward.2} parent=5 // pred_check_branch
      %297 = sbr.rel (%p294) target = $region12
    $region11: #{ensemble_forward.2} parent=5 // pred_region
      %s298 = ssub.s32 %s17, 1
      // Predicated region
      $region13: #{ensemble_forward.2} parent=11 // pred_check
        %p299 = pneg %p90
      $region14: #{ensemble_forward.2} parent=11 // pred_check_branch
        %301 = sbr.rel (%p299) target = $region16
      $region15: #{ensemble_forward.2} parent=11 // pred_region
        _
      $region16: #{ensemble_forward.2} parent=11 // pred_fallthru
        _
      // Predicated region
      $region17: #{ensemble_forward.2} parent=11 // pred_check
        %p302 = pneg %p111
      $region18: #{ensemble_forward.2} parent=11 // pred_check_branch
        %304 = sbr.rel (%p302) target = $region20
      $region19: #{ensemble_forward.2} parent=11 // pred_region
        _
      $region20: #{ensemble_forward.2} parent=11 // pred_fallthru
        _
      // Predicated region
      $region21: #{ensemble_forward.2} parent=11 // pred_check
        %p305 = pneg %p132
      $region22: #{ensemble_forward.2} parent=11 // pred_check_branch
        %307 = sbr.rel (%p305) target = $region24
      $region23: #{ensemble_forward.2} parent=11 // pred_region
        _
      $region24: #{ensemble_forward.2} parent=11 // pred_fallthru
        _
      // Predicated region
      $region25: #{ensemble_forward.2} parent=11 // pred_check
        %p308 = pneg %p153
      $region26: #{ensemble_forward.2} parent=11 // pred_check_branch
        %310 = sbr.rel (%p308) target = $region28
      $region27: #{ensemble_forward.2} parent=11 // pred_region
        _
      $region28: #{ensemble_forward.2} parent=11 // pred_fallthru
        _
      // Predicated region
      $region29: #{ensemble_forward.2} parent=11 // pred_check
        %p311 = pneg %p174
      $region30: #{ensemble_forward.2} parent=11 // pred_check_branch
        %313 = sbr.rel (%p311) target = $region32
      $region31: #{ensemble_forward.2} parent=11 // pred_region
        _
      $region32: #{ensemble_forward.2} parent=11 // pred_fallthru
        _
      // Predicated region
      $region33: #{ensemble_forward.2} parent=11 // pred_check
        %p314 = pneg %p195
      $region34: #{ensemble_forward.2} parent=11 // pred_check_branch
        %316 = sbr.rel (%p314) target = $region36
      $region35: #{ensemble_forward.2} parent=11 // pred_region
        _
      $region36: #{ensemble_forward.2} parent=11 // pred_fallthru
        _
      // Predicated region
      $region37: #{ensemble_forward.2} parent=11 // pred_check
        %p317 = pneg %p216
      $region38: #{ensemble_forward.2} parent=11 // pred_check_branch
        %319 = sbr.rel (%p317) target = $region40
      $region39: #{ensemble_forward.2} parent=11 // pred_region
        _
      $region40: #{ensemble_forward.2} parent=11 // pred_fallthru
        _
      // Predicated region
      $region41: #{ensemble_forward.2} parent=11 // pred_check
        %p320 = pneg %p237
      $region42: #{ensemble_forward.2} parent=11 // pred_check_branch
        %322 = sbr.rel (%p320) target = $region44
      $region43: #{ensemble_forward.2} parent=11 // pred_region
        _
      $region44: #{ensemble_forward.2} parent=11 // pred_fallthru
        _
      // Predicated region
      $region45: #{ensemble_forward.2} parent=11 // pred_check
        %p323 = pneg %p258
      $region46: #{ensemble_forward.2} parent=11 // pred_check_branch
        %325 = sbr.rel (%p323) target = $region48
      $region47: #{ensemble_forward.2} parent=11 // pred_region
        _
      $region48: #{ensemble_forward.2} parent=11 // pred_fallthru
        _
    $region12: #{ensemble_forward.2} parent=5 // pred_fallthru
      _
    %p326 = scmp.lt.s32.totalorder %s17, 2
    // Predicated region
    $region49: #{ensemble_forward.2} parent=5 // pred_check
      %p327 = pneg %p326
    $region50: #{ensemble_forward.2} parent=5 // pred_check_branch
      %329 = sbr.rel (%p327) target = $region52
    $region51: #{ensemble_forward.2} parent=5 // pred_region
      // Predicated region
      $region53: #{ensemble_forward.2} parent=51 // pred_check
        %p330 = pneg %p37
      $region54: #{ensemble_forward.2} parent=51 // pred_check_branch
        %332 = sbr.rel (%p330) target = $region56
      $region55: #{ensemble_forward.2} parent=51 // pred_region
        %p333 = scmp.lt.s32.totalorder %s17, 1
        %s334 = scalar_select %p333, %s17, 1
        %s335 = smul.addr %s334, 64
        %s336 = smul.addr %s335, 8
        %s337 = scalar_lea.vmem %s0, %s336
      $region56: #{ensemble_forward.2} parent=51 // pred_fallthru
        _
      // Predicated region
      $region57: #{ensemble_forward.2} parent=51 // pred_check
        %p338 = pneg %p63
      $region58: #{ensemble_forward.2} parent=51 // pred_check_branch
        %340 = sbr.rel (%p338) target = $region60
      $region59: #{ensemble_forward.2} parent=51 // pred_region
        %p341 = scmp.lt.s32.totalorder %s17, 1
        %s342 = scalar_select %p341, %s17, 1
        %s343 = smul.addr %s342, 16
        %s344 = smul.addr %s343, 8
        %s345 = scalar_lea.vmem %s1, %s344
      $region60: #{ensemble_forward.2} parent=51 // pred_fallthru
        _
    $region52: #{ensemble_forward.2} parent=5 // pred_fallthru
      _
    %p346 = scmp.le.s32.totalorder 1, %s17
    %p347 = scmp.lt.s32.totalorder %s17, 3
    %p348 = pnand %p346, %p347
    %p349 = pneg %p348
    // Predicated region
    $region61: #{ensemble_forward.2} parent=5 // pred_check
      _
    $region62: #{ensemble_forward.2} parent=5 // pred_check_branch
      %351 = sbr.rel (%p348) target = $region64
    $region63: #{ensemble_forward.2} parent=5 // pred_region
      %s352 = ssub.s32 %s17, 1
      %p353 = scmp.lt.s32.totalorder %s22, 1
      %s354 = scalar_select %p353, %s22, 1
      %s355 = smul.addr %s354, 64
      %s356 = smul.addr %s355, 8
      %s357 = scalar_lea.vmem %s0, %s356
      %p358 = pneg %p43
      %p359 = pneg %p40
      %p360 = scmp.lt.s32.totalorder %s22, 1
      %s361 = scalar_select %p360, %s22, 1
      %s362 = smul.addr %s361, 16
      %s363 = smul.addr %s362, 8
      %s364 = scalar_lea.vmem %s1, %s363
      %p365 = pneg %p69
      %p366 = pneg %p66
      %p367 = pneg %p90
      %p368 = pneg %p87
      %p369 = pneg %p111
      %p370 = pneg %p108
      %p371 = pneg %p132
      %p372 = pneg %p129
      %p373 = pneg %p153
      %p374 = pneg %p150
      %p375 = pneg %p174
      %p376 = pneg %p171
      %p377 = pneg %p195
      %p378 = pneg %p192
      %p379 = pneg %p216
      %p380 = pneg %p213
      %p381 = pneg %p237
      %p382 = pneg %p234
      %p383 = pneg %p258
      %p384 = pneg %p255
      %p385 = pneg %p284
      %p386 = pneg %p281
      %p387 = scmp.lt.s32.totalorder %s22, 1
      %s388 = scalar_select %p387, %s22, 1
      %s389 = smul.addr %s388, 16
      %s390 = smul.addr %s389, 8
      %s391 = scalar_lea.vmem %s11, %s390
      %p392 = scmp.lt.s32.totalorder %s22, 1
      %s393 = scalar_select %p392, %s22, 1
      %s394 = smul.addr %s393, 64
      %s395 = smul.addr %s394, 8
      %s396 = scalar_lea.vmem %s0, %s395
      %p397 = scmp.lt.s32.totalorder %s22, 1
      %s398 = scalar_select %p397, %s22, 1
      %s399 = smul.addr %s398, 16
      %s400 = smul.addr %s399, 8
      %s401 = scalar_lea.vmem %s1, %s400
      %p402 = scmp.lt.s32.totalorder %s22, 1
      %s403 = scalar_select %p402, %s22, 1
      %s404 = smul.addr %s403, 16
      %s405 = smul.addr %s404, 8
      %s406 = scalar_lea.vmem %s11, %s405
      %v407 = vld [vmem:[%s396] sm:$0xff]
      %v408 = vld [vmem:[%s396 + $0x8] sm:$0xff]
      %v409 = vld [vmem:[%s396 + $0x10] sm:$0xff]
      %v410 = vld [vmem:[%s396 + $0x18] sm:$0xff]
      %v411 = vld [vmem:[%s396 + $0x20] sm:$0xff]
      %v412 = vld [vmem:[%s396 + $0x28] sm:$0xff]
      %v413 = vld [vmem:[%s396 + $0x30] sm:$0xff]
      %v414 = vld [vmem:[%s396 + $0x38] sm:$0xff]
      %v415 = vld [vmem:[%s396 + $0x40] sm:$0xff]
      %v416 = vld [vmem:[%s396 + $0x48] sm:$0xff]
      %v417 = vld [vmem:[%s396 + $0x50] sm:$0xff]
      %v418 = vld [vmem:[%s396 + $0x58] sm:$0xff]
      %v419 = vld [vmem:[%s396 + $0x60] sm:$0xff]
      %v420 = vld [vmem:[%s396 + $0x68] sm:$0xff]
      %v421 = vld [vmem:[%s396 + $0x70] sm:$0xff]
      %v422 = vld [vmem:[%s396 + $0x78] sm:$0xff]
      %v423 = vld [vmem:[%s396 + $0x80] sm:$0xff]
      %v424 = vld [vmem:[%s396 + $0x88] sm:$0xff]
      %v425 = vld [vmem:[%s396 + $0x90] sm:$0xff]
      %v426 = vld [vmem:[%s396 + $0x98] sm:$0xff]
      %v427 = vld [vmem:[%s396 + $0xa0] sm:$0xff]
      %v428 = vld [vmem:[%s396 + $0xa8] sm:$0xff]
      %v429 = vld [vmem:[%s396 + $0xb0] sm:$0xff]
      %v430 = vld [vmem:[%s396 + $0xb8] sm:$0xff]
      %v431 = vld [vmem:[%s396 + $0xc0] sm:$0xff]
      %v432 = vld [vmem:[%s396 + $0xc8] sm:$0xff]
      %v433 = vld [vmem:[%s396 + $0xd0] sm:$0xff]
      %v434 = vld [vmem:[%s396 + $0xd8] sm:$0xff]
      %v435 = vld [vmem:[%s396 + $0xe0] sm:$0xff]
      %v436 = vld [vmem:[%s396 + $0xe8] sm:$0xff]
      %v437 = vld [vmem:[%s396 + $0xf0] sm:$0xff]
      %v438 = vld [vmem:[%s396 + $0xf8] sm:$0xff]
      %v439 = vld [vmem:[%s396 + $0x100] sm:$0xff]
      %v440 = vld [vmem:[%s396 + $0x108] sm:$0xff]
      %v441 = vld [vmem:[%s396 + $0x110] sm:$0xff]
      %v442 = vld [vmem:[%s396 + $0x118] sm:$0xff]
      %v443 = vld [vmem:[%s396 + $0x120] sm:$0xff]
      %v444 = vld [vmem:[%s396 + $0x128] sm:$0xff]
      %v445 = vld [vmem:[%s396 + $0x130] sm:$0xff]
      %v446 = vld [vmem:[%s396 + $0x138] sm:$0xff]
      %v447 = vld [vmem:[%s396 + $0x140] sm:$0xff]
      %v448 = vld [vmem:[%s396 + $0x148] sm:$0xff]
      %v449 = vld [vmem:[%s396 + $0x150] sm:$0xff]
      %v450 = vld [vmem:[%s396 + $0x158] sm:$0xff]
      %v451 = vld [vmem:[%s396 + $0x160] sm:$0xff]
      %v452 = vld [vmem:[%s396 + $0x168] sm:$0xff]
      %v453 = vld [vmem:[%s396 + $0x170] sm:$0xff]
      %v454 = vld [vmem:[%s396 + $0x178] sm:$0xff]
      %v455 = vld [vmem:[%s396 + $0x180] sm:$0xff]
      %v456 = vld [vmem:[%s396 + $0x188] sm:$0xff]
      %v457 = vld [vmem:[%s396 + $0x190] sm:$0xff]
      %v458 = vld [vmem:[%s396 + $0x198] sm:$0xff]
      %v459 = vld [vmem:[%s396 + $0x1a0] sm:$0xff]
      %v460 = vld [vmem:[%s396 + $0x1a8] sm:$0xff]
      %v461 = vld [vmem:[%s396 + $0x1b0] sm:$0xff]
      %v462 = vld [vmem:[%s396 + $0x1b8] sm:$0xff]
      %v463 = vld [vmem:[%s396 + $0x1c0] sm:$0xff]
      %v464 = vld [vmem:[%s396 + $0x1c8] sm:$0xff]
      %v465 = vld [vmem:[%s396 + $0x1d0] sm:$0xff]
      %v466 = vld [vmem:[%s396 + $0x1d8] sm:$0xff]
      %v467 = vld [vmem:[%s396 + $0x1e0] sm:$0xff]
      %v468 = vld [vmem:[%s396 + $0x1e8] sm:$0xff]
      %v469 = vld [vmem:[%s396 + $0x1f0] sm:$0xff]
      %v470 = vld [vmem:[%s396 + $0x1f8] sm:$0xff]
      %v471 = vld [vmem:[%s3] sm:$0xff]
      %v472 = vld [vmem:[%s3 + $0x8] sm:$0xff]
      %v473 = vld [vmem:[%s3 + $0x10] sm:$0xff]
      %v474 = vld [vmem:[%s3 + $0x18] sm:$0xff]
      %v475 = vld [vmem:[%s3 + $0x20] sm:$0xff]
      %v476 = vld [vmem:[%s3 + $0x28] sm:$0xff]
      %v477 = vld [vmem:[%s3 + $0x30] sm:$0xff]
      %v478 = vld [vmem:[%s3 + $0x38] sm:$0xff]
      %v479 = vld [vmem:[%s3 + $0x40] sm:$0xff]
      %v480 = vld [vmem:[%s3 + $0x48] sm:$0xff]
      %v481 = vld [vmem:[%s3 + $0x50] sm:$0xff]
      %v482 = vld [vmem:[%s3 + $0x58] sm:$0xff]
      %v483 = vld [vmem:[%s3 + $0x60] sm:$0xff]
      %v484 = vld [vmem:[%s3 + $0x68] sm:$0xff]
      %v485 = vld [vmem:[%s3 + $0x70] sm:$0xff]
      %v486 = vld [vmem:[%s3 + $0x78] sm:$0xff]
      %487 = vmatpush.msra.mxu0 %v486
      %488 = vmatpush.msra.mxu0 %v485
      %489 = vmatpush.msra.mxu0 %v484
      %490 = vmatpush.msra.mxu0 %v483
      %491 = vmatpush.msra.mxu0 %v482
      %492 = vmatpush.msra.mxu0 %v481
      %493 = vmatpush.msra.mxu0 %v480
      %494 = vmatpush.msra.mxu0 %v479
      %495 = vmatpush.msra.mxu0 %v478
      %496 = vmatpush.msra.mxu0 %v477
      %497 = vmatpush.msra.mxu0 %v476
      %498 = vmatpush.msra.mxu0 %v475
      %499 = vmatpush.msra.mxu0 %v474
      %500 = vmatpush.msra.mxu0 %v473
      %501 = vmatpush.msra.mxu0 %v472
      %502 = vmatpush.msra.mxu0 %v471
      %503 = vmatmul.f32.gmra.mxu0 %v407
      %v504 = vpop.f32.mrf.mxu0
      %v505 = vadd.f32 0.0, %v504
      %506 = vmatmul.f32.gmra.mxu0 %v408
      %v507 = vpop.f32.mrf.mxu0
      %v508 = vadd.f32 0.0, %v507
      %509 = vmatmul.f32.gmra.mxu0 %v409
      %v510 = vpop.f32.mrf.mxu0
      %v511 = vadd.f32 0.0, %v510
      %512 = vmatmul.f32.gmra.mxu0 %v410
      %v513 = vpop.f32.mrf.mxu0
      %v514 = vadd.f32 0.0, %v513
      %515 = vmatmul.f32.gmra.mxu0 %v411
      %v516 = vpop.f32.mrf.mxu0
      %v517 = vadd.f32 0.0, %v516
      %518 = vmatmul.f32.gmra.mxu0 %v412
      %v519 = vpop.f32.mrf.mxu0
      %v520 = vadd.f32 0.0, %v519
      %521 = vmatmul.f32.gmra.mxu0 %v413
      %v522 = vpop.f32.mrf.mxu0
      %v523 = vadd.f32 0.0, %v522
      %524 = vmatmul.f32.gmra.mxu0 %v414
      %v525 = vpop.f32.mrf.mxu0
      %v526 = vadd.f32 0.0, %v525
      %527 = vmatmul.f32.gmra.mxu0 %v415
      %v528 = vpop.f32.mrf.mxu0
      %v529 = vadd.f32 0.0, %v528
      %530 = vmatmul.f32.gmra.mxu0 %v416
      %v531 = vpop.f32.mrf.mxu0
      %v532 = vadd.f32 0.0, %v531
      %533 = vmatmul.f32.gmra.mxu0 %v417
      %v534 = vpop.f32.mrf.mxu0
      %v535 = vadd.f32 0.0, %v534
      %536 = vmatmul.f32.gmra.mxu0 %v418
      %v537 = vpop.f32.mrf.mxu0
      %v538 = vadd.f32 0.0, %v537
      %539 = vmatmul.f32.gmra.mxu0 %v419
      %v540 = vpop.f32.mrf.mxu0
      %v541 = vadd.f32 0.0, %v540
      %542 = vmatmul.f32.gmra.mxu0 %v420
      %v543 = vpop.f32.mrf.mxu0
      %v544 = vadd.f32 0.0, %v543
      %545 = vmatmul.f32.gmra.mxu0 %v421
      %v546 = vpop.f32.mrf.mxu0
      %v547 = vadd.f32 0.0, %v546
      %548 = vmatmul.f32.gmra.mxu0 %v422
      %v549 = vpop.f32.mrf.mxu0
      %v550 = vadd.f32 0.0, %v549
      %551 = vmatmul.f32.gmra.mxu0 %v423
      %v552 = vpop.f32.mrf.mxu0
      %v553 = vadd.f32 0.0, %v552
      %554 = vmatmul.f32.gmra.mxu0 %v424
      %v555 = vpop.f32.mrf.mxu0
      %v556 = vadd.f32 0.0, %v555
      %557 = vmatmul.f32.gmra.mxu0 %v425
      %v558 = vpop.f32.mrf.mxu0
      %v559 = vadd.f32 0.0, %v558
      %560 = vmatmul.f32.gmra.mxu0 %v426
      %v561 = vpop.f32.mrf.mxu0
      %v562 = vadd.f32 0.0, %v561
      %563 = vmatmul.f32.gmra.mxu0 %v427
      %v564 = vpop.f32.mrf.mxu0
      %v565 = vadd.f32 0.0, %v564
      %566 = vmatmul.f32.gmra.mxu0 %v428
      %v567 = vpop.f32.mrf.mxu0
      %v568 = vadd.f32 0.0, %v567
      %569 = vmatmul.f32.gmra.mxu0 %v429
      %v570 = vpop.f32.mrf.mxu0
      %v571 = vadd.f32 0.0, %v570
      %572 = vmatmul.f32.gmra.mxu0 %v430
      %v573 = vpop.f32.mrf.mxu0
      %v574 = vadd.f32 0.0, %v573
      %575 = vmatmul.f32.gmra.mxu0 %v431
      %v576 = vpop.f32.mrf.mxu0
      %v577 = vadd.f32 0.0, %v576
      %578 = vmatmul.f32.gmra.mxu0 %v432
      %v579 = vpop.f32.mrf.mxu0
      %v580 = vadd.f32 0.0, %v579
      %581 = vmatmul.f32.gmra.mxu0 %v433
      %v582 = vpop.f32.mrf.mxu0
      %v583 = vadd.f32 0.0, %v582
      %584 = vmatmul.f32.gmra.mxu0 %v434
      %v585 = vpop.f32.mrf.mxu0
      %v586 = vadd.f32 0.0, %v585
      %587 = vmatmul.f32.gmra.mxu0 %v435
      %v588 = vpop.f32.mrf.mxu0
      %v589 = vadd.f32 0.0, %v588
      %590 = vmatmul.f32.gmra.mxu0 %v436
      %v591 = vpop.f32.mrf.mxu0
      %v592 = vadd.f32 0.0, %v591
      %593 = vmatmul.f32.gmra.mxu0 %v437
      %v594 = vpop.f32.mrf.mxu0
      %v595 = vadd.f32 0.0, %v594
      %596 = vmatmul.f32.gmra.mxu0 %v438
      %v597 = vpop.f32.mrf.mxu0
      %v598 = vadd.f32 0.0, %v597
      %599 = vmatmul.f32.gmra.mxu0 %v439
      %v600 = vpop.f32.mrf.mxu0
      %v601 = vadd.f32 0.0, %v600
      %602 = vmatmul.f32.gmra.mxu0 %v440
      %v603 = vpop.f32.mrf.mxu0
      %v604 = vadd.f32 0.0, %v603
      %605 = vmatmul.f32.gmra.mxu0 %v441
      %v606 = vpop.f32.mrf.mxu0
      %v607 = vadd.f32 0.0, %v606
      %608 = vmatmul.f32.gmra.mxu0 %v442
      %v609 = vpop.f32.mrf.mxu0
      %v610 = vadd.f32 0.0, %v609
      %611 = vmatmul.f32.gmra.mxu0 %v443
      %v612 = vpop.f32.mrf.mxu0
      %v613 = vadd.f32 0.0, %v612
      %614 = vmatmul.f32.gmra.mxu0 %v444
      %v615 = vpop.f32.mrf.mxu0
      %v616 = vadd.f32 0.0, %v615
      %617 = vmatmul.f32.gmra.mxu0 %v445
      %v618 = vpop.f32.mrf.mxu0
      %v619 = vadd.f32 0.0, %v618
      %620 = vmatmul.f32.gmra.mxu0 %v446
      %v621 = vpop.f32.mrf.mxu0
      %v622 = vadd.f32 0.0, %v621
      %623 = vmatmul.f32.gmra.mxu0 %v447
      %v624 = vpop.f32.mrf.mxu0
      %v625 = vadd.f32 0.0, %v624
      %626 = vmatmul.f32.gmra.mxu0 %v448
      %v627 = vpop.f32.mrf.mxu0
      %v628 = vadd.f32 0.0, %v627
      %629 = vmatmul.f32.gmra.mxu0 %v449
      %v630 = vpop.f32.mrf.mxu0
      %v631 = vadd.f32 0.0, %v630
      %632 = vmatmul.f32.gmra.mxu0 %v450
      %v633 = vpop.f32.mrf.mxu0
      %v634 = vadd.f32 0.0, %v633
      %635 = vmatmul.f32.gmra.mxu0 %v451
      %v636 = vpop.f32.mrf.mxu0
      %v637 = vadd.f32 0.0, %v636
      %638 = vmatmul.f32.gmra.mxu0 %v452
      %v639 = vpop.f32.mrf.mxu0
      %v640 = vadd.f32 0.0, %v639
      %641 = vmatmul.f32.gmra.mxu0 %v453
      %v642 = vpop.f32.mrf.mxu0
      %v643 = vadd.f32 0.0, %v642
      %644 = vmatmul.f32.gmra.mxu0 %v454
      %v645 = vpop.f32.mrf.mxu0
      %v646 = vadd.f32 0.0, %v645
      %647 = vmatmul.f32.gmra.mxu0 %v455
      %v648 = vpop.f32.mrf.mxu0
      %v649 = vadd.f32 0.0, %v648
      %650 = vmatmul.f32.gmra.mxu0 %v456
      %v651 = vpop.f32.mrf.mxu0
      %v652 = vadd.f32 0.0, %v651
      %653 = vmatmul.f32.gmra.mxu0 %v457
      %v654 = vpop.f32.mrf.mxu0
      %v655 = vadd.f32 0.0, %v654
      %656 = vmatmul.f32.gmra.mxu0 %v458
      %v657 = vpop.f32.mrf.mxu0
      %v658 = vadd.f32 0.0, %v657
      %659 = vmatmul.f32.gmra.mxu0 %v459
      %v660 = vpop.f32.mrf.mxu0
      %v661 = vadd.f32 0.0, %v660
      %662 = vmatmul.f32.gmra.mxu0 %v460
      %v663 = vpop.f32.mrf.mxu0
      %v664 = vadd.f32 0.0, %v663
      %665 = vmatmul.f32.gmra.mxu0 %v461
      %v666 = vpop.f32.mrf.mxu0
      %v667 = vadd.f32 0.0, %v666
      %668 = vmatmul.f32.gmra.mxu0 %v462
      %v669 = vpop.f32.mrf.mxu0
      %v670 = vadd.f32 0.0, %v669
      %671 = vmatmul.f32.gmra.mxu0 %v463
      %v672 = vpop.f32.mrf.mxu0
      %v673 = vadd.f32 0.0, %v672
      %674 = vmatmul.f32.gmra.mxu0 %v464
      %v675 = vpop.f32.mrf.mxu0
      %v676 = vadd.f32 0.0, %v675
      %677 = vmatmul.f32.gmra.mxu0 %v465
      %v678 = vpop.f32.mrf.mxu0
      %v679 = vadd.f32 0.0, %v678
      %680 = vmatmul.f32.gmra.mxu0 %v466
      %v681 = vpop.f32.mrf.mxu0
      %v682 = vadd.f32 0.0, %v681
      %683 = vmatmul.f32.gmra.mxu0 %v467
      %v684 = vpop.f32.mrf.mxu0
      %v685 = vadd.f32 0.0, %v684
      %686 = vmatmul.f32.gmra.mxu0 %v468
      %v687 = vpop.f32.mrf.mxu0
      %v688 = vadd.f32 0.0, %v687
      %689 = vmatmul.f32.gmra.mxu0 %v469
      %v690 = vpop.f32.mrf.mxu0
      %v691 = vadd.f32 0.0, %v690
      %692 = vmatmul.f32.gmra.mxu0 %v470
      %v693 = vpop.f32.mrf.mxu0
      %v694 = vadd.f32 0.0, %v693
      %695 = vdwg.mxu0
      %vm696 = vcmp.ge.f32.partialorder %v505, 0.0
      %vm697 = vcmp.ge.f32.partialorder %v508, 0.0
      %vm698 = vcmp.ge.f32.partialorder %v511, 0.0
      %vm699 = vcmp.ge.f32.partialorder %v514, 0.0
      %vm700 = vcmp.ge.f32.partialorder %v517, 0.0
      %vm701 = vcmp.ge.f32.partialorder %v520, 0.0
      %vm702 = vcmp.ge.f32.partialorder %v523, 0.0
      %vm703 = vcmp.ge.f32.partialorder %v526, 0.0
      %vm704 = vcmp.ge.f32.partialorder %v529, 0.0
      %vm705 = vcmp.ge.f32.partialorder %v532, 0.0
      %vm706 = vcmp.ge.f32.partialorder %v535, 0.0
      %vm707 = vcmp.ge.f32.partialorder %v538, 0.0
      %vm708 = vcmp.ge.f32.partialorder %v541, 0.0
      %vm709 = vcmp.ge.f32.partialorder %v544, 0.0
      %vm710 = vcmp.ge.f32.partialorder %v547, 0.0
      %vm711 = vcmp.ge.f32.partialorder %v550, 0.0
      %vm712 = vcmp.ge.f32.partialorder %v553, 0.0
      %vm713 = vcmp.ge.f32.partialorder %v556, 0.0
      %vm714 = vcmp.ge.f32.partialorder %v559, 0.0
      %vm715 = vcmp.ge.f32.partialorder %v562, 0.0
      %vm716 = vcmp.ge.f32.partialorder %v565, 0.0
      %vm717 = vcmp.ge.f32.partialorder %v568, 0.0
      %vm718 = vcmp.ge.f32.partialorder %v571, 0.0
      %vm719 = vcmp.ge.f32.partialorder %v574, 0.0
      %vm720 = vcmp.ge.f32.partialorder %v577, 0.0
      %vm721 = vcmp.ge.f32.partialorder %v580, 0.0
      %vm722 = vcmp.ge.f32.partialorder %v583, 0.0
      %vm723 = vcmp.ge.f32.partialorder %v586, 0.0
      %vm724 = vcmp.ge.f32.partialorder %v589, 0.0
      %vm725 = vcmp.ge.f32.partialorder %v592, 0.0
      %vm726 = vcmp.ge.f32.partialorder %v595, 0.0
      %vm727 = vcmp.ge.f32.partialorder %v598, 0.0
      %vm728 = vcmp.ge.f32.partialorder %v601, 0.0
      %vm729 = vcmp.ge.f32.partialorder %v604, 0.0
      %vm730 = vcmp.ge.f32.partialorder %v607, 0.0
      %vm731 = vcmp.ge.f32.partialorder %v610, 0.0
      %vm732 = vcmp.ge.f32.partialorder %v613, 0.0
      %vm733 = vcmp.ge.f32.partialorder %v616, 0.0
      %vm734 = vcmp.ge.f32.partialorder %v619, 0.0
      %vm735 = vcmp.ge.f32.partialorder %v622, 0.0
      %vm736 = vcmp.ge.f32.partialorder %v625, 0.0
      %vm737 = vcmp.ge.f32.partialorder %v628, 0.0
      %vm738 = vcmp.ge.f32.partialorder %v631, 0.0
      %vm739 = vcmp.ge.f32.partialorder %v634, 0.0
      %vm740 = vcmp.ge.f32.partialorder %v637, 0.0
      %vm741 = vcmp.ge.f32.partialorder %v640, 0.0
      %vm742 = vcmp.ge.f32.partialorder %v643, 0.0
      %vm743 = vcmp.ge.f32.partialorder %v646, 0.0
      %vm744 = vcmp.ge.f32.partialorder %v649, 0.0
      %vm745 = vcmp.ge.f32.partialorder %v652, 0.0
      %vm746 = vcmp.ge.f32.partialorder %v655, 0.0
      %vm747 = vcmp.ge.f32.partialorder %v658, 0.0
      %vm748 = vcmp.ge.f32.partialorder %v661, 0.0
      %vm749 = vcmp.ge.f32.partialorder %v664, 0.0
      %vm750 = vcmp.ge.f32.partialorder %v667, 0.0
      %vm751 = vcmp.ge.f32.partialorder %v670, 0.0
      %vm752 = vcmp.ge.f32.partialorder %v673, 0.0
      %vm753 = vcmp.ge.f32.partialorder %v676, 0.0
      %vm754 = vcmp.ge.f32.partialorder %v679, 0.0
      %vm755 = vcmp.ge.f32.partialorder %v682, 0.0
      %vm756 = vcmp.ge.f32.partialorder %v685, 0.0
      %vm757 = vcmp.ge.f32.partialorder %v688, 0.0
      %vm758 = vcmp.ge.f32.partialorder %v691, 0.0
      %vm759 = vcmp.ge.f32.partialorder %v694, 0.0
      %v760 = vld [vmem:[%s4] sm:$0x1]
      %v762 = vperm.slane %v760, 0
      %v764 = vmul.f32 %v505, %v762
      %v765 = vmul.f32 %v508, %v762
      %v766 = vmul.f32 %v511, %v762
      %v767 = vmul.f32 %v514, %v762
      %v768 = vmul.f32 %v517, %v762
      %v769 = vmul.f32 %v520, %v762
      %v770 = vmul.f32 %v523, %v762
      %v771 = vmul.f32 %v526, %v762
      %v772 = vmul.f32 %v529, %v762
      %v773 = vmul.f32 %v532, %v762
      %v774 = vmul.f32 %v535, %v762
      %v775 = vmul.f32 %v538, %v762
      %v776 = vmul.f32 %v541, %v762
      %v777 = vmul.f32 %v544, %v762
      %v778 = vmul.f32 %v547, %v762
      %v779 = vmul.f32 %v550, %v762
      %v780 = vmul.f32 %v553, %v762
      %v781 = vmul.f32 %v556, %v762
      %v782 = vmul.f32 %v559, %v762
      %v783 = vmul.f32 %v562, %v762
      %v784 = vmul.f32 %v565, %v762
      %v785 = vmul.f32 %v568, %v762
      %v786 = vmul.f32 %v571, %v762
      %v787 = vmul.f32 %v574, %v762
      %v788 = vmul.f32 %v577, %v762
      %v789 = vmul.f32 %v580, %v762
      %v790 = vmul.f32 %v583, %v762
      %v791 = vmul.f32 %v586, %v762
      %v792 = vmul.f32 %v589, %v762
      %v793 = vmul.f32 %v592, %v762
      %v794 = vmul.f32 %v595, %v762
      %v795 = vmul.f32 %v598, %v762
      %v796 = vmul.f32 %v601, %v762
      %v797 = vmul.f32 %v604, %v762
      %v798 = vmul.f32 %v607, %v762
      %v799 = vmul.f32 %v610, %v762
      %v800 = vmul.f32 %v613, %v762
      %v801 = vmul.f32 %v616, %v762
      %v802 = vmul.f32 %v619, %v762
      %v803 = vmul.f32 %v622, %v762
      %v804 = vmul.f32 %v625, %v762
      %v805 = vmul.f32 %v628, %v762
      %v806 = vmul.f32 %v631, %v762
      %v807 = vmul.f32 %v634, %v762
      %v808 = vmul.f32 %v637, %v762
      %v809 = vmul.f32 %v640, %v762
      %v810 = vmul.f32 %v643, %v762
      %v811 = vmul.f32 %v646, %v762
      %v812 = vmul.f32 %v649, %v762
      %v813 = vmul.f32 %v652, %v762
      %v814 = vmul.f32 %v655, %v762
      %v815 = vmul.f32 %v658, %v762
      %v816 = vmul.f32 %v661, %v762
      %v817 = vmul.f32 %v664, %v762
      %v818 = vmul.f32 %v667, %v762
      %v819 = vmul.f32 %v670, %v762
      %v820 = vmul.f32 %v673, %v762
      %v821 = vmul.f32 %v676, %v762
      %v822 = vmul.f32 %v679, %v762
      %v823 = vmul.f32 %v682, %v762
      %v824 = vmul.f32 %v685, %v762
      %v825 = vmul.f32 %v688, %v762
      %v826 = vmul.f32 %v691, %v762
      %v827 = vmul.f32 %v694, %v762
      %v828 = vsel %vm696, %v505, %v764
      %v829 = vsel %vm697, %v508, %v765
      %v830 = vsel %vm698, %v511, %v766
      %v831 = vsel %vm699, %v514, %v767
      %v832 = vsel %vm700, %v517, %v768
      %v833 = vsel %vm701, %v520, %v769
      %v834 = vsel %vm702, %v523, %v770
      %v835 = vsel %vm703, %v526, %v771
      %v836 = vsel %vm704, %v529, %v772
      %v837 = vsel %vm705, %v532, %v773
      %v838 = vsel %vm706, %v535, %v774
      %v839 = vsel %vm707, %v538, %v775
      %v840 = vsel %vm708, %v541, %v776
      %v841 = vsel %vm709, %v544, %v777
      %v842 = vsel %vm710, %v547, %v778
      %v843 = vsel %vm711, %v550, %v779
      %v844 = vsel %vm712, %v553, %v780
      %v845 = vsel %vm713, %v556, %v781
      %v846 = vsel %vm714, %v559, %v782
      %v847 = vsel %vm715, %v562, %v783
      %v848 = vsel %vm716, %v565, %v784
      %v849 = vsel %vm717, %v568, %v785
      %v850 = vsel %vm718, %v571, %v786
      %v851 = vsel %vm719, %v574, %v787
      %v852 = vsel %vm720, %v577, %v788
      %v853 = vsel %vm721, %v580, %v789
      %v854 = vsel %vm722, %v583, %v790
      %v855 = vsel %vm723, %v586, %v791
      %v856 = vsel %vm724, %v589, %v792
      %v857 = vsel %vm725, %v592, %v793
      %v858 = vsel %vm726, %v595, %v794
      %v859 = vsel %vm727, %v598, %v795
      %v860 = vsel %vm728, %v601, %v796
      %v861 = vsel %vm729, %v604, %v797
      %v862 = vsel %vm730, %v607, %v798
      %v863 = vsel %vm731, %v610, %v799
      %v864 = vsel %vm732, %v613, %v800
      %v865 = vsel %vm733, %v616, %v801
      %v866 = vsel %vm734, %v619, %v802
      %v867 = vsel %vm735, %v622, %v803
      %v868 = vsel %vm736, %v625, %v804
      %v869 = vsel %vm737, %v628, %v805
      %v870 = vsel %vm738, %v631, %v806
      %v871 = vsel %vm739, %v634, %v807
      %v872 = vsel %vm740, %v637, %v808
      %v873 = vsel %vm741, %v640, %v809
      %v874 = vsel %vm742, %v643, %v810
      %v875 = vsel %vm743, %v646, %v811
      %v876 = vsel %vm744, %v649, %v812
      %v877 = vsel %vm745, %v652, %v813
      %v878 = vsel %vm746, %v655, %v814
      %v879 = vsel %vm747, %v658, %v815
      %v880 = vsel %vm748, %v661, %v816
      %v881 = vsel %vm749, %v664, %v817
      %v882 = vsel %vm750, %v667, %v818
      %v883 = vsel %vm751, %v670, %v819
      %v884 = vsel %vm752, %v673, %v820
      %v885 = vsel %vm753, %v676, %v821
      %v886 = vsel %vm754, %v679, %v822
      %v887 = vsel %vm755, %v682, %v823
      %v888 = vsel %vm756, %v685, %v824
      %v889 = vsel %vm757, %v688, %v825
      %v890 = vsel %vm758, %v691, %v826
      %v891 = vsel %vm759, %v694, %v827
      %s892 = scalar_lea.vmem %s5, 512
      %v893 = vld [vmem:[%s892] sm:$0xff]
      %v894 = vld [vmem:[%s892 + $0x8] sm:$0xff]
      %v895 = vld [vmem:[%s892 + $0x10] sm:$0xff]
      %v896 = vld [vmem:[%s892 + $0x18] sm:$0xff]
      %v897 = vld [vmem:[%s892 + $0x20] sm:$0xff]
      %v898 = vld [vmem:[%s892 + $0x28] sm:$0xff]
      %v899 = vld [vmem:[%s892 + $0x30] sm:$0xff]
      %v900 = vld [vmem:[%s892 + $0x38] sm:$0xff]
      %v901 = vld [vmem:[%s892 + $0x40] sm:$0xff]
      %v902 = vld [vmem:[%s892 + $0x48] sm:$0xff]
      %v903 = vld [vmem:[%s892 + $0x50] sm:$0xff]
      %v904 = vld [vmem:[%s892 + $0x58] sm:$0xff]
      %v905 = vld [vmem:[%s892 + $0x60] sm:$0xff]
      %v906 = vld [vmem:[%s892 + $0x68] sm:$0xff]
      %v907 = vld [vmem:[%s892 + $0x70] sm:$0xff]
      %v908 = vld [vmem:[%s892 + $0x78] sm:$0xff]
      %s909 = scalar_lea.vmem %s5, 640
      %v910 = vld [vmem:[%s909] sm:$0xff]
      %v911 = vld [vmem:[%s909 + $0x8] sm:$0xff]
      %v912 = vld [vmem:[%s909 + $0x10] sm:$0xff]
      %v913 = vld [vmem:[%s909 + $0x18] sm:$0xff]
      %v914 = vld [vmem:[%s909 + $0x20] sm:$0xff]
      %v915 = vld [vmem:[%s909 + $0x28] sm:$0xff]
      %v916 = vld [vmem:[%s909 + $0x30] sm:$0xff]
      %v917 = vld [vmem:[%s909 + $0x38] sm:$0xff]
      %v918 = vld [vmem:[%s909 + $0x40] sm:$0xff]
      %v919 = vld [vmem:[%s909 + $0x48] sm:$0xff]
      %v920 = vld [vmem:[%s909 + $0x50] sm:$0xff]
      %v921 = vld [vmem:[%s909 + $0x58] sm:$0xff]
      %v922 = vld [vmem:[%s909 + $0x60] sm:$0xff]
      %v923 = vld [vmem:[%s909 + $0x68] sm:$0xff]
      %v924 = vld [vmem:[%s909 + $0x70] sm:$0xff]
      %v925 = vld [vmem:[%s909 + $0x78] sm:$0xff]
      %926 = vmatpush.msra.mxu0 %v925
      %927 = vmatpush.msra.mxu0 %v924
      %928 = vmatpush.msra.mxu0 %v923
      %929 = vmatpush.msra.mxu0 %v922
      %930 = vmatpush.msra.mxu0 %v921
      %931 = vmatpush.msra.mxu0 %v920
      %932 = vmatpush.msra.mxu0 %v919
      %933 = vmatpush.msra.mxu0 %v918
      %934 = vmatpush.msra.mxu0 %v917
      %935 = vmatpush.msra.mxu0 %v916
      %936 = vmatpush.msra.mxu0 %v915
      %937 = vmatpush.msra.mxu0 %v914
      %938 = vmatpush.msra.mxu0 %v913
      %939 = vmatpush.msra.mxu0 %v912
      %940 = vmatpush.msra.mxu0 %v911
      %941 = vmatpush.msra.mxu0 %v910
      %942 = vmatmul.f32.gmra.mxu0 %v844
      %v943 = vpop.f32.mrf.mxu0
      %v944 = vadd.f32 0.0, %v943
      %945 = vmatmul.f32.gmra.mxu0 %v845
      %v946 = vpop.f32.mrf.mxu0
      %v947 = vadd.f32 0.0, %v946
      %948 = vmatmul.f32.gmra.mxu0 %v846
      %v949 = vpop.f32.mrf.mxu0
      %v950 = vadd.f32 0.0, %v949
      %951 = vmatmul.f32.gmra.mxu0 %v847
      %v952 = vpop.f32.mrf.mxu0
      %v953 = vadd.f32 0.0, %v952
      %954 = vmatmul.f32.gmra.mxu0 %v848
      %v955 = vpop.f32.mrf.mxu0
      %v956 = vadd.f32 0.0, %v955
      %957 = vmatmul.f32.gmra.mxu0 %v849
      %v958 = vpop.f32.mrf.mxu0
      %v959 = vadd.f32 0.0, %v958
      %960 = vmatmul.f32.gmra.mxu0 %v850
      %v961 = vpop.f32.mrf.mxu0
      %v962 = vadd.f32 0.0, %v961
      %963 = vmatmul.f32.gmra.mxu0 %v851
      %v964 = vpop.f32.mrf.mxu0
      %v965 = vadd.f32 0.0, %v964
      %966 = vmatmul.f32.gmra.mxu0 %v852
      %v967 = vpop.f32.mrf.mxu0
      %v968 = vadd.f32 0.0, %v967
      %969 = vmatmul.f32.gmra.mxu0 %v853
      %v970 = vpop.f32.mrf.mxu0
      %v971 = vadd.f32 0.0, %v970
      %972 = vmatmul.f32.gmra.mxu0 %v854
      %v973 = vpop.f32.mrf.mxu0
      %v974 = vadd.f32 0.0, %v973
      %975 = vmatmul.f32.gmra.mxu0 %v855
      %v976 = vpop.f32.mrf.mxu0
      %v977 = vadd.f32 0.0, %v976
      %978 = vmatmul.f32.gmra.mxu0 %v856
      %v979 = vpop.f32.mrf.mxu0
      %v980 = vadd.f32 0.0, %v979
      %981 = vmatmul.f32.gmra.mxu0 %v857
      %v982 = vpop.f32.mrf.mxu0
      %v983 = vadd.f32 0.0, %v982
      %984 = vmatmul.f32.gmra.mxu0 %v858
      %v985 = vpop.f32.mrf.mxu0
      %v986 = vadd.f32 0.0, %v985
      %987 = vmatmul.f32.gmra.mxu0 %v859
      %v988 = vpop.f32.mrf.mxu0
      %v989 = vadd.f32 0.0, %v988
      %990 = vdwg.mxu0
      %991 = vmatpush.msra.mxu0 %v908
      %992 = vmatpush.msra.mxu0 %v907
      %993 = vmatpush.msra.mxu0 %v906
      %994 = vmatpush.msra.mxu0 %v905
      %995 = vmatpush.msra.mxu0 %v904
      %996 = vmatpush.msra.mxu0 %v903
      %997 = vmatpush.msra.mxu0 %v902
      %998 = vmatpush.msra.mxu0 %v901
      %999 = vmatpush.msra.mxu0 %v900
      %1000 = vmatpush.msra.mxu0 %v899
      %1001 = vmatpush.msra.mxu0 %v898
      %1002 = vmatpush.msra.mxu0 %v897
      %1003 = vmatpush.msra.mxu0 %v896
      %1004 = vmatpush.msra.mxu0 %v895
      %1005 = vmatpush.msra.mxu0 %v894
      %1006 = vmatpush.msra.mxu0 %v893
      %1007 = vmatmul.f32.gmra.mxu0 %v828
      %v1008 = vpop.f32.mrf.mxu0
      %v1009 = vadd.f32 %v944, %v1008
      %1010 = vmatmul.f32.gmra.mxu0 %v829
      %v1011 = vpop.f32.mrf.mxu0
      %v1012 = vadd.f32 %v947, %v1011
      %1013 = vmatmul.f32.gmra.mxu0 %v830
      %v1014 = vpop.f32.mrf.mxu0
      %v1015 = vadd.f32 %v950, %v1014
      %1016 = vmatmul.f32.gmra.mxu0 %v831
      %v1017 = vpop.f32.mrf.mxu0
      %v1018 = vadd.f32 %v953, %v1017
      %1019 = vmatmul.f32.gmra.mxu0 %v832
      %v1020 = vpop.f32.mrf.mxu0
      %v1021 = vadd.f32 %v956, %v1020
      %1022 = vmatmul.f32.gmra.mxu0 %v833
      %v1023 = vpop.f32.mrf.mxu0
      %v1024 = vadd.f32 %v959, %v1023
      %1025 = vmatmul.f32.gmra.mxu0 %v834
      %v1026 = vpop.f32.mrf.mxu0
      %v1027 = vadd.f32 %v962, %v1026
      %1028 = vmatmul.f32.gmra.mxu0 %v835
      %v1029 = vpop.f32.mrf.mxu0
      %v1030 = vadd.f32 %v965, %v1029
      %1031 = vmatmul.f32.gmra.mxu0 %v836
      %v1032 = vpop.f32.mrf.mxu0
      %v1033 = vadd.f32 %v968, %v1032
      %1034 = vmatmul.f32.gmra.mxu0 %v837
      %v1035 = vpop.f32.mrf.mxu0
      %v1036 = vadd.f32 %v971, %v1035
      %1037 = vmatmul.f32.gmra.mxu0 %v838
      %v1038 = vpop.f32.mrf.mxu0
      %v1039 = vadd.f32 %v974, %v1038
      %1040 = vmatmul.f32.gmra.mxu0 %v839
      %v1041 = vpop.f32.mrf.mxu0
      %v1042 = vadd.f32 %v977, %v1041
      %1043 = vmatmul.f32.gmra.mxu0 %v840
      %v1044 = vpop.f32.mrf.mxu0
      %v1045 = vadd.f32 %v980, %v1044
      %1046 = vmatmul.f32.gmra.mxu0 %v841
      %v1047 = vpop.f32.mrf.mxu0
      %v1048 = vadd.f32 %v983, %v1047
      %1049 = vmatmul.f32.gmra.mxu0 %v842
      %v1050 = vpop.f32.mrf.mxu0
      %v1051 = vadd.f32 %v986, %v1050
      %1052 = vmatmul.f32.gmra.mxu0 %v843
      %v1053 = vpop.f32.mrf.mxu0
      %v1054 = vadd.f32 %v989, %v1053
      %1055 = vdwg.mxu0
      %s1056 = scalar_lea.vmem %s5, 896
      %v1057 = vld [vmem:[%s1056] sm:$0xff]
      %v1058 = vld [vmem:[%s1056 + $0x8] sm:$0xff]
      %v1059 = vld [vmem:[%s1056 + $0x10] sm:$0xff]
      %v1060 = vld [vmem:[%s1056 + $0x18] sm:$0xff]
      %v1061 = vld [vmem:[%s1056 + $0x20] sm:$0xff]
      %v1062 = vld [vmem:[%s1056 + $0x28] sm:$0xff]
      %v1063 = vld [vmem:[%s1056 + $0x30] sm:$0xff]
      %v1064 = vld [vmem:[%s1056 + $0x38] sm:$0xff]
      %v1065 = vld [vmem:[%s1056 + $0x40] sm:$0xff]
      %v1066 = vld [vmem:[%s1056 + $0x48] sm:$0xff]
      %v1067 = vld [vmem:[%s1056 + $0x50] sm:$0xff]
      %v1068 = vld [vmem:[%s1056 + $0x58] sm:$0xff]
      %v1069 = vld [vmem:[%s1056 + $0x60] sm:$0xff]
      %v1070 = vld [vmem:[%s1056 + $0x68] sm:$0xff]
      %v1071 = vld [vmem:[%s1056 + $0x70] sm:$0xff]
      %v1072 = vld [vmem:[%s1056 + $0x78] sm:$0xff]
      %1073 = vmatpush.msra.mxu0 %v1072
      %1074 = vmatpush.msra.mxu0 %v1071
      %1075 = vmatpush.msra.mxu0 %v1070
      %1076 = vmatpush.msra.mxu0 %v1069
      %1077 = vmatpush.msra.mxu0 %v1068
      %1078 = vmatpush.msra.mxu0 %v1067
      %1079 = vmatpush.msra.mxu0 %v1066
      %1080 = vmatpush.msra.mxu0 %v1065
      %1081 = vmatpush.msra.mxu0 %v1064
      %1082 = vmatpush.msra.mxu0 %v1063
      %1083 = vmatpush.msra.mxu0 %v1062
      %1084 = vmatpush.msra.mxu0 %v1061
      %1085 = vmatpush.msra.mxu0 %v1060
      %1086 = vmatpush.msra.mxu0 %v1059
      %1087 = vmatpush.msra.mxu0 %v1058
      %1088 = vmatpush.msra.mxu0 %v1057
      %1089 = vmatmul.f32.gmra.mxu0 %v860
      %v1090 = vpop.f32.mrf.mxu0
      %v1091 = vadd.f32 0.0, %v1090
      %1092 = vmatmul.f32.gmra.mxu0 %v861
      %v1093 = vpop.f32.mrf.mxu0
      %v1094 = vadd.f32 0.0, %v1093
      %1095 = vmatmul.f32.gmra.mxu0 %v862
      %v1096 = vpop.f32.mrf.mxu0
      %v1097 = vadd.f32 0.0, %v1096
      %1098 = vmatmul.f32.gmra.mxu0 %v863
      %v1099 = vpop.f32.mrf.mxu0
      %v1100 = vadd.f32 0.0, %v1099
      %1101 = vmatmul.f32.gmra.mxu0 %v864
      %v1102 = vpop.f32.mrf.mxu0
      %v1103 = vadd.f32 0.0, %v1102
      %1104 = vmatmul.f32.gmra.mxu0 %v865
      %v1105 = vpop.f32.mrf.mxu0
      %v1106 = vadd.f32 0.0, %v1105
      %1107 = vmatmul.f32.gmra.mxu0 %v866
      %v1108 = vpop.f32.mrf.mxu0
      %v1109 = vadd.f32 0.0, %v1108
      %1110 = vmatmul.f32.gmra.mxu0 %v867
      %v1111 = vpop.f32.mrf.mxu0
      %v1112 = vadd.f32 0.0, %v1111
      %1113 = vmatmul.f32.gmra.mxu0 %v868
      %v1114 = vpop.f32.mrf.mxu0
      %v1115 = vadd.f32 0.0, %v1114
      %1116 = vmatmul.f32.gmra.mxu0 %v869
      %v1117 = vpop.f32.mrf.mxu0
      %v1118 = vadd.f32 0.0, %v1117
      %1119 = vmatmul.f32.gmra.mxu0 %v870
      %v1120 = vpop.f32.mrf.mxu0
      %v1121 = vadd.f32 0.0, %v1120
      %1122 = vmatmul.f32.gmra.mxu0 %v871
      %v1123 = vpop.f32.mrf.mxu0
      %v1124 = vadd.f32 0.0, %v1123
      %1125 = vmatmul.f32.gmra.mxu0 %v872
      %v1126 = vpop.f32.mrf.mxu0
      %v1127 = vadd.f32 0.0, %v1126
      %1128 = vmatmul.f32.gmra.mxu0 %v873
      %v1129 = vpop.f32.mrf.mxu0
      %v1130 = vadd.f32 0.0, %v1129
      %1131 = vmatmul.f32.gmra.mxu0 %v874
      %v1132 = vpop.f32.mrf.mxu0
      %v1133 = vadd.f32 0.0, %v1132
      %1134 = vmatmul.f32.gmra.mxu0 %v875
      %v1135 = vpop.f32.mrf.mxu0
      %v1136 = vadd.f32 0.0, %v1135
      %1137 = vdwg.mxu0
      %v1138 = vadd.f32 %v1009, %v1091
      %v1139 = vadd.f32 %v1012, %v1094
      %v1140 = vadd.f32 %v1015, %v1097
      %v1141 = vadd.f32 %v1018, %v1100
      %v1142 = vadd.f32 %v1021, %v1103
      %v1143 = vadd.f32 %v1024, %v1106
      %v1144 = vadd.f32 %v1027, %v1109
      %v1145 = vadd.f32 %v1030, %v1112
      %v1146 = vadd.f32 %v1033, %v1115
      %v1147 = vadd.f32 %v1036, %v1118
      %v1148 = vadd.f32 %v1039, %v1121
      %v1149 = vadd.f32 %v1042, %v1124
      %v1150 = vadd.f32 %v1045, %v1127
      %v1151 = vadd.f32 %v1048, %v1130
      %v1152 = vadd.f32 %v1051, %v1133
      %v1153 = vadd.f32 %v1054, %v1136
      %s1154 = scalar_lea.vmem %s5, 1024
      %v1155 = vld [vmem:[%s1154] sm:$0xff]
      %v1156 = vld [vmem:[%s1154 + $0x8] sm:$0xff]
      %v1157 = vld [vmem:[%s1154 + $0x10] sm:$0xff]
      %v1158 = vld [vmem:[%s1154 + $0x18] sm:$0xff]
      %v1159 = vld [vmem:[%s1154 + $0x20] sm:$0xff]
      %v1160 = vld [vmem:[%s1154 + $0x28] sm:$0xff]
      %v1161 = vld [vmem:[%s1154 + $0x30] sm:$0xff]
      %v1162 = vld [vmem:[%s1154 + $0x38] sm:$0xff]
      %v1163 = vld [vmem:[%s1154 + $0x40] sm:$0xff]
      %v1164 = vld [vmem:[%s1154 + $0x48] sm:$0xff]
      %v1165 = vld [vmem:[%s1154 + $0x50] sm:$0xff]
      %v1166 = vld [vmem:[%s1154 + $0x58] sm:$0xff]
      %v1167 = vld [vmem:[%s1154 + $0x60] sm:$0xff]
      %v1168 = vld [vmem:[%s1154 + $0x68] sm:$0xff]
      %v1169 = vld [vmem:[%s1154 + $0x70] sm:$0xff]
      %v1170 = vld [vmem:[%s1154 + $0x78] sm:$0xff]
      %1171 = vmatpush.msra.mxu0 %v1170
      %1172 = vmatpush.msra.mxu0 %v1169
      %1173 = vmatpush.msra.mxu0 %v1168
      %1174 = vmatpush.msra.mxu0 %v1167
      %1175 = vmatpush.msra.mxu0 %v1166
      %1176 = vmatpush.msra.mxu0 %v1165
      %1177 = vmatpush.msra.mxu0 %v1164
      %1178 = vmatpush.msra.mxu0 %v1163
      %1179 = vmatpush.msra.mxu0 %v1162
      %1180 = vmatpush.msra.mxu0 %v1161
      %1181 = vmatpush.msra.mxu0 %v1160
      %1182 = vmatpush.msra.mxu0 %v1159
      %1183 = vmatpush.msra.mxu0 %v1158
      %1184 = vmatpush.msra.mxu0 %v1157
      %1185 = vmatpush.msra.mxu0 %v1156
      %1186 = vmatpush.msra.mxu0 %v1155
      %1187 = vmatmul.f32.gmra.mxu0 %v876
      %v1188 = vpop.f32.mrf.mxu0
      %v1189 = vadd.f32 0.0, %v1188
      %1190 = vmatmul.f32.gmra.mxu0 %v877
      %v1191 = vpop.f32.mrf.mxu0
      %v1192 = vadd.f32 0.0, %v1191
      %1193 = vmatmul.f32.gmra.mxu0 %v878
      %v1194 = vpop.f32.mrf.mxu0
      %v1195 = vadd.f32 0.0, %v1194
      %1196 = vmatmul.f32.gmra.mxu0 %v879
      %v1197 = vpop.f32.mrf.mxu0
      %v1198 = vadd.f32 0.0, %v1197
      %1199 = vmatmul.f32.gmra.mxu0 %v880
      %v1200 = vpop.f32.mrf.mxu0
      %v1201 = vadd.f32 0.0, %v1200
      %1202 = vmatmul.f32.gmra.mxu0 %v881
      %v1203 = vpop.f32.mrf.mxu0
      %v1204 = vadd.f32 0.0, %v1203
      %1205 = vmatmul.f32.gmra.mxu0 %v882
      %v1206 = vpop.f32.mrf.mxu0
      %v1207 = vadd.f32 0.0, %v1206
      %1208 = vmatmul.f32.gmra.mxu0 %v883
      %v1209 = vpop.f32.mrf.mxu0
      %v1210 = vadd.f32 0.0, %v1209
      %1211 = vmatmul.f32.gmra.mxu0 %v884
      %v1212 = vpop.f32.mrf.mxu0
      %v1213 = vadd.f32 0.0, %v1212
      %1214 = vmatmul.f32.gmra.mxu0 %v885
      %v1215 = vpop.f32.mrf.mxu0
      %v1216 = vadd.f32 0.0, %v1215
      %1217 = vmatmul.f32.gmra.mxu0 %v886
      %v1218 = vpop.f32.mrf.mxu0
      %v1219 = vadd.f32 0.0, %v1218
      %1220 = vmatmul.f32.gmra.mxu0 %v887
      %v1221 = vpop.f32.mrf.mxu0
      %v1222 = vadd.f32 0.0, %v1221
      %1223 = vmatmul.f32.gmra.mxu0 %v888
      %v1224 = vpop.f32.mrf.mxu0
      %v1225 = vadd.f32 0.0, %v1224
      %1226 = vmatmul.f32.gmra.mxu0 %v889
      %v1227 = vpop.f32.mrf.mxu0
      %v1228 = vadd.f32 0.0, %v1227
      %1229 = vmatmul.f32.gmra.mxu0 %v890
      %v1230 = vpop.f32.mrf.mxu0
      %v1231 = vadd.f32 0.0, %v1230
      %1232 = vmatmul.f32.gmra.mxu0 %v891
      %v1233 = vpop.f32.mrf.mxu0
      %v1234 = vadd.f32 0.0, %v1233
      %1235 = vdwg.mxu0
      %v1236 = vadd.f32 %v1138, %v1189
      %v1237 = vadd.f32 %v1139, %v1192
      %v1238 = vadd.f32 %v1140, %v1195
      %v1239 = vadd.f32 %v1141, %v1198
      %v1240 = vadd.f32 %v1142, %v1201
      %v1241 = vadd.f32 %v1143, %v1204
      %v1242 = vadd.f32 %v1144, %v1207
      %v1243 = vadd.f32 %v1145, %v1210
      %v1244 = vadd.f32 %v1146, %v1213
      %v1245 = vadd.f32 %v1147, %v1216
      %v1246 = vadd.f32 %v1148, %v1219
      %v1247 = vadd.f32 %v1149, %v1222
      %v1248 = vadd.f32 %v1150, %v1225
      %v1249 = vadd.f32 %v1151, %v1228
      %v1250 = vadd.f32 %v1152, %v1231
      %v1251 = vadd.f32 %v1153, %v1234
      %s1252 = scalar_lea.vmem %s5, 384
      %v1253 = vld [vmem:[%s1252] sm:$0xff]
      %v1254 = vld [vmem:[%s1252 + $0x8] sm:$0xff]
      %v1255 = vld [vmem:[%s1252 + $0x10] sm:$0xff]
      %v1256 = vld [vmem:[%s1252 + $0x18] sm:$0xff]
      %v1257 = vld [vmem:[%s1252 + $0x20] sm:$0xff]
      %v1258 = vld [vmem:[%s1252 + $0x28] sm:$0xff]
      %v1259 = vld [vmem:[%s1252 + $0x30] sm:$0xff]
      %v1260 = vld [vmem:[%s1252 + $0x38] sm:$0xff]
      %v1261 = vld [vmem:[%s1252 + $0x40] sm:$0xff]
      %v1262 = vld [vmem:[%s1252 + $0x48] sm:$0xff]
      %v1263 = vld [vmem:[%s1252 + $0x50] sm:$0xff]
      %v1264 = vld [vmem:[%s1252 + $0x58] sm:$0xff]
      %v1265 = vld [vmem:[%s1252 + $0x60] sm:$0xff]
      %v1266 = vld [vmem:[%s1252 + $0x68] sm:$0xff]
      %v1267 = vld [vmem:[%s1252 + $0x70] sm:$0xff]
      %v1268 = vld [vmem:[%s1252 + $0x78] sm:$0xff]
      %s1269 = scalar_lea.vmem %s5, 768
      %v1270 = vld [vmem:[%s1269] sm:$0xff]
      %v1271 = vld [vmem:[%s1269 + $0x8] sm:$0xff]
      %v1272 = vld [vmem:[%s1269 + $0x10] sm:$0xff]
      %v1273 = vld [vmem:[%s1269 + $0x18] sm:$0xff]
      %v1274 = vld [vmem:[%s1269 + $0x20] sm:$0xff]
      %v1275 = vld [vmem:[%s1269 + $0x28] sm:$0xff]
      %v1276 = vld [vmem:[%s1269 + $0x30] sm:$0xff]
      %v1277 = vld [vmem:[%s1269 + $0x38] sm:$0xff]
      %v1278 = vld [vmem:[%s1269 + $0x40] sm:$0xff]
      %v1279 = vld [vmem:[%s1269 + $0x48] sm:$0xff]
      %v1280 = vld [vmem:[%s1269 + $0x50] sm:$0xff]
      %v1281 = vld [vmem:[%s1269 + $0x58] sm:$0xff]
      %v1282 = vld [vmem:[%s1269 + $0x60] sm:$0xff]
      %v1283 = vld [vmem:[%s1269 + $0x68] sm:$0xff]
      %v1284 = vld [vmem:[%s1269 + $0x70] sm:$0xff]
      %v1285 = vld [vmem:[%s1269 + $0x78] sm:$0xff]
      %1286 = vmatpush.msra.mxu0 %v1285
      %1287 = vmatpush.msra.mxu0 %v1284
      %1288 = vmatpush.msra.mxu0 %v1283
      %1289 = vmatpush.msra.mxu0 %v1282
      %1290 = vmatpush.msra.mxu0 %v1281
      %1291 = vmatpush.msra.mxu0 %v1280
      %1292 = vmatpush.msra.mxu0 %v1279
      %1293 = vmatpush.msra.mxu0 %v1278
      %1294 = vmatpush.msra.mxu0 %v1277
      %1295 = vmatpush.msra.mxu0 %v1276
      %1296 = vmatpush.msra.mxu0 %v1275
      %1297 = vmatpush.msra.mxu0 %v1274
      %1298 = vmatpush.msra.mxu0 %v1273
      %1299 = vmatpush.msra.mxu0 %v1272
      %1300 = vmatpush.msra.mxu0 %v1271
      %1301 = vmatpush.msra.mxu0 %v1270
      %1302 = vmatmul.f32.gmra.mxu0 %v876
      %v1303 = vpop.f32.mrf.mxu0
      %v1304 = vadd.f32 0.0, %v1303
      %1305 = vmatmul.f32.gmra.mxu0 %v877
      %v1306 = vpop.f32.mrf.mxu0
      %v1307 = vadd.f32 0.0, %v1306
      %1308 = vmatmul.f32.gmra.mxu0 %v878
      %v1309 = vpop.f32.mrf.mxu0
      %v1310 = vadd.f32 0.0, %v1309
      %1311 = vmatmul.f32.gmra.mxu0 %v879
      %v1312 = vpop.f32.mrf.mxu0
      %v1313 = vadd.f32 0.0, %v1312
      %1314 = vmatmul.f32.gmra.mxu0 %v880
      %v1315 = vpop.f32.mrf.mxu0
      %v1316 = vadd.f32 0.0, %v1315
      %1317 = vmatmul.f32.gmra.mxu0 %v881
      %v1318 = vpop.f32.mrf.mxu0
      %v1319 = vadd.f32 0.0, %v1318
      %1320 = vmatmul.f32.gmra.mxu0 %v882
      %v1321 = vpop.f32.mrf.mxu0
      %v1322 = vadd.f32 0.0, %v1321
      %1323 = vmatmul.f32.gmra.mxu0 %v883
      %v1324 = vpop.f32.mrf.mxu0
      %v1325 = vadd.f32 0.0, %v1324
      %1326 = vmatmul.f32.gmra.mxu0 %v884
      %v1327 = vpop.f32.mrf.mxu0
      %v1328 = vadd.f32 0.0, %v1327
      %1329 = vmatmul.f32.gmra.mxu0 %v885
      %v1330 = vpop.f32.mrf.mxu0
      %v1331 = vadd.f32 0.0, %v1330
      %1332 = vmatmul.f32.gmra.mxu0 %v886
      %v1333 = vpop.f32.mrf.mxu0
      %v1334 = vadd.f32 0.0, %v1333
      %1335 = vmatmul.f32.gmra.mxu0 %v887
      %v1336 = vpop.f32.mrf.mxu0
      %v1337 = vadd.f32 0.0, %v1336
      %1338 = vmatmul.f32.gmra.mxu0 %v888
      %v1339 = vpop.f32.mrf.mxu0
      %v1340 = vadd.f32 0.0, %v1339
      %1341 = vmatmul.f32.gmra.mxu0 %v889
      %v1342 = vpop.f32.mrf.mxu0
      %v1343 = vadd.f32 0.0, %v1342
      %1344 = vmatmul.f32.gmra.mxu0 %v890
      %v1345 = vpop.f32.mrf.mxu0
      %v1346 = vadd.f32 0.0, %v1345
      %1347 = vmatmul.f32.gmra.mxu0 %v891
      %v1348 = vpop.f32.mrf.mxu0
      %v1349 = vadd.f32 0.0, %v1348
      %1350 = vdwg.mxu0
      %1351 = vmatpush.msra.mxu0 %v1268
      %1352 = vmatpush.msra.mxu0 %v1267
      %1353 = vmatpush.msra.mxu0 %v1266
      %1354 = vmatpush.msra.mxu0 %v1265
      %1355 = vmatpush.msra.mxu0 %v1264
      %1356 = vmatpush.msra.mxu0 %v1263
      %1357 = vmatpush.msra.mxu0 %v1262
      %1358 = vmatpush.msra.mxu0 %v1261
      %1359 = vmatpush.msra.mxu0 %v1260
      %1360 = vmatpush.msra.mxu0 %v1259
      %1361 = vmatpush.msra.mxu0 %v1258
      %1362 = vmatpush.msra.mxu0 %v1257
      %1363 = vmatpush.msra.mxu0 %v1256
      %1364 = vmatpush.msra.mxu0 %v1255
      %1365 = vmatpush.msra.mxu0 %v1254
      %1366 = vmatpush.msra.mxu0 %v1253
      %1367 = vmatmul.f32.gmra.mxu0 %v844
      %v1368 = vpop.f32.mrf.mxu0
      %v1369 = vadd.f32 %v1304, %v1368
      %1370 = vmatmul.f32.gmra.mxu0 %v845
      %v1371 = vpop.f32.mrf.mxu0
      %v1372 = vadd.f32 %v1307, %v1371
      %1373 = vmatmul.f32.gmra.mxu0 %v846
      %v1374 = vpop.f32.mrf.mxu0
      %v1375 = vadd.f32 %v1310, %v1374
      %1376 = vmatmul.f32.gmra.mxu0 %v847
      %v1377 = vpop.f32.mrf.mxu0
      %v1378 = vadd.f32 %v1313, %v1377
      %1379 = vmatmul.f32.gmra.mxu0 %v848
      %v1380 = vpop.f32.mrf.mxu0
      %v1381 = vadd.f32 %v1316, %v1380
      %1382 = vmatmul.f32.gmra.mxu0 %v849
      %v1383 = vpop.f32.mrf.mxu0
      %v1384 = vadd.f32 %v1319, %v1383
      %1385 = vmatmul.f32.gmra.mxu0 %v850
      %v1386 = vpop.f32.mrf.mxu0
      %v1387 = vadd.f32 %v1322, %v1386
      %1388 = vmatmul.f32.gmra.mxu0 %v851
      %v1389 = vpop.f32.mrf.mxu0
      %v1390 = vadd.f32 %v1325, %v1389
      %1391 = vmatmul.f32.gmra.mxu0 %v852
      %v1392 = vpop.f32.mrf.mxu0
      %v1393 = vadd.f32 %v1328, %v1392
      %1394 = vmatmul.f32.gmra.mxu0 %v853
      %v1395 = vpop.f32.mrf.mxu0
      %v1396 = vadd.f32 %v1331, %v1395
      %1397 = vmatmul.f32.gmra.mxu0 %v854
      %v1398 = vpop.f32.mrf.mxu0
      %v1399 = vadd.f32 %v1334, %v1398
      %1400 = vmatmul.f32.gmra.mxu0 %v855
      %v1401 = vpop.f32.mrf.mxu0
      %v1402 = vadd.f32 %v1337, %v1401
      %1403 = vmatmul.f32.gmra.mxu0 %v856
      %v1404 = vpop.f32.mrf.mxu0
      %v1405 = vadd.f32 %v1340, %v1404
      %1406 = vmatmul.f32.gmra.mxu0 %v857
      %v1407 = vpop.f32.mrf.mxu0
      %v1408 = vadd.f32 %v1343, %v1407
      %1409 = vmatmul.f32.gmra.mxu0 %v858
      %v1410 = vpop.f32.mrf.mxu0
      %v1411 = vadd.f32 %v1346, %v1410
      %1412 = vmatmul.f32.gmra.mxu0 %v859
      %v1413 = vpop.f32.mrf.mxu0
      %v1414 = vadd.f32 %v1349, %v1413
      %1415 = vdwg.mxu0
      %s1416 = scalar_lea.vmem %s5, 128
      %v1417 = vld [vmem:[%s1416] sm:$0xff]
      %v1418 = vld [vmem:[%s1416 + $0x8] sm:$0xff]
      %v1419 = vld [vmem:[%s1416 + $0x10] sm:$0xff]
      %v1420 = vld [vmem:[%s1416 + $0x18] sm:$0xff]
      %v1421 = vld [vmem:[%s1416 + $0x20] sm:$0xff]
      %v1422 = vld [vmem:[%s1416 + $0x28] sm:$0xff]
      %v1423 = vld [vmem:[%s1416 + $0x30] sm:$0xff]
      %v1424 = vld [vmem:[%s1416 + $0x38] sm:$0xff]
      %v1425 = vld [vmem:[%s1416 + $0x40] sm:$0xff]
      %v1426 = vld [vmem:[%s1416 + $0x48] sm:$0xff]
      %v1427 = vld [vmem:[%s1416 + $0x50] sm:$0xff]
      %v1428 = vld [vmem:[%s1416 + $0x58] sm:$0xff]
      %v1429 = vld [vmem:[%s1416 + $0x60] sm:$0xff]
      %v1430 = vld [vmem:[%s1416 + $0x68] sm:$0xff]
      %v1431 = vld [vmem:[%s1416 + $0x70] sm:$0xff]
      %v1432 = vld [vmem:[%s1416 + $0x78] sm:$0xff]
      %s1433 = scalar_lea.vmem %s5, 256
      %v1434 = vld [vmem:[%s1433] sm:$0xff]
      %v1435 = vld [vmem:[%s1433 + $0x8] sm:$0xff]
      %v1436 = vld [vmem:[%s1433 + $0x10] sm:$0xff]
      %v1437 = vld [vmem:[%s1433 + $0x18] sm:$0xff]
      %v1438 = vld [vmem:[%s1433 + $0x20] sm:$0xff]
      %v1439 = vld [vmem:[%s1433 + $0x28] sm:$0xff]
      %v1440 = vld [vmem:[%s1433 + $0x30] sm:$0xff]
      %v1441 = vld [vmem:[%s1433 + $0x38] sm:$0xff]
      %v1442 = vld [vmem:[%s1433 + $0x40] sm:$0xff]
      %v1443 = vld [vmem:[%s1433 + $0x48] sm:$0xff]
      %v1444 = vld [vmem:[%s1433 + $0x50] sm:$0xff]
      %v1445 = vld [vmem:[%s1433 + $0x58] sm:$0xff]
      %v1446 = vld [vmem:[%s1433 + $0x60] sm:$0xff]
      %v1447 = vld [vmem:[%s1433 + $0x68] sm:$0xff]
      %v1448 = vld [vmem:[%s1433 + $0x70] sm:$0xff]
      %v1449 = vld [vmem:[%s1433 + $0x78] sm:$0xff]
      %1450 = vmatpush.msra.mxu0 %v1449
      %1451 = vmatpush.msra.mxu0 %v1448
      %1452 = vmatpush.msra.mxu0 %v1447
      %1453 = vmatpush.msra.mxu0 %v1446
      %1454 = vmatpush.msra.mxu0 %v1445
      %1455 = vmatpush.msra.mxu0 %v1444
      %1456 = vmatpush.msra.mxu0 %v1443
      %1457 = vmatpush.msra.mxu0 %v1442
      %1458 = vmatpush.msra.mxu0 %v1441
      %1459 = vmatpush.msra.mxu0 %v1440
      %1460 = vmatpush.msra.mxu0 %v1439
      %1461 = vmatpush.msra.mxu0 %v1438
      %1462 = vmatpush.msra.mxu0 %v1437
      %1463 = vmatpush.msra.mxu0 %v1436
      %1464 = vmatpush.msra.mxu0 %v1435
      %1465 = vmatpush.msra.mxu0 %v1434
      %1466 = vmatmul.f32.gmra.mxu0 %v876
      %v1467 = vpop.f32.mrf.mxu0
      %v1468 = vadd.f32 0.0, %v1467
      %1469 = vmatmul.f32.gmra.mxu0 %v877
      %v1470 = vpop.f32.mrf.mxu0
      %v1471 = vadd.f32 0.0, %v1470
      %1472 = vmatmul.f32.gmra.mxu0 %v878
      %v1473 = vpop.f32.mrf.mxu0
      %v1474 = vadd.f32 0.0, %v1473
      %1475 = vmatmul.f32.gmra.mxu0 %v879
      %v1476 = vpop.f32.mrf.mxu0
      %v1477 = vadd.f32 0.0, %v1476
      %1478 = vmatmul.f32.gmra.mxu0 %v880
      %v1479 = vpop.f32.mrf.mxu0
      %v1480 = vadd.f32 0.0, %v1479
      %1481 = vmatmul.f32.gmra.mxu0 %v881
      %v1482 = vpop.f32.mrf.mxu0
      %v1483 = vadd.f32 0.0, %v1482
      %1484 = vmatmul.f32.gmra.mxu0 %v882
      %v1485 = vpop.f32.mrf.mxu0
      %v1486 = vadd.f32 0.0, %v1485
      %1487 = vmatmul.f32.gmra.mxu0 %v883
      %v1488 = vpop.f32.mrf.mxu0
      %v1489 = vadd.f32 0.0, %v1488
      %1490 = vmatmul.f32.gmra.mxu0 %v884
      %v1491 = vpop.f32.mrf.mxu0
      %v1492 = vadd.f32 0.0, %v1491
      %1493 = vmatmul.f32.gmra.mxu0 %v885
      %v1494 = vpop.f32.mrf.mxu0
      %v1495 = vadd.f32 0.0, %v1494
      %1496 = vmatmul.f32.gmra.mxu0 %v886
      %v1497 = vpop.f32.mrf.mxu0
      %v1498 = vadd.f32 0.0, %v1497
      %1499 = vmatmul.f32.gmra.mxu0 %v887
      %v1500 = vpop.f32.mrf.mxu0
      %v1501 = vadd.f32 0.0, %v1500
      %1502 = vmatmul.f32.gmra.mxu0 %v888
      %v1503 = vpop.f32.mrf.mxu0
      %v1504 = vadd.f32 0.0, %v1503
      %1505 = vmatmul.f32.gmra.mxu0 %v889
      %v1506 = vpop.f32.mrf.mxu0
      %v1507 = vadd.f32 0.0, %v1506
      %1508 = vmatmul.f32.gmra.mxu0 %v890
      %v1509 = vpop.f32.mrf.mxu0
      %v1510 = vadd.f32 0.0, %v1509
      %1511 = vmatmul.f32.gmra.mxu0 %v891
      %v1512 = vpop.f32.mrf.mxu0
      %v1513 = vadd.f32 0.0, %v1512
      %1514 = vdwg.mxu0
      %1515 = vmatpush.msra.mxu0 %v1432
      %1516 = vmatpush.msra.mxu0 %v1431
      %1517 = vmatpush.msra.mxu0 %v1430
      %1518 = vmatpush.msra.mxu0 %v1429
      %1519 = vmatpush.msra.mxu0 %v1428
      %1520 = vmatpush.msra.mxu0 %v1427
      %1521 = vmatpush.msra.mxu0 %v1426
      %1522 = vmatpush.msra.mxu0 %v1425
      %1523 = vmatpush.msra.mxu0 %v1424
      %1524 = vmatpush.msra.mxu0 %v1423
      %1525 = vmatpush.msra.mxu0 %v1422
      %1526 = vmatpush.msra.mxu0 %v1421
      %1527 = vmatpush.msra.mxu0 %v1420
      %1528 = vmatpush.msra.mxu0 %v1419
      %1529 = vmatpush.msra.mxu0 %v1418
      %1530 = vmatpush.msra.mxu0 %v1417
      %1531 = vmatmul.f32.gmra.mxu0 %v860
      %v1532 = vpop.f32.mrf.mxu0
      %v1533 = vadd.f32 %v1468, %v1532
      %1534 = vmatmul.f32.gmra.mxu0 %v861
      %v1535 = vpop.f32.mrf.mxu0
      %v1536 = vadd.f32 %v1471, %v1535
      %1537 = vmatmul.f32.gmra.mxu0 %v862
      %v1538 = vpop.f32.mrf.mxu0
      %v1539 = vadd.f32 %v1474, %v1538
      %1540 = vmatmul.f32.gmra.mxu0 %v863
      %v1541 = vpop.f32.mrf.mxu0
      %v1542 = vadd.f32 %v1477, %v1541
      %1543 = vmatmul.f32.gmra.mxu0 %v864
      %v1544 = vpop.f32.mrf.mxu0
      %v1545 = vadd.f32 %v1480, %v1544
      %1546 = vmatmul.f32.gmra.mxu0 %v865
      %v1547 = vpop.f32.mrf.mxu0
      %v1548 = vadd.f32 %v1483, %v1547
      %1549 = vmatmul.f32.gmra.mxu0 %v866
      %v1550 = vpop.f32.mrf.mxu0
      %v1551 = vadd.f32 %v1486, %v1550
      %1552 = vmatmul.f32.gmra.mxu0 %v867
      %v1553 = vpop.f32.mrf.mxu0
      %v1554 = vadd.f32 %v1489, %v1553
      %1555 = vmatmul.f32.gmra.mxu0 %v868
      %v1556 = vpop.f32.mrf.mxu0
      %v1557 = vadd.f32 %v1492, %v1556
      %1558 = vmatmul.f32.gmra.mxu0 %v869
      %v1559 = vpop.f32.mrf.mxu0
      %v1560 = vadd.f32 %v1495, %v1559
      %1561 = vmatmul.f32.gmra.mxu0 %v870
      %v1562 = vpop.f32.mrf.mxu0
      %v1563 = vadd.f32 %v1498, %v1562
      %1564 = vmatmul.f32.gmra.mxu0 %v871
      %v1565 = vpop.f32.mrf.mxu0
      %v1566 = vadd.f32 %v1501, %v1565
      %1567 = vmatmul.f32.gmra.mxu0 %v872
      %v1568 = vpop.f32.mrf.mxu0
      %v1569 = vadd.f32 %v1504, %v1568
      %1570 = vmatmul.f32.gmra.mxu0 %v873
      %v1571 = vpop.f32.mrf.mxu0
      %v1572 = vadd.f32 %v1507, %v1571
      %1573 = vmatmul.f32.gmra.mxu0 %v874
      %v1574 = vpop.f32.mrf.mxu0
      %v1575 = vadd.f32 %v1510, %v1574
      %1576 = vmatmul.f32.gmra.mxu0 %v875
      %v1577 = vpop.f32.mrf.mxu0
      %v1578 = vadd.f32 %v1513, %v1577
      %1579 = vdwg.mxu0
      %v1580 = vld [vmem:[%s5] sm:$0xff]
      %v1581 = vld [vmem:[%s5 + $0x8] sm:$0xff]
      %v1582 = vld [vmem:[%s5 + $0x10] sm:$0xff]
      %v1583 = vld [vmem:[%s5 + $0x18] sm:$0xff]
      %v1584 = vld [vmem:[%s5 + $0x20] sm:$0xff]
      %v1585 = vld [vmem:[%s5 + $0x28] sm:$0xff]
      %v1586 = vld [vmem:[%s5 + $0x30] sm:$0xff]
      %v1587 = vld [vmem:[%s5 + $0x38] sm:$0xff]
      %v1588 = vld [vmem:[%s5 + $0x40] sm:$0xff]
      %v1589 = vld [vmem:[%s5 + $0x48] sm:$0xff]
      %v1590 = vld [vmem:[%s5 + $0x50] sm:$0xff]
      %v1591 = vld [vmem:[%s5 + $0x58] sm:$0xff]
      %v1592 = vld [vmem:[%s5 + $0x60] sm:$0xff]
      %v1593 = vld [vmem:[%s5 + $0x68] sm:$0xff]
      %v1594 = vld [vmem:[%s5 + $0x70] sm:$0xff]
      %v1595 = vld [vmem:[%s5 + $0x78] sm:$0xff]
      %1596 = vmatpush.msra.mxu0 %v1595
      %1597 = vmatpush.msra.mxu0 %v1594
      %1598 = vmatpush.msra.mxu0 %v1593
      %1599 = vmatpush.msra.mxu0 %v1592
      %1600 = vmatpush.msra.mxu0 %v1591
      %1601 = vmatpush.msra.mxu0 %v1590
      %1602 = vmatpush.msra.mxu0 %v1589
      %1603 = vmatpush.msra.mxu0 %v1588
      %1604 = vmatpush.msra.mxu0 %v1587
      %1605 = vmatpush.msra.mxu0 %v1586
      %1606 = vmatpush.msra.mxu0 %v1585
      %1607 = vmatpush.msra.mxu0 %v1584
      %1608 = vmatpush.msra.mxu0 %v1583
      %1609 = vmatpush.msra.mxu0 %v1582
      %1610 = vmatpush.msra.mxu0 %v1581
      %1611 = vmatpush.msra.mxu0 %v1580
      %1612 = vmatmul.f32.gmra.mxu0 %v876
      %v1613 = vpop.f32.mrf.mxu0
      %v1614 = vadd.f32 0.0, %v1613
      %1615 = vmatmul.f32.gmra.mxu0 %v877
      %v1616 = vpop.f32.mrf.mxu0
      %v1617 = vadd.f32 0.0, %v1616
      %1618 = vmatmul.f32.gmra.mxu0 %v878
      %v1619 = vpop.f32.mrf.mxu0
      %v1620 = vadd.f32 0.0, %v1619
      %1621 = vmatmul.f32.gmra.mxu0 %v879
      %v1622 = vpop.f32.mrf.mxu0
      %v1623 = vadd.f32 0.0, %v1622
      %1624 = vmatmul.f32.gmra.mxu0 %v880
      %v1625 = vpop.f32.mrf.mxu0
      %v1626 = vadd.f32 0.0, %v1625
      %1627 = vmatmul.f32.gmra.mxu0 %v881
      %v1628 = vpop.f32.mrf.mxu0
      %v1629 = vadd.f32 0.0, %v1628
      %1630 = vmatmul.f32.gmra.mxu0 %v882
      %v1631 = vpop.f32.mrf.mxu0
      %v1632 = vadd.f32 0.0, %v1631
      %1633 = vmatmul.f32.gmra.mxu0 %v883
      %v1634 = vpop.f32.mrf.mxu0
      %v1635 = vadd.f32 0.0, %v1634
      %1636 = vmatmul.f32.gmra.mxu0 %v884
      %v1637 = vpop.f32.mrf.mxu0
      %v1638 = vadd.f32 0.0, %v1637
      %1639 = vmatmul.f32.gmra.mxu0 %v885
      %v1640 = vpop.f32.mrf.mxu0
      %v1641 = vadd.f32 0.0, %v1640
      %1642 = vmatmul.f32.gmra.mxu0 %v886
      %v1643 = vpop.f32.mrf.mxu0
      %v1644 = vadd.f32 0.0, %v1643
      %1645 = vmatmul.f32.gmra.mxu0 %v887
      %v1646 = vpop.f32.mrf.mxu0
      %v1647 = vadd.f32 0.0, %v1646
      %1648 = vmatmul.f32.gmra.mxu0 %v888
      %v1649 = vpop.f32.mrf.mxu0
      %v1650 = vadd.f32 0.0, %v1649
      %1651 = vmatmul.f32.gmra.mxu0 %v889
      %v1652 = vpop.f32.mrf.mxu0
      %v1653 = vadd.f32 0.0, %v1652
      %1654 = vmatmul.f32.gmra.mxu0 %v890
      %v1655 = vpop.f32.mrf.mxu0
      %v1656 = vadd.f32 0.0, %v1655
      %1657 = vmatmul.f32.gmra.mxu0 %v891
      %v1658 = vpop.f32.mrf.mxu0
      %v1659 = vadd.f32 0.0, %v1658
      %1660 = vdwg.mxu0
      %v1661 = vld [vmem:[%s2] sm:$0xff]
      %v1662 = vld [vmem:[%s2 + $0x8] sm:$0xff]
      %v1663 = vld [vmem:[%s2 + $0x10] sm:$0xff]
      %v1664 = vld [vmem:[%s2 + $0x18] sm:$0xff]
      %v1665 = vld [vmem:[%s2 + $0x20] sm:$0xff]
      %v1666 = vld [vmem:[%s2 + $0x28] sm:$0xff]
      %v1667 = vld [vmem:[%s2 + $0x30] sm:$0xff]
      %v1668 = vld [vmem:[%s2 + $0x38] sm:$0xff]
      %v1669 = vld [vmem:[%s2 + $0x40] sm:$0xff]
      %v1670 = vld [vmem:[%s2 + $0x48] sm:$0xff]
      %v1671 = vld [vmem:[%s2 + $0x50] sm:$0xff]
      %v1672 = vld [vmem:[%s2 + $0x58] sm:$0xff]
      %v1673 = vld [vmem:[%s2 + $0x60] sm:$0xff]
      %v1674 = vld [vmem:[%s2 + $0x68] sm:$0xff]
      %v1675 = vld [vmem:[%s2 + $0x70] sm:$0xff]
      %v1676 = vld [vmem:[%s2 + $0x78] sm:$0xff]
      %1677 = vmatpush.msra.mxu0 %v1414
      %1678 = vmatpush.msra.mxu0 %v1411
      %1679 = vmatpush.msra.mxu0 %v1408
      %1680 = vmatpush.msra.mxu0 %v1405
      %1681 = vmatpush.msra.mxu0 %v1402
      %1682 = vmatpush.msra.mxu0 %v1399
      %1683 = vmatpush.msra.mxu0 %v1396
      %1684 = vmatpush.msra.mxu0 %v1393
      %1685 = vmatpush.msra.mxu0 %v1390
      %1686 = vmatpush.msra.mxu0 %v1387
      %1687 = vmatpush.msra.mxu0 %v1384
      %1688 = vmatpush.msra.mxu0 %v1381
      %1689 = vmatpush.msra.mxu0 %v1378
      %1690 = vmatpush.msra.mxu0 %v1375
      %1691 = vmatpush.msra.mxu0 %v1372
      %1692 = vmatpush.msra.mxu0 %v1369
      %1693 = vmatmul.f32.gmra.mxu0 %v1661
      %v1694 = vpop.f32.mrf.mxu0
      %v1695 = vadd.f32 0.0, %v1694
      %1696 = vmatmul.f32.gmra.mxu0 %v1662
      %v1697 = vpop.f32.mrf.mxu0
      %v1698 = vadd.f32 0.0, %v1697
      %1699 = vmatmul.f32.gmra.mxu0 %v1663
      %v1700 = vpop.f32.mrf.mxu0
      %v1701 = vadd.f32 0.0, %v1700
      %1702 = vmatmul.f32.gmra.mxu0 %v1664
      %v1703 = vpop.f32.mrf.mxu0
      %v1704 = vadd.f32 0.0, %v1703
      %1705 = vmatmul.f32.gmra.mxu0 %v1665
      %v1706 = vpop.f32.mrf.mxu0
      %v1707 = vadd.f32 0.0, %v1706
      %1708 = vmatmul.f32.gmra.mxu0 %v1666
      %v1709 = vpop.f32.mrf.mxu0
      %v1710 = vadd.f32 0.0, %v1709
      %1711 = vmatmul.f32.gmra.mxu0 %v1667
      %v1712 = vpop.f32.mrf.mxu0
      %v1713 = vadd.f32 0.0, %v1712
      %1714 = vmatmul.f32.gmra.mxu0 %v1668
      %v1715 = vpop.f32.mrf.mxu0
      %v1716 = vadd.f32 0.0, %v1715
      %1717 = vmatmul.f32.gmra.mxu0 %v1669
      %v1718 = vpop.f32.mrf.mxu0
      %v1719 = vadd.f32 0.0, %v1718
      %1720 = vmatmul.f32.gmra.mxu0 %v1670
      %v1721 = vpop.f32.mrf.mxu0
      %v1722 = vadd.f32 0.0, %v1721
      %1723 = vmatmul.f32.gmra.mxu0 %v1671
      %v1724 = vpop.f32.mrf.mxu0
      %v1725 = vadd.f32 0.0, %v1724
      %1726 = vmatmul.f32.gmra.mxu0 %v1672
      %v1727 = vpop.f32.mrf.mxu0
      %v1728 = vadd.f32 0.0, %v1727
      %1729 = vmatmul.f32.gmra.mxu0 %v1673
      %v1730 = vpop.f32.mrf.mxu0
      %v1731 = vadd.f32 0.0, %v1730
      %1732 = vmatmul.f32.gmra.mxu0 %v1674
      %v1733 = vpop.f32.mrf.mxu0
      %v1734 = vadd.f32 0.0, %v1733
      %1735 = vmatmul.f32.gmra.mxu0 %v1675
      %v1736 = vpop.f32.mrf.mxu0
      %v1737 = vadd.f32 0.0, %v1736
      %1738 = vmatmul.f32.gmra.mxu0 %v1676
      %v1739 = vpop.f32.mrf.mxu0
      %v1740 = vadd.f32 0.0, %v1739
      %1741 = vdwg.mxu0
      %v1742 = vadd.f32 %v1236, %v1695
      %v1743 = vadd.f32 %v1237, %v1698
      %v1744 = vadd.f32 %v1238, %v1701
      %v1745 = vadd.f32 %v1239, %v1704
      %v1746 = vadd.f32 %v1240, %v1707
      %v1747 = vadd.f32 %v1241, %v1710
      %v1748 = vadd.f32 %v1242, %v1713
      %v1749 = vadd.f32 %v1243, %v1716
      %v1750 = vadd.f32 %v1244, %v1719
      %v1751 = vadd.f32 %v1245, %v1722
      %v1752 = vadd.f32 %v1246, %v1725
      %v1753 = vadd.f32 %v1247, %v1728
      %v1754 = vadd.f32 %v1248, %v1731
      %v1755 = vadd.f32 %v1249, %v1734
      %v1756 = vadd.f32 %v1250, %v1737
      %v1757 = vadd.f32 %v1251, %v1740
      %s1758 = scalar_lea.vmem %s2, 128
      %v1759 = vld [vmem:[%s1758] sm:$0xff]
      %v1760 = vld [vmem:[%s1758 + $0x8] sm:$0xff]
      %v1761 = vld [vmem:[%s1758 + $0x10] sm:$0xff]
      %v1762 = vld [vmem:[%s1758 + $0x18] sm:$0xff]
      %v1763 = vld [vmem:[%s1758 + $0x20] sm:$0xff]
      %v1764 = vld [vmem:[%s1758 + $0x28] sm:$0xff]
      %v1765 = vld [vmem:[%s1758 + $0x30] sm:$0xff]
      %v1766 = vld [vmem:[%s1758 + $0x38] sm:$0xff]
      %v1767 = vld [vmem:[%s1758 + $0x40] sm:$0xff]
      %v1768 = vld [vmem:[%s1758 + $0x48] sm:$0xff]
      %v1769 = vld [vmem:[%s1758 + $0x50] sm:$0xff]
      %v1770 = vld [vmem:[%s1758 + $0x58] sm:$0xff]
      %v1771 = vld [vmem:[%s1758 + $0x60] sm:$0xff]
      %v1772 = vld [vmem:[%s1758 + $0x68] sm:$0xff]
      %v1773 = vld [vmem:[%s1758 + $0x70] sm:$0xff]
      %v1774 = vld [vmem:[%s1758 + $0x78] sm:$0xff]
      %1775 = vmatpush.msra.mxu0 %v1578
      %1776 = vmatpush.msra.mxu0 %v1575
      %1777 = vmatpush.msra.mxu0 %v1572
      %1778 = vmatpush.msra.mxu0 %v1569
      %1779 = vmatpush.msra.mxu0 %v1566
      %1780 = vmatpush.msra.mxu0 %v1563
      %1781 = vmatpush.msra.mxu0 %v1560
      %1782 = vmatpush.msra.mxu0 %v1557
      %1783 = vmatpush.msra.mxu0 %v1554
      %1784 = vmatpush.msra.mxu0 %v1551
      %1785 = vmatpush.msra.mxu0 %v1548
      %1786 = vmatpush.msra.mxu0 %v1545
      %1787 = vmatpush.msra.mxu0 %v1542
      %1788 = vmatpush.msra.mxu0 %v1539
      %1789 = vmatpush.msra.mxu0 %v1536
      %1790 = vmatpush.msra.mxu0 %v1533
      %1791 = vmatmul.f32.gmra.mxu0 %v1759
      %v1792 = vpop.f32.mrf.mxu0
      %v1793 = vadd.f32 0.0, %v1792
      %1794 = vmatmul.f32.gmra.mxu0 %v1760
      %v1795 = vpop.f32.mrf.mxu0
      %v1796 = vadd.f32 0.0, %v1795
      %1797 = vmatmul.f32.gmra.mxu0 %v1761
      %v1798 = vpop.f32.mrf.mxu0
      %v1799 = vadd.f32 0.0, %v1798
      %1800 = vmatmul.f32.gmra.mxu0 %v1762
      %v1801 = vpop.f32.mrf.mxu0
      %v1802 = vadd.f32 0.0, %v1801
      %1803 = vmatmul.f32.gmra.mxu0 %v1763
      %v1804 = vpop.f32.mrf.mxu0
      %v1805 = vadd.f32 0.0, %v1804
      %1806 = vmatmul.f32.gmra.mxu0 %v1764
      %v1807 = vpop.f32.mrf.mxu0
      %v1808 = vadd.f32 0.0, %v1807
      %1809 = vmatmul.f32.gmra.mxu0 %v1765
      %v1810 = vpop.f32.mrf.mxu0
      %v1811 = vadd.f32 0.0, %v1810
      %1812 = vmatmul.f32.gmra.mxu0 %v1766
      %v1813 = vpop.f32.mrf.mxu0
      %v1814 = vadd.f32 0.0, %v1813
      %1815 = vmatmul.f32.gmra.mxu0 %v1767
      %v1816 = vpop.f32.mrf.mxu0
      %v1817 = vadd.f32 0.0, %v1816
      %1818 = vmatmul.f32.gmra.mxu0 %v1768
      %v1819 = vpop.f32.mrf.mxu0
      %v1820 = vadd.f32 0.0, %v1819
      %1821 = vmatmul.f32.gmra.mxu0 %v1769
      %v1822 = vpop.f32.mrf.mxu0
      %v1823 = vadd.f32 0.0, %v1822
      %1824 = vmatmul.f32.gmra.mxu0 %v1770
      %v1825 = vpop.f32.mrf.mxu0
      %v1826 = vadd.f32 0.0, %v1825
      %1827 = vmatmul.f32.gmra.mxu0 %v1771
      %v1828 = vpop.f32.mrf.mxu0
      %v1829 = vadd.f32 0.0, %v1828
      %1830 = vmatmul.f32.gmra.mxu0 %v1772
      %v1831 = vpop.f32.mrf.mxu0
      %v1832 = vadd.f32 0.0, %v1831
      %1833 = vmatmul.f32.gmra.mxu0 %v1773
      %v1834 = vpop.f32.mrf.mxu0
      %v1835 = vadd.f32 0.0, %v1834
      %1836 = vmatmul.f32.gmra.mxu0 %v1774
      %v1837 = vpop.f32.mrf.mxu0
      %v1838 = vadd.f32 0.0, %v1837
      %1839 = vdwg.mxu0
      %v1840 = vadd.f32 %v1742, %v1793
      %v1841 = vadd.f32 %v1743, %v1796
      %v1842 = vadd.f32 %v1744, %v1799
      %v1843 = vadd.f32 %v1745, %v1802
      %v1844 = vadd.f32 %v1746, %v1805
      %v1845 = vadd.f32 %v1747, %v1808
      %v1846 = vadd.f32 %v1748, %v1811
      %v1847 = vadd.f32 %v1749, %v1814
      %v1848 = vadd.f32 %v1750, %v1817
      %v1849 = vadd.f32 %v1751, %v1820
      %v1850 = vadd.f32 %v1752, %v1823
      %v1851 = vadd.f32 %v1753, %v1826
      %v1852 = vadd.f32 %v1754, %v1829
      %v1853 = vadd.f32 %v1755, %v1832
      %v1854 = vadd.f32 %v1756, %v1835
      %v1855 = vadd.f32 %v1757, %v1838
      %s1856 = scalar_lea.vmem %s2, 256
      %v1857 = vld [vmem:[%s1856] sm:$0xff]
      %v1858 = vld [vmem:[%s1856 + $0x8] sm:$0xff]
      %v1859 = vld [vmem:[%s1856 + $0x10] sm:$0xff]
      %v1860 = vld [vmem:[%s1856 + $0x18] sm:$0xff]
      %v1861 = vld [vmem:[%s1856 + $0x20] sm:$0xff]
      %v1862 = vld [vmem:[%s1856 + $0x28] sm:$0xff]
      %v1863 = vld [vmem:[%s1856 + $0x30] sm:$0xff]
      %v1864 = vld [vmem:[%s1856 + $0x38] sm:$0xff]
      %v1865 = vld [vmem:[%s1856 + $0x40] sm:$0xff]
      %v1866 = vld [vmem:[%s1856 + $0x48] sm:$0xff]
      %v1867 = vld [vmem:[%s1856 + $0x50] sm:$0xff]
      %v1868 = vld [vmem:[%s1856 + $0x58] sm:$0xff]
      %v1869 = vld [vmem:[%s1856 + $0x60] sm:$0xff]
      %v1870 = vld [vmem:[%s1856 + $0x68] sm:$0xff]
      %v1871 = vld [vmem:[%s1856 + $0x70] sm:$0xff]
      %v1872 = vld [vmem:[%s1856 + $0x78] sm:$0xff]
      %1873 = vmatpush.msra.mxu0 %v1659
      %1874 = vmatpush.msra.mxu0 %v1656
      %1875 = vmatpush.msra.mxu0 %v1653
      %1876 = vmatpush.msra.mxu0 %v1650
      %1877 = vmatpush.msra.mxu0 %v1647
      %1878 = vmatpush.msra.mxu0 %v1644
      %1879 = vmatpush.msra.mxu0 %v1641
      %1880 = vmatpush.msra.mxu0 %v1638
      %1881 = vmatpush.msra.mxu0 %v1635
      %1882 = vmatpush.msra.mxu0 %v1632
      %1883 = vmatpush.msra.mxu0 %v1629
      %1884 = vmatpush.msra.mxu0 %v1626
      %1885 = vmatpush.msra.mxu0 %v1623
      %1886 = vmatpush.msra.mxu0 %v1620
      %1887 = vmatpush.msra.mxu0 %v1617
      %1888 = vmatpush.msra.mxu0 %v1614
      %1889 = vmatmul.f32.gmra.mxu0 %v1857
      %v1890 = vpop.f32.mrf.mxu0
      %v1891 = vadd.f32 0.0, %v1890
      %1892 = vmatmul.f32.gmra.mxu0 %v1858
      %v1893 = vpop.f32.mrf.mxu0
      %v1894 = vadd.f32 0.0, %v1893
      %1895 = vmatmul.f32.gmra.mxu0 %v1859
      %v1896 = vpop.f32.mrf.mxu0
      %v1897 = vadd.f32 0.0, %v1896
      %1898 = vmatmul.f32.gmra.mxu0 %v1860
      %v1899 = vpop.f32.mrf.mxu0
      %v1900 = vadd.f32 0.0, %v1899
      %1901 = vmatmul.f32.gmra.mxu0 %v1861
      %v1902 = vpop.f32.mrf.mxu0
      %v1903 = vadd.f32 0.0, %v1902
      %1904 = vmatmul.f32.gmra.mxu0 %v1862
      %v1905 = vpop.f32.mrf.mxu0
      %v1906 = vadd.f32 0.0, %v1905
      %1907 = vmatmul.f32.gmra.mxu0 %v1863
      %v1908 = vpop.f32.mrf.mxu0
      %v1909 = vadd.f32 0.0, %v1908
      %1910 = vmatmul.f32.gmra.mxu0 %v1864
      %v1911 = vpop.f32.mrf.mxu0
      %v1912 = vadd.f32 0.0, %v1911
      %1913 = vmatmul.f32.gmra.mxu0 %v1865
      %v1914 = vpop.f32.mrf.mxu0
      %v1915 = vadd.f32 0.0, %v1914
      %1916 = vmatmul.f32.gmra.mxu0 %v1866
      %v1917 = vpop.f32.mrf.mxu0
      %v1918 = vadd.f32 0.0, %v1917
      %1919 = vmatmul.f32.gmra.mxu0 %v1867
      %v1920 = vpop.f32.mrf.mxu0
      %v1921 = vadd.f32 0.0, %v1920
      %1922 = vmatmul.f32.gmra.mxu0 %v1868
      %v1923 = vpop.f32.mrf.mxu0
      %v1924 = vadd.f32 0.0, %v1923
      %1925 = vmatmul.f32.gmra.mxu0 %v1869
      %v1926 = vpop.f32.mrf.mxu0
      %v1927 = vadd.f32 0.0, %v1926
      %1928 = vmatmul.f32.gmra.mxu0 %v1870
      %v1929 = vpop.f32.mrf.mxu0
      %v1930 = vadd.f32 0.0, %v1929
      %1931 = vmatmul.f32.gmra.mxu0 %v1871
      %v1932 = vpop.f32.mrf.mxu0
      %v1933 = vadd.f32 0.0, %v1932
      %1934 = vmatmul.f32.gmra.mxu0 %v1872
      %v1935 = vpop.f32.mrf.mxu0
      %v1936 = vadd.f32 0.0, %v1935
      %1937 = vdwg.mxu0
      %v1938 = vadd.f32 %v1840, %v1891
      %v1939 = vadd.f32 %v1841, %v1894
      %v1940 = vadd.f32 %v1842, %v1897
      %v1941 = vadd.f32 %v1843, %v1900
      %v1942 = vadd.f32 %v1844, %v1903
      %v1943 = vadd.f32 %v1845, %v1906
      %v1944 = vadd.f32 %v1846, %v1909
      %v1945 = vadd.f32 %v1847, %v1912
      %v1946 = vadd.f32 %v1848, %v1915
      %v1947 = vadd.f32 %v1849, %v1918
      %v1948 = vadd.f32 %v1850, %v1921
      %v1949 = vadd.f32 %v1851, %v1924
      %v1950 = vadd.f32 %v1852, %v1927
      %v1951 = vadd.f32 %v1853, %v1930
      %v1952 = vadd.f32 %v1854, %v1933
      %v1953 = vadd.f32 %v1855, %v1936
      %v1954 = vld [vmem:[%s6] sm:$0x1]
      %v1956 = vperm.slane %v1954, 0
      %v1958 = vadd.f32 %v1938, %v1956
      %v1959 = vadd.f32 %v1939, %v1956
      %v1960 = vadd.f32 %v1940, %v1956
      %v1961 = vadd.f32 %v1941, %v1956
      %v1962 = vadd.f32 %v1942, %v1956
      %v1963 = vadd.f32 %v1943, %v1956
      %v1964 = vadd.f32 %v1944, %v1956
      %v1965 = vadd.f32 %v1945, %v1956
      %v1966 = vadd.f32 %v1946, %v1956
      %v1967 = vadd.f32 %v1947, %v1956
      %v1968 = vadd.f32 %v1948, %v1956
      %v1969 = vadd.f32 %v1949, %v1956
      %v1970 = vadd.f32 %v1950, %v1956
      %v1971 = vadd.f32 %v1951, %v1956
      %v1972 = vadd.f32 %v1952, %v1956
      %v1973 = vadd.f32 %v1953, %v1956
      %v1974 = vld [vmem:[%s401] sm:$0xff]
      %v1975 = vld [vmem:[%s401 + $0x8] sm:$0xff]
      %v1976 = vld [vmem:[%s401 + $0x10] sm:$0xff]
      %v1977 = vld [vmem:[%s401 + $0x18] sm:$0xff]
      %v1978 = vld [vmem:[%s401 + $0x20] sm:$0xff]
      %v1979 = vld [vmem:[%s401 + $0x28] sm:$0xff]
      %v1980 = vld [vmem:[%s401 + $0x30] sm:$0xff]
      %v1981 = vld [vmem:[%s401 + $0x38] sm:$0xff]
      %v1982 = vld [vmem:[%s401 + $0x40] sm:$0xff]
      %v1983 = vld [vmem:[%s401 + $0x48] sm:$0xff]
      %v1984 = vld [vmem:[%s401 + $0x50] sm:$0xff]
      %v1985 = vld [vmem:[%s401 + $0x58] sm:$0xff]
      %v1986 = vld [vmem:[%s401 + $0x60] sm:$0xff]
      %v1987 = vld [vmem:[%s401 + $0x68] sm:$0xff]
      %v1988 = vld [vmem:[%s401 + $0x70] sm:$0xff]
      %v1989 = vld [vmem:[%s401 + $0x78] sm:$0xff]
      %v1990 = vld [vmem:[%s7] sm:$0xff]
      %v1991 = vld [vmem:[%s8] sm:$0x1]
      %v1993 = vperm.slane %v1991, 0
      %vm1995 = vcmask 64512
      %v1997 = vsel %vm1995, %v1974, 0
      %v2000 = vsel %vm1995, %v1975, 0
      %v2003 = vsel %vm1995, %v1976, 0
      %v2006 = vsel %vm1995, %v1977, 0
      %v2009 = vsel %vm1995, %v1978, 0
      %v2012 = vsel %vm1995, %v1979, 0
      %v2015 = vsel %vm1995, %v1980, 0
      %v2018 = vsel %vm1995, %v1981, 0
      %v2021 = vsel %vm1995, %v1982, 0
      %v2024 = vsel %vm1995, %v1983, 0
      %v2027 = vsel %vm1995, %v1984, 0
      %v2030 = vsel %vm1995, %v1985, 0
      %v2033 = vsel %vm1995, %v1986, 0
      %v2036 = vsel %vm1995, %v1987, 0
      %v2039 = vsel %vm1995, %v1988, 0
      %v2042 = vsel %vm1995, %v1989, 0
      %2044 = vmatpush.msra.mxu0 0.0
      %2045 = vmatpush.msra.mxu0 0.0
      %2046 = vmatpush.msra.mxu0 0.0
      %2047 = vmatpush.msra.mxu0 0.0
      %2048 = vmatpush.msra.mxu0 0.0
      %2049 = vmatpush.msra.mxu0 0.0
      %2050 = vmatpush.msra.mxu0 0.0
      %2051 = vmatpush.msra.mxu0 0.0
      %2052 = vmatpush.msra.mxu0 0.0
      %2053 = vmatpush.msra.mxu0 0.0
      %2054 = vmatpush.msra.mxu0 0.0
      %2055 = vmatpush.msra.mxu0 0.0
      %2056 = vmatpush.msra.mxu0 0.0
      %2057 = vmatpush.msra.mxu0 0.0
      %2058 = vmatpush.msra.mxu0 0.0
      %2059 = vmatpush.msra.mxu0 %v1990
      %2060 = vmatmul.f32.gmra.mxu0 %v1997
      %v2061 = vpop.f32.mrf.mxu0
      %v2062 = vadd.f32 %v1993, %v2061
      %2063 = vmatmul.f32.gmra.mxu0 %v2000
      %v2064 = vpop.f32.mrf.mxu0
      %v2065 = vadd.f32 %v1993, %v2064
      %2066 = vmatmul.f32.gmra.mxu0 %v2003
      %v2067 = vpop.f32.mrf.mxu0
      %v2068 = vadd.f32 %v1993, %v2067
      %2069 = vmatmul.f32.gmra.mxu0 %v2006
      %v2070 = vpop.f32.mrf.mxu0
      %v2071 = vadd.f32 %v1993, %v2070
      %2072 = vmatmul.f32.gmra.mxu0 %v2009
      %v2073 = vpop.f32.mrf.mxu0
      %v2074 = vadd.f32 %v1993, %v2073
      %2075 = vmatmul.f32.gmra.mxu0 %v2012
      %v2076 = vpop.f32.mrf.mxu0
      %v2077 = vadd.f32 %v1993, %v2076
      %2078 = vmatmul.f32.gmra.mxu0 %v2015
      %v2079 = vpop.f32.mrf.mxu0
      %v2080 = vadd.f32 %v1993, %v2079
      %2081 = vmatmul.f32.gmra.mxu0 %v2018
      %v2082 = vpop.f32.mrf.mxu0
      %v2083 = vadd.f32 %v1993, %v2082
      %2084 = vmatmul.f32.gmra.mxu0 %v2021
      %v2085 = vpop.f32.mrf.mxu0
      %v2086 = vadd.f32 %v1993, %v2085
      %2087 = vmatmul.f32.gmra.mxu0 %v2024
      %v2088 = vpop.f32.mrf.mxu0
      %v2089 = vadd.f32 %v1993, %v2088
      %2090 = vmatmul.f32.gmra.mxu0 %v2027
      %v2091 = vpop.f32.mrf.mxu0
      %v2092 = vadd.f32 %v1993, %v2091
      %2093 = vmatmul.f32.gmra.mxu0 %v2030
      %v2094 = vpop.f32.mrf.mxu0
      %v2095 = vadd.f32 %v1993, %v2094
      %2096 = vmatmul.f32.gmra.mxu0 %v2033
      %v2097 = vpop.f32.mrf.mxu0
      %v2098 = vadd.f32 %v1993, %v2097
      %2099 = vmatmul.f32.gmra.mxu0 %v2036
      %v2100 = vpop.f32.mrf.mxu0
      %v2101 = vadd.f32 %v1993, %v2100
      %2102 = vmatmul.f32.gmra.mxu0 %v2039
      %v2103 = vpop.f32.mrf.mxu0
      %v2104 = vadd.f32 %v1993, %v2103
      %2105 = vmatmul.f32.gmra.mxu0 %v2042
      %v2106 = vpop.f32.mrf.mxu0
      %v2107 = vadd.f32 %v1993, %v2106
      %2108 = vdwg.mxu0
      %v2109 = vadd.f32 %v1958, %v1959
      %v2110 = vadd.f32 %v2109, %v1960
      %v2111 = vadd.f32 %v2110, %v1961
      %v2112 = vadd.f32 %v2111, %v1962
      %v2113 = vadd.f32 %v2112, %v1963
      %v2114 = vadd.f32 %v2113, %v1964
      %v2115 = vadd.f32 %v2114, %v1965
      %v2116 = vrot.slane %v2115, 4
      %v2117 = vadd.f32 %v2115, %v2116
      %v2118 = vrot.slane %v2117, 2
      %v2119 = vadd.f32 %v2117, %v2118
      %v2120 = vrot.slane %v2119, 1
      %v2121 = vadd.f32 %v2119, %v2120
      %v2122 = vadd.f32 %v1966, %v1967
      %v2123 = vadd.f32 %v2122, %v1968
      %v2124 = vadd.f32 %v2123, %v1969
      %v2125 = vadd.f32 %v2124, %v1970
      %v2126 = vadd.f32 %v2125, %v1971
      %v2127 = vadd.f32 %v2126, %v1972
      %v2128 = vadd.f32 %v2127, %v1973
      %v2129 = vrot.slane %v2128, 4
      %v2130 = vadd.f32 %v2128, %v2129
      %v2131 = vrot.slane %v2130, 2
      %v2132 = vadd.f32 %v2130, %v2131
      %v2133 = vrot.slane %v2132, 1
      %v2134 = vadd.f32 %v2132, %v2133
      %v2135 = vrcp.pop 64.0
      %v2136 = vmul.f32 64.0, %v2135
      %v2137 = vsub.f32 1.0, %v2136
      %v2138 = vmul.f32 %v2135, %v2137
      %v2139 = vadd.f32 %v2135, %v2138
      %vm2140 = vweird.f32 %v2135
      %v2141 = vsel %vm2140, %v2135, %v2139
      %v2142 = vmul.f32 %v2121, %v2141
      %v2143 = vmul.f32 %v2134, %v2141
      %v2144 = vld [vmem:[%s9] sm:$0xff]
      %v2145 = vld [vmem:[%s9 + $0x8] sm:$0xff]
      %v2146 = vld [vmem:[%s9 + $0x10] sm:$0xff]
      %v2147 = vld [vmem:[%s9 + $0x18] sm:$0xff]
      %v2148 = vld [vmem:[%s9 + $0x20] sm:$0xff]
      %v2149 = vld [vmem:[%s9 + $0x28] sm:$0xff]
      %v2150 = vld [vmem:[%s9 + $0x30] sm:$0xff]
      %v2151 = vld [vmem:[%s9 + $0x38] sm:$0xff]
      %v2152 = vld [vmem:[%s9 + $0x40] sm:$0xff]
      %v2153 = vld [vmem:[%s9 + $0x48] sm:$0xff]
      %v2154 = vld [vmem:[%s9 + $0x50] sm:$0xff]
      %v2155 = vld [vmem:[%s9 + $0x58] sm:$0xff]
      %v2156 = vld [vmem:[%s9 + $0x60] sm:$0xff]
      %v2157 = vld [vmem:[%s9 + $0x68] sm:$0xff]
      %v2158 = vld [vmem:[%s9 + $0x70] sm:$0xff]
      %v2159 = vld [vmem:[%s9 + $0x78] sm:$0xff]
      %vm2162 = vcmask 1041409
      %v2163 = vsel %vm2162, %v2143, %v2142
      %2165 = vmatpush.msra.mxu0 %v2159
      %2166 = vmatpush.msra.mxu0 %v2158
      %2167 = vmatpush.msra.mxu0 %v2157
      %2168 = vmatpush.msra.mxu0 %v2156
      %2169 = vmatpush.msra.mxu0 %v2155
      %2170 = vmatpush.msra.mxu0 %v2154
      %2171 = vmatpush.msra.mxu0 %v2153
      %2172 = vmatpush.msra.mxu0 %v2152
      %2173 = vmatpush.msra.mxu0 %v2151
      %2174 = vmatpush.msra.mxu0 %v2150
      %2175 = vmatpush.msra.mxu0 %v2149
      %2176 = vmatpush.msra.mxu0 %v2148
      %2177 = vmatpush.msra.mxu0 %v2147
      %2178 = vmatpush.msra.mxu0 %v2146
      %2179 = vmatpush.msra.mxu0 %v2145
      %2180 = vmatpush.msra.mxu0 %v2144
      %2181 = vmatmul.f32.gmra.mxu0 %v2163
      %v2182 = vpop.f32.mrf.mxu0
      %v2183 = vadd.f32 0.0, %v2182
      %2184 = vdwg.mxu0
      %v2185 = vmax.f32 %v2183, 0.0
      %v2186 = vld [vmem:[%s10] sm:$0xff]
      %v2188 = vsel %vm1995, %v2185, 0
      %2190 = vmatpush.msra.mxu0 0.0
      %2191 = vmatpush.msra.mxu0 0.0
      %2192 = vmatpush.msra.mxu0 0.0
      %2193 = vmatpush.msra.mxu0 0.0
      %2194 = vmatpush.msra.mxu0 0.0
      %2195 = vmatpush.msra.mxu0 0.0
      %2196 = vmatpush.msra.mxu0 0.0
      %2197 = vmatpush.msra.mxu0 0.0
      %2198 = vmatpush.msra.mxu0 0.0
      %2199 = vmatpush.msra.mxu0 0.0
      %2200 = vmatpush.msra.mxu0 0.0
      %2201 = vmatpush.msra.mxu0 0.0
      %2202 = vmatpush.msra.mxu0 0.0
      %2203 = vmatpush.msra.mxu0 0.0
      %2204 = vmatpush.msra.mxu0 0.0
      %2205 = vmatpush.msra.mxu0 %v2186
      %2206 = vmatmul.f32.gmra.mxu0 %v2188
      %v2207 = vpop.f32.mrf.mxu0
      %v2208 = vadd.f32 0.0, %v2207
      %2209 = vdwg.mxu0
      %v2210 = vxor.u32 %v2208, 2147483648
      %v2211 = vmul.f32 %v2210, 1.442695
      %v2212 = vpow.pop %v2211
      %v2213 = vadd.f32 %v2212, 1.0
      %v2214 = vrcp.pop %v2213
      %v2215 = vmul.f32 %v2213, %v2214
      %v2216 = vsub.f32 1.0, %v2215
      %v2217 = vmul.f32 %v2214, %v2216
      %v2218 = vadd.f32 %v2214, %v2217
      %vm2219 = vweird.f32 %v2213
      %vm2220 = vweird.f32 %v2214
      %vm2221 = vmor %vm2219, %vm2220
      %v2222 = vsel %vm2221, %v2214, %v2218
      %v2223 = vand.u32 2147483647, %v2213
      %vm2224 = vcmp.eq.f32.partialorder %v2223, 8.507059e+37
      %v2225 = vand.u32 %v2213, 2147483648
      %v2226 = vor.u32 1.1754944e-38, %v2225
      %v2227 = vsel %vm2224, %v2226, %v2222
      %v2228 = vmul.f32 1.0, %v2227
      %v2230 = vrot.slane %v2228, 1
      %v2231 = vperm.slane %v2228, 0
      %v2232 = vperm.slane %v2230, 0
      %v2235 = vmul.f32 %v1958, %v2231
      %v2236 = vmul.f32 %v1959, %v2231
      %v2237 = vmul.f32 %v1960, %v2231
      %v2238 = vmul.f32 %v1961, %v2231
      %v2239 = vmul.f32 %v1962, %v2231
      %v2240 = vmul.f32 %v1963, %v2231
      %v2241 = vmul.f32 %v1964, %v2231
      %v2242 = vmul.f32 %v1965, %v2231
      %v2243 = vmul.f32 %v1966, %v2232
      %v2244 = vmul.f32 %v1967, %v2232
      %v2245 = vmul.f32 %v1968, %v2232
      %v2246 = vmul.f32 %v1969, %v2232
      %v2247 = vmul.f32 %v1970, %v2232
      %v2248 = vmul.f32 %v1971, %v2232
      %v2249 = vmul.f32 %v1972, %v2232
      %v2250 = vmul.f32 %v1973, %v2232
      %v2251 = vadd.f32 %v2235, %v2062
      %v2252 = vadd.f32 %v2236, %v2065
      %v2253 = vadd.f32 %v2237, %v2068
      %v2254 = vadd.f32 %v2238, %v2071
      %v2255 = vadd.f32 %v2239, %v2074
      %v2256 = vadd.f32 %v2240, %v2077
      %v2257 = vadd.f32 %v2241, %v2080
      %v2258 = vadd.f32 %v2242, %v2083
      %v2259 = vadd.f32 %v2243, %v2086
      %v2260 = vadd.f32 %v2244, %v2089
      %v2261 = vadd.f32 %v2245, %v2092
      %v2262 = vadd.f32 %v2246, %v2095
      %v2263 = vadd.f32 %v2247, %v2098
      %v2264 = vadd.f32 %v2248, %v2101
      %v2265 = vadd.f32 %v2249, %v2104
      %v2266 = vadd.f32 %v2250, %v2107
      %2267 = vst [vmem:[%s406] sm:$0xff] %v2251
      %2268 = vst [vmem:[%s406 + $0x8] sm:$0xff] %v2252
      %2269 = vst [vmem:[%s406 + $0x10] sm:$0xff] %v2253
      %2270 = vst [vmem:[%s406 + $0x18] sm:$0xff] %v2254
      %2271 = vst [vmem:[%s406 + $0x20] sm:$0xff] %v2255
      %2272 = vst [vmem:[%s406 + $0x28] sm:$0xff] %v2256
      %2273 = vst [vmem:[%s406 + $0x30] sm:$0xff] %v2257
      %2274 = vst [vmem:[%s406 + $0x38] sm:$0xff] %v2258
      %2275 = vst [vmem:[%s406 + $0x40] sm:$0xff] %v2259
      %2276 = vst [vmem:[%s406 + $0x48] sm:$0xff] %v2260
      %2277 = vst [vmem:[%s406 + $0x50] sm:$0xff] %v2261
      %2278 = vst [vmem:[%s406 + $0x58] sm:$0xff] %v2262
      %2279 = vst [vmem:[%s406 + $0x60] sm:$0xff] %v2263
      %2280 = vst [vmem:[%s406 + $0x68] sm:$0xff] %v2264
      %2281 = vst [vmem:[%s406 + $0x70] sm:$0xff] %v2265
      %2282 = vst [vmem:[%s406 + $0x78] sm:$0xff] %v2266
      %p2283 = scmp.lt.s32.totalorder %s22, 1
      %s2284 = scalar_select %p2283, %s22, 1
      %s2285 = smul.addr %s2284, 16
      %s2286 = smul.addr %s2285, 8
      %s2287 = scalar_lea.vmem %s11, %s2286
      // Predicated region
      $region65: #{ensemble_forward.2} parent=63 // pred_check
        %p2288 = pneg %p281
      $region66: #{ensemble_forward.2} parent=63 // pred_check_branch
        %2290 = sbr.rel (%p2288) target = $region68
      $region67: #{ensemble_forward.2} parent=63 // pred_region
        _
      $region68: #{ensemble_forward.2} parent=63 // pred_fallthru
        _
    $region64: #{ensemble_forward.2} parent=5 // pred_fallthru
      _
    %p2291 = scmp.le.s32.totalorder 2, %s17
    // Predicated region
    $region69: #{ensemble_forward.2} parent=5 // pred_check
      %p2292 = pneg %p2291
    $region70: #{ensemble_forward.2} parent=5 // pred_check_branch
      %2294 = sbr.rel (%p2292) target = $region72
    $region71: #{ensemble_forward.2} parent=5 // pred_region
      %s2295 = ssub.s32 %s17, 2
      // Predicated region
      $region73: #{ensemble_forward.2} parent=71 // pred_check
        %p2296 = pneg %p287
      $region74: #{ensemble_forward.2} parent=71 // pred_check_branch
        %2298 = sbr.rel (%p2296) target = $region76
      $region75: #{ensemble_forward.2} parent=71 // pred_region
        %p2299 = scmp.lt.s32.totalorder %s23, 1
        %s2300 = scalar_select %p2299, %s23, 1
        %s2301 = smul.addr %s2300, 16
        %s2302 = smul.addr %s2301, 8
        %s2303 = scalar_lea.vmem %s11, %s2302
      $region76: #{ensemble_forward.2} parent=71 // pred_fallthru
        _
    $region72: #{ensemble_forward.2} parent=5 // pred_fallthru
      _
  $region6: #{ensemble_forward.2} parent=0 // loop_footer
    %s21 = sadd.s32 1, %s17
  $region7: #{ensemble_forward.2} parent=0 // loop_footer_branch
    %16 = sbr.rel target = $region3
  $region8: #{ensemble_forward.2} parent=0 // loop_exit
    _

</llo_original>
